<compile_context>
chip_gen: v5e
topology: v5e:2x2
jax: 0.10.0
libtpu: 0.0.40
codegen_flags: <defaults>
</compile_context>

<pallas_src>
import math
from functools import partial

import jax
import jax.numpy as jnp
from jax import lax
from jax.experimental import pallas as pl
from jax.experimental.pallas import tpu as pltpu

HIDDEN = 256          # MultimodalFusion hidden_dim
AUDIO = 128           # MultimodalFusion audio_dim
NUM_HEADS = 4
HEAD_DIM = HIDDEN // NUM_HEADS
SCALE = 1.0 / math.sqrt(HEAD_DIM)
LN_EPS = 1e-5
MAX_ROWS_PER_BLOCK = 256
MASK_NEG = -1e30


# ---------------------------------------------------------------- helpers ----
def _gelu(x):
    # TODO(synk): PyTorch nn.GELU default is erf-exact; tanh approximation is
    # used to guarantee Mosaic/EUP lowering (abs error ~1e-3).
    c = math.sqrt(2.0 / math.pi)
    return 0.5 * x * (1.0 + jnp.tanh(c * (x + 0.044715 * x * x * x)))


def _layer_norm(y, g, b):
    mu = jnp.mean(y, axis=-1, keepdims=True)
    var = jnp.mean((y - mu) ** 2, axis=-1, keepdims=True)
    return (y - mu) * jax.lax.rsqrt(var + LN_EPS) * g + b


def _sigmoid(x):
    # exp + reciprocal on EUP (approx) instead of a VALU divide.
    return pl.reciprocal(1.0 + jnp.exp(-x), approx=True)


# ----------------------------------------------------------------- kernel ----
def _fused_fusion_kernel(
    seq_len,
    vis_ref, aud_ref,
    af_w_ref, af_b_ref, af_g_ref, af_beta_ref,
    m_ref, c_ref, vo_ref, bo_ref,
    gate_w_ref, gate_b_ref,
    r1_w_ref, r1_b_ref, r1_g_ref, r1_beta_ref,
    r2_w_ref, r2_b_ref,
    out_ref,
):
    f32, bf16 = jnp.float32, jnp.bfloat16
    R = vis_ref.shape[0]

    vf = vis_ref[...].astype(f32)                      # (R, 256) f32
    vf_bf = vf.astype(bf16)

    # --- audio_fusion (Linear + LayerNorm + GELU) for both streams ----------
    # cat([a, a], -1) @ W == a @ (W[:A] + W[A:]) (fold done in wrapper).
    def audio_fuse(a):
        y = jnp.dot(a.astype(bf16), af_w_ref[...],
                    preferred_element_type=f32) + af_b_ref[...]
        return _gelu(_layer_norm(y, af_g_ref[...], af_beta_ref[...]))

    af1_bf = audio_fuse(aud_ref[0]).astype(bf16)       # (R, 256)
    af2_bf = audio_fuse(aud_ref[1]).astype(bf16)

    # --- shared per-head query-side transform (Q/K proj + biases folded) ----
    #   s_h[i, j] = vf_i M_h af_j^T + af_j . c_h  (+ terms constant over j,
    #   which softmax over j is invariant to) == torch MHA scores exactly.
    t_bf = []
    for h in range(NUM_HEADS):
        th = jnp.dot(vf_bf, m_ref[h], preferred_element_type=f32) + c_ref[h]
        t_bf.append(th.astype(bf16))

    # Block-diagonal mask: queries only attend within their own sequence
    # (rows are batch-major, seq_len consecutive rows per batch element).
    if R > seq_len:
        qid = lax.broadcasted_iota(jnp.int32, (R, R), 0) // seq_len
        kid = lax.broadcasted_iota(jnp.int32, (R, R), 1) // seq_len
        mask_bias = jnp.where(qid == kid, 0.0, MASK_NEG).astype(f32)
    else:
        mask_bias = None

    def attention(af_kv_bf):
        # V and output projections folded per head into VO_h; accumulator is
        # lane-dense (R, 256) throughout — no 64-lane head slices anywhere.
        acc = jnp.zeros((R, HIDDEN), f32)
        for h in range(NUM_HEADS):
            s = lax.dot_general(t_bf[h], af_kv_bf, (((1,), (1,)), ((), ())),
                                preferred_element_type=f32)      # (R, R)
            if mask_bias is not None:
                s = s + mask_bias
            s = s - jnp.max(s, axis=-1, keepdims=True)
            p = jnp.exp(s)
            p = p * pl.reciprocal(jnp.sum(p, axis=-1, keepdims=True),
                                  approx=True)
            pv = jnp.dot(p.astype(bf16), af_kv_bf,
                         preferred_element_type=f32)             # (R, 256)
            acc = acc + jnp.dot(pv.astype(bf16), vo_ref[h],
                                preferred_element_type=f32)
        return acc + bo_ref[...]

    attn1 = attention(af1_bf)
    attn2 = attention(af2_bf)
    attn1_bf = attn1.astype(bf16)
    attn2_bf = attn2.astype(bf16)

    # --- gate_net on the *virtual* concat([vf, attn1, attn2]) ---------------
    gl = (jnp.dot(vf_bf, gate_w_ref[:HIDDEN, :], preferred_element_type=f32)
          + jnp.dot(attn1_bf, gate_w_ref[HIDDEN:2 * HIDDEN, :],
                    preferred_element_type=f32)
          + jnp.dot(attn2_bf, gate_w_ref[2 * HIDDEN:3 * HIDDEN, :],
                    preferred_element_type=f32)
          + gate_b_ref[...])
    gate = _sigmoid(gl)                                           # (R, 256) f32

    # Reference line `fused = gate*visual + (1-gate)*attn_out` references an
    # undefined `attn_out` and the regressor expects 2*hidden inputs; kept the
    # previous interpretation concat([gate*visual, (1-gate)*attn2]) folded into
    # regressor-1 via partial matmuls (no concat is ever materialized).
    xa = (gate * vf).astype(bf16)
    xb = ((1.0 - gate) * attn2).astype(bf16)
    h1 = (jnp.dot(xa, r1_w_ref[:HIDDEN, :], preferred_element_type=f32)
          + jnp.dot(xb, r1_w_ref[HIDDEN:2 * HIDDEN, :],
                    preferred_element_type=f32)
          + r1_b_ref[...])
    h1 = _gelu(_layer_norm(h1, r1_g_ref[...], r1_beta_ref[...]))   # (R, 64)

    # Lane-dense final store: r2_w padded to 128 cols; real outputs in [:, :2].
    out = jnp.tanh(jnp.dot(h1.astype(bf16), r2_w_ref[...],
                           preferred_element_type=f32) + r2_b_ref[...])
    out_ref[...] = out                                             # (R, 128)


# ---------------------------------------------------------------- wrapper ----
def _choose_rows_per_block(batch, seq):
    n = batch * seq
    base = seq * 8 // math.gcd(seq, 8)                 # lcm(seq, 8)
    max_rb = max(base, (MAX_ROWS_PER_BLOCK // base) * base)
    # aim for >= 2 grid steps when possible (feeds both TensorCores on v7x)
    rb = base * max(1, -(-n // (2 * base)))
    return min(max_rb, rb)


def _fusion_pallas(vis, a1, a2, p):
    B, S, Dv = vis.shape
    assert Dv == HIDDEN and a1.shape[-1] == AUDIO and a2.shape[-1] == AUDIO
    N = B * S
    R = _choose_rows_per_block(B, S)
    Np = -(-N // R) * R
    grid = (Np // R,)

    visf = vis.reshape(N, HIDDEN)
    audf = jnp.stack([a1.reshape(N, AUDIO), a2.reshape(N, AUDIO)], axis=0)
    if Np != N:                      # pad with whole fake sequences (masked)
        visf = jnp.pad(visf, ((0, Np - N), (0, 0)))
        audf = jnp.pad(audf, ((0, 0), (0, Np - N), (0, 0)))

    f32, bf16 = jnp.float32, jnp.bfloat16
    A = p["attn"]

    def heads_in(W):                 # (256, 256) -> (nh, 256, 64)
        return W.reshape(HIDDEN, NUM_HEADS, HEAD_DIM).transpose(1, 0, 2)

    Wq_h, Wk_h, Wv_h = heads_in(A["wq"]), heads_in(A["wk"]), heads_in(A["wv"])
    Wo_h = A["wo"].reshape(NUM_HEADS, HEAD_DIM, HIDDEN)

    # duplicated-audio concat folded into the weight
    af_w = (p["af_w"][:AUDIO] + p["af_w"][AUDIO:]).astype(bf16)
    # per-head attention folds (exact; softmax-invariant bias terms dropped)
    m_all = (SCALE * jnp.einsum('hkd,hjd->hkj', Wq_h, Wk_h)).astype(bf16)
    c_all = (SCALE * jnp.einsum('hkd,hd->hk', Wk_h,
                                A["bq"].reshape(NUM_HEADS, HEAD_DIM))
             ).reshape(NUM_HEADS, 1, HIDDEN).astype(f32)
    vo_all = jnp.einsum('hkd,hdj->hkj', Wv_h, Wo_h).astype(bf16)
    bo_eff = (A["bo"] + A["bv"] @ A["wo"]).reshape(1, HIDDEN).astype(f32)

    # lane-dense final projection: pad (64, 2) -> (64, 128)
    r2_w = jnp.zeros((64, 128), f32).at[:, :2].set(p["r2_w"]).astype(bf16)
    r2_b = jnp.zeros((1, 128), f32).at[:, :2].set(p["r2_b"])

    def row(v):
        return v.reshape(1, -1).astype(f32)

    weights = (
        af_w, row(p["af_b"]), row(p["af_g"]), row(p["af_beta"]),
        m_all, c_all, vo_all, bo_eff,
        p["gate_w"].astype(bf16), row(p["gate_b"]),
        p["r1_w"].astype(bf16), row(p["r1_b"]), row(p["r1_g"]), row(p["r1_beta"]),
        r2_w, r2_b,
    )
    w_specs = [pl.BlockSpec(tuple(w.shape), lambda i, nd=w.ndim: (0,) * nd)
               for w in weights]

    out = pl.pallas_call(
        partial(_fused_fusion_kernel, S),
        grid=grid,
        in_specs=[pl.BlockSpec((R, HIDDEN), lambda i: (i, 0)),
                  pl.BlockSpec((2, R, AUDIO), lambda i: (0, i, 0))] + w_specs,
        out_specs=pl.BlockSpec((R, 128), lambda i: (i, 0)),
        out_shape=jax.ShapeDtypeStruct((Np, 128), jnp.float32),
        compiler_params=pltpu.CompilerParams(
            dimension_semantics=("parallel",)),
    )(visf, audf, *weights)

    return out[:N, :2].reshape(B, S, 2)


# ------------------------------------------------------------- parameters ----
def init_params(key):
    ks = iter(jax.random.split(key, 16))

    def w(shape, scale=0.05):
        return scale * jax.random.normal(next(ks), shape, dtype=jnp.float32)

    p = {}
    # audio_fusion: Linear(2*AUDIO, HIDDEN) + LayerNorm(HIDDEN) + GELU
    p["af_w"] = w((2 * AUDIO, HIDDEN))
    p["af_b"] = jnp.zeros((HIDDEN,), jnp.float32)
    p["af_g"] = jnp.ones((HIDDEN,), jnp.float32)
    p["af_beta"] = jnp.zeros((HIDDEN,), jnp.float32)
    # cross attention (shared for both attention calls, as in the reference)
    p["attn"] = {
        "wq": w((HIDDEN, HIDDEN)), "bq": jnp.zeros((HIDDEN,), jnp.float32),
        "wk": w((HIDDEN, HIDDEN)), "bk": jnp.zeros((HIDDEN,), jnp.float32),
        "wv": w((HIDDEN, HIDDEN)), "bv": jnp.zeros((HIDDEN,), jnp.float32),
        "wo": w((HIDDEN, HIDDEN)), "bo": jnp.zeros((HIDDEN,), jnp.float32),
    }
    # gate_net: Linear(3*HIDDEN, HIDDEN) + Sigmoid
    p["gate_w"] = w((3 * HIDDEN, HIDDEN))
    p["gate_b"] = jnp.zeros((HIDDEN,), jnp.float32)
    # regressor: Linear(2*HIDDEN, 64) + LayerNorm(64) + GELU + Linear(64, 2)
    p["r1_w"] = w((2 * HIDDEN, 64))
    p["r1_b"] = jnp.zeros((64,), jnp.float32)
    p["r1_g"] = jnp.ones((64,), jnp.float32)
    p["r1_beta"] = jnp.zeros((64,), jnp.float32)
    p["r2_w"] = w((64, 2))
    p["r2_b"] = jnp.zeros((2,), jnp.float32)
    # NOTE: visual_proj exists in __init__ but is unused in the reference forward.
    return p


# ----------------------------------------------------------------- forward ---
def my_model_forward(params, visual_feat, audio_feat1, audio_feat2):
    # TODO(synk): the ResNet/VGGish backbones, TemporalConvNet stacks and
    # encoder1..3 of the reference require external checkpoints / classes that
    # are not provided and are shape-inconsistent with the fusion head; only
    # the defined MultimodalFusion head + final tanh is implemented.
    return _fusion_pallas(visual_feat, audio_feat1, audio_feat2, params)


# ------------------------------------------- pure-JAX reference (f32) --------
def _reference_forward(p, vis, a1, a2):
    B, S, _ = vis.shape
    A = p["attn"]

    def audio_fusion(a):
        y = jnp.concatenate([a, a], -1) @ p["af_w"] + p["af_b"]
        return _gelu(_layer_norm(y, p["af_g"], p["af_beta"]))

    def mha(qx, kvx):
        q = qx @ A["wq"] + A["bq"]
        k = kvx @ A["wk"] + A["bk"]
        v = kvx @ A["wv"] + A["bv"]

        def split(x):
            return x.reshape(B, S, NUM_HEADS, HEAD_DIM).transpose(0, 2, 1, 3)

        qh, kh, vh = split(q), split(k), split(v)
        s = jnp.einsum('bhqd,bhkd->bhqk', qh, kh) * SCALE
        pr = jax.nn.softmax(s, axis=-1)
        o = jnp.einsum('bhqk,bhkd->bhqd', pr, vh)
        o = o.transpose(0, 2, 1, 3).reshape(B, S, HIDDEN)
        return o @ A["wo"] + A["bo"]

    af1, af2 = audio_fusion(a1), audio_fusion(a2)
    at1, at2 = mha(vis, af1), mha(vis, af2)
    gate = jax.nn.sigmoid(jnp.concatenate([vis, at1, at2], -1) @ p["gate_w"]
                          + p["gate_b"])
    fused = jnp.concatenate([gate * vis, (1.0 - gate) * at2], -1)
    h1 = _gelu(_layer_norm(fused @ p["r1_w"] + p["r1_b"],
                           p["r1_g"], p["r1_beta"]))
    return jnp.tanh(h1 @ p["r2_w"] + p["r2_b"])


if __name__ == "__main__":
    key = jax.random.PRNGKey(0)
    kp, kv, ka1, ka2 = jax.random.split(key, 4)
    params = init_params(kp)

    B, S = 2, 8
    visual = jax.random.normal(kv, (B, S, HIDDEN), dtype=jnp.float32)
    audio1 = jax.random.normal(ka1, (B, S, AUDIO), dtype=jnp.float32)
    audio2 = jax.random.normal(ka2, (B, S, AUDIO), dtype=jnp.float32)

    out = jax.jit(my_model_forward)(params, visual, audio1, audio2)
    jax.block_until_ready(out)
    assert out.shape == (B, S, 2)
    assert bool(jnp.all(jnp.isfinite(out)))

    ref = _reference_forward(params, visual, audio1, audio2)
    err = float(jnp.max(jnp.abs(out - ref)))
    assert err < 8e-2, f"mismatch vs f32 reference: {err}"
    print("KERNEL_OK")
</pallas_src>

<mosaic_0001>
module attributes {stable_mosaic.version = 11 : i64} {
  func.func @_fused_fusion_kernel(%arg0: i32, %arg1: memref<8x256xf32, #tpu.memory_space<vmem>>, %arg2: memref<2x8x128xf32, #tpu.memory_space<vmem>>, %arg3: memref<128x256xbf16, #tpu.memory_space<vmem>>, %arg4: memref<1x256xf32, #tpu.memory_space<vmem>>, %arg5: memref<1x256xf32, #tpu.memory_space<vmem>>, %arg6: memref<1x256xf32, #tpu.memory_space<vmem>>, %arg7: memref<4x256x256xbf16, #tpu.memory_space<vmem>>, %arg8: memref<4x1x256xf32, #tpu.memory_space<vmem>>, %arg9: memref<4x256x256xbf16, #tpu.memory_space<vmem>>, %arg10: memref<1x256xf32, #tpu.memory_space<vmem>>, %arg11: memref<768x256xbf16, #tpu.memory_space<vmem>>, %arg12: memref<1x256xf32, #tpu.memory_space<vmem>>, %arg13: memref<512x64xbf16, #tpu.memory_space<vmem>>, %arg14: memref<1x64xf32, #tpu.memory_space<vmem>>, %arg15: memref<1x64xf32, #tpu.memory_space<vmem>>, %arg16: memref<1x64xf32, #tpu.memory_space<vmem>>, %arg17: memref<64x128xbf16, #tpu.memory_space<vmem>>, %arg18: memref<1x128xf32, #tpu.memory_space<vmem>>, %arg19: memref<8x128xf32, #tpu.memory_space<vmem>>) attributes {dimension_semantics = [#tpu.dimension_semantics<parallel>], iteration_bounds = array<i64: 2>, scalar_prefetch = 0 : i64, scratch_operands = 0 : i64, tpu.core_type = #tpu.core_type<tc>, window_params = [{transform_indices = @transform_0, window_bounds = array<i64: 8, 256>}, {transform_indices = @transform_1, window_bounds = array<i64: 2, 8, 128>}, {pipeline_mode = #tpu.pipeline_mode<synchronous>, transform_indices = @transform_2, window_bounds = array<i64: 128, 256>}, {pipeline_mode = #tpu.pipeline_mode<synchronous>, transform_indices = @transform_3, window_bounds = array<i64: 1, 256>}, {pipeline_mode = #tpu.pipeline_mode<synchronous>, transform_indices = @transform_4, window_bounds = array<i64: 1, 256>}, {pipeline_mode = #tpu.pipeline_mode<synchronous>, transform_indices = @transform_5, window_bounds = array<i64: 1, 256>}, {pipeline_mode = #tpu.pipeline_mode<synchronous>, transform_indices = @transform_6, window_bounds = array<i64: 4, 256, 256>}, {pipeline_mode = #tpu.pipeline_mode<synchronous>, transform_indices = @transform_7, window_bounds = array<i64: 4, 1, 256>}, {pipeline_mode = #tpu.pipeline_mode<synchronous>, transform_indices = @transform_8, window_bounds = array<i64: 4, 256, 256>}, {pipeline_mode = #tpu.pipeline_mode<synchronous>, transform_indices = @transform_9, window_bounds = array<i64: 1, 256>}, {pipeline_mode = #tpu.pipeline_mode<synchronous>, transform_indices = @transform_10, window_bounds = array<i64: 768, 256>}, {pipeline_mode = #tpu.pipeline_mode<synchronous>, transform_indices = @transform_11, window_bounds = array<i64: 1, 256>}, {pipeline_mode = #tpu.pipeline_mode<synchronous>, transform_indices = @transform_12, window_bounds = array<i64: 512, 64>}, {pipeline_mode = #tpu.pipeline_mode<synchronous>, transform_indices = @transform_13, window_bounds = array<i64: 1, 64>}, {pipeline_mode = #tpu.pipeline_mode<synchronous>, transform_indices = @transform_14, window_bounds = array<i64: 1, 64>}, {pipeline_mode = #tpu.pipeline_mode<synchronous>, transform_indices = @transform_15, window_bounds = array<i64: 1, 64>}, {pipeline_mode = #tpu.pipeline_mode<synchronous>, transform_indices = @transform_16, window_bounds = array<i64: 64, 128>}, {pipeline_mode = #tpu.pipeline_mode<synchronous>, transform_indices = @transform_17, window_bounds = array<i64: 1, 128>}, {transform_indices = @transform_18, window_bounds = array<i64: 8, 128>}]} {
    %c0 = arith.constant 0 : index
    %c0_0 = arith.constant 0 : index
    %0 = vector.load %arg1[%c0, %c0_0] : memref<8x256xf32, #tpu.memory_space<vmem>>, vector<8x256xf32>
    %1 = arith.truncf %0 : vector<8x256xf32> to vector<8x256xbf16>
    %c0_1 = arith.constant 0 : index
    %c0_2 = arith.constant 0 : index
    %c0_3 = arith.constant 0 : index
    %2 = vector.load %arg2[%c0_1, %c0_2, %c0_3] : memref<2x8x128xf32, #tpu.memory_space<vmem>>, vector<1x8x128xf32>
    %3 = vector.shape_cast %2 : vector<1x8x128xf32> to vector<8x128xf32>
    %4 = arith.truncf %3 : vector<8x128xf32> to vector<8x128xbf16>
    %c0_4 = arith.constant 0 : index
    %c0_5 = arith.constant 0 : index
    %5 = vector.load %arg3[%c0_4, %c0_5] : memref<128x256xbf16, #tpu.memory_space<vmem>>, vector<128x256xbf16>
    %cst = arith.constant dense<0.000000e+00> : vector<8x256xf32>
    %6 = tpu.matmul %4, %5, %cst {dimension_numbers = #tpu.dot_dimension_numbers<[1], [0], [0], [1], [0, 0, 1, 1], [], []>} : vector<8x128xbf16>, vector<128x256xbf16>, vector<8x256xf32> -> vector<8x256xf32>
    %c0_6 = arith.constant 0 : index
    %c0_7 = arith.constant 0 : index
    %7 = vector.load %arg4[%c0_6, %c0_7] : memref<1x256xf32, #tpu.memory_space<vmem>>, vector<1x256xf32>
    %8 = vector.broadcast %7 : vector<1x256xf32> to vector<8x256xf32>
    %9 = arith.addf %6, %8 : vector<8x256xf32>
    %c0_8 = arith.constant 0 : index
    %c0_9 = arith.constant 0 : index
    %10 = vector.load %arg5[%c0_8, %c0_9] : memref<1x256xf32, #tpu.memory_space<vmem>>, vector<1x256xf32>
    %c0_10 = arith.constant 0 : index
    %c0_11 = arith.constant 0 : index
    %11 = vector.load %arg6[%c0_10, %c0_11] : memref<1x256xf32, #tpu.memory_space<vmem>>, vector<1x256xf32>
    %cst_12 = arith.constant dense<0.000000e+00> : vector<8xf32>
    %12 = vector.multi_reduction <add>, %9, %cst_12 [1] : vector<8x256xf32> to vector<8xf32>
    %13 = vector.shape_cast %12 : vector<8xf32> to vector<8x1xf32>
    %cst_13 = arith.constant 2.560000e+02 : f32
    %14 = vector.broadcast %cst_13 : f32 to vector<8x1xf32>
    %15 = arith.divf %13, %14 : vector<8x1xf32>
    %16 = vector.broadcast %15 : vector<8x1xf32> to vector<8x256xf32>
    %17 = arith.subf %9, %16 : vector<8x256xf32>
    %18 = arith.mulf %17, %17 : vector<8x256xf32>
    %cst_14 = arith.constant dense<0.000000e+00> : vector<8xf32>
    %19 = vector.multi_reduction <add>, %18, %cst_14 [1] : vector<8x256xf32> to vector<8xf32>
    %20 = vector.shape_cast %19 : vector<8xf32> to vector<8x1xf32>
    %cst_15 = arith.constant 2.560000e+02 : f32
    %21 = vector.broadcast %cst_15 : f32 to vector<8x1xf32>
    %22 = arith.divf %20, %21 : vector<8x1xf32>
    %23 = vector.broadcast %15 : vector<8x1xf32> to vector<8x256xf32>
    %24 = arith.subf %9, %23 : vector<8x256xf32>
    %cst_16 = arith.constant 9.99999974E-6 : f32
    %25 = vector.broadcast %cst_16 : f32 to vector<8x1xf32>
    %26 = arith.addf %22, %25 : vector<8x1xf32>
    %27 = math.rsqrt %26 : vector<8x1xf32>
    %28 = vector.broadcast %27 : vector<8x1xf32> to vector<8x256xf32>
    %29 = arith.mulf %24, %28 : vector<8x256xf32>
    %30 = vector.broadcast %10 : vector<1x256xf32> to vector<8x256xf32>
    %31 = arith.mulf %29, %30 : vector<8x256xf32>
    %32 = vector.broadcast %11 : vector<1x256xf32> to vector<8x256xf32>
    %33 = arith.addf %31, %32 : vector<8x256xf32>
    %cst_17 = arith.constant 5.000000e-01 : f32
    %34 = vector.broadcast %cst_17 : f32 to vector<8x256xf32>
    %35 = arith.mulf %34, %33 : vector<8x256xf32>
    %cst_18 = arith.constant 4.471500e-02 : f32
    %36 = vector.broadcast %cst_18 : f32 to vector<8x256xf32>
    %37 = arith.mulf %36, %33 : vector<8x256xf32>
    %38 = arith.mulf %37, %33 : vector<8x256xf32>
    %39 = arith.mulf %38, %33 : vector<8x256xf32>
    %40 = arith.addf %33, %39 : vector<8x256xf32>
    %cst_19 = arith.constant 0.797884583 : f32
    %41 = vector.broadcast %cst_19 : f32 to vector<8x256xf32>
    %42 = arith.mulf %41, %40 : vector<8x256xf32>
    %43 = math.tanh %42 : vector<8x256xf32>
    %cst_20 = arith.constant 1.000000e+00 : f32
    %44 = vector.broadcast %cst_20 : f32 to vector<8x256xf32>
    %45 = arith.addf %44, %43 : vector<8x256xf32>
    %46 = arith.mulf %35, %45 : vector<8x256xf32>
    %47 = arith.truncf %46 : vector<8x256xf32> to vector<8x256xbf16>
    %c1 = arith.constant 1 : index
    %c0_21 = arith.constant 0 : index
    %c0_22 = arith.constant 0 : index
    %48 = vector.load %arg2[%c1, %c0_21, %c0_22] : memref<2x8x128xf32, #tpu.memory_space<vmem>>, vector<1x8x128xf32>
    %49 = vector.shape_cast %48 : vector<1x8x128xf32> to vector<8x128xf32>
    %50 = arith.truncf %49 : vector<8x128xf32> to vector<8x128xbf16>
    %c0_23 = arith.constant 0 : index
    %c0_24 = arith.constant 0 : index
    %51 = vector.load %arg3[%c0_23, %c0_24] : memref<128x256xbf16, #tpu.memory_space<vmem>>, vector<128x256xbf16>
    %cst_25 = arith.constant dense<0.000000e+00> : vector<8x256xf32>
    %52 = tpu.matmul %50, %51, %cst_25 {dimension_numbers = #tpu.dot_dimension_numbers<[1], [0], [0], [1], [0, 0, 1, 1], [], []>} : vector<8x128xbf16>, vector<128x256xbf16>, vector<8x256xf32> -> vector<8x256xf32>
    %c0_26 = arith.constant 0 : index
    %c0_27 = arith.constant 0 : index
    %53 = vector.load %arg4[%c0_26, %c0_27] : memref<1x256xf32, #tpu.memory_space<vmem>>, vector<1x256xf32>
    %54 = vector.broadcast %53 : vector<1x256xf32> to vector<8x256xf32>
    %55 = arith.addf %52, %54 : vector<8x256xf32>
    %c0_28 = arith.constant 0 : index
    %c0_29 = arith.constant 0 : index
    %56 = vector.load %arg5[%c0_28, %c0_29] : memref<1x256xf32, #tpu.memory_space<vmem>>, vector<1x256xf32>
    %c0_30 = arith.constant 0 : index
    %c0_31 = arith.constant 0 : index
    %57 = vector.load %arg6[%c0_30, %c0_31] : memref<1x256xf32, #tpu.memory_space<vmem>>, vector<1x256xf32>
    %cst_32 = arith.constant dense<0.000000e+00> : vector<8xf32>
    %58 = vector.multi_reduction <add>, %55, %cst_32 [1] : vector<8x256xf32> to vector<8xf32>
    %59 = vector.shape_cast %58 : vector<8xf32> to vector<8x1xf32>
    %cst_33 = arith.constant 2.560000e+02 : f32
    %60 = vector.broadcast %cst_33 : f32 to vector<8x1xf32>
    %61 = arith.divf %59, %60 : vector<8x1xf32>
    %62 = vector.broadcast %61 : vector<8x1xf32> to vector<8x256xf32>
    %63 = arith.subf %55, %62 : vector<8x256xf32>
    %64 = arith.mulf %63, %63 : vector<8x256xf32>
    %cst_34 = arith.constant dense<0.000000e+00> : vector<8xf32>
    %65 = vector.multi_reduction <add>, %64, %cst_34 [1] : vector<8x256xf32> to vector<8xf32>
    %66 = vector.shape_cast %65 : vector<8xf32> to vector<8x1xf32>
    %cst_35 = arith.constant 2.560000e+02 : f32
    %67 = vector.broadcast %cst_35 : f32 to vector<8x1xf32>
    %68 = arith.divf %66, %67 : vector<8x1xf32>
    %69 = vector.broadcast %61 : vector<8x1xf32> to vector<8x256xf32>
    %70 = arith.subf %55, %69 : vector<8x256xf32>
    %cst_36 = arith.constant 9.99999974E-6 : f32
    %71 = vector.broadcast %cst_36 : f32 to vector<8x1xf32>
    %72 = arith.addf %68, %71 : vector<8x1xf32>
    %73 = math.rsqrt %72 : vector<8x1xf32>
    %74 = vector.broadcast %73 : vector<8x1xf32> to vector<8x256xf32>
    %75 = arith.mulf %70, %74 : vector<8x256xf32>
    %76 = vector.broadcast %56 : vector<1x256xf32> to vector<8x256xf32>
    %77 = arith.mulf %75, %76 : vector<8x256xf32>
    %78 = vector.broadcast %57 : vector<1x256xf32> to vector<8x256xf32>
    %79 = arith.addf %77, %78 : vector<8x256xf32>
    %cst_37 = arith.constant 5.000000e-01 : f32
    %80 = vector.broadcast %cst_37 : f32 to vector<8x256xf32>
    %81 = arith.mulf %80, %79 : vector<8x256xf32>
    %cst_38 = arith.constant 4.471500e-02 : f32
    %82 = vector.broadcast %cst_38 : f32 to vector<8x256xf32>
    %83 = arith.mulf %82, %79 : vector<8x256xf32>
    %84 = arith.mulf %83, %79 : vector<8x256xf32>
    %85 = arith.mulf %84, %79 : vector<8x256xf32>
    %86 = arith.addf %79, %85 : vector<8x256xf32>
    %cst_39 = arith.constant 0.797884583 : f32
    %87 = vector.broadcast %cst_39 : f32 to vector<8x256xf32>
    %88 = arith.mulf %87, %86 : vector<8x256xf32>
    %89 = math.tanh %88 : vector<8x256xf32>
    %cst_40 = arith.constant 1.000000e+00 : f32
    %90 = vector.broadcast %cst_40 : f32 to vector<8x256xf32>
    %91 = arith.addf %90, %89 : vector<8x256xf32>
    %92 = arith.mulf %81, %91 : vector<8x256xf32>
    %93 = arith.truncf %92 : vector<8x256xf32> to vector<8x256xbf16>
    %c0_41 = arith.constant 0 : index
    %c0_42 = arith.constant 0 : index
    %c0_43 = arith.constant 0 : index
    %94 = vector.load %arg7[%c0_41, %c0_42, %c0_43] : memref<4x256x256xbf16, #tpu.memory_space<vmem>>, vector<1x256x256xbf16>
    %95 = vector.shape_cast %94 : vector<1x256x256xbf16> to vector<256x256xbf16>
    %cst_44 = arith.constant dense<0.000000e+00> : vector<8x256xf32>
    %96 = tpu.matmul %1, %95, %cst_44 {dimension_numbers = #tpu.dot_dimension_numbers<[1], [0], [0], [1], [0, 0, 1, 1], [], []>} : vector<8x256xbf16>, vector<256x256xbf16>, vector<8x256xf32> -> vector<8x256xf32>
    %c0_45 = arith.constant 0 : index
    %c0_46 = arith.constant 0 : index
    %c0_47 = arith.constant 0 : index
    %97 = vector.load %arg8[%c0_45, %c0_46, %c0_47] : memref<4x1x256xf32, #tpu.memory_space<vmem>>, vector<1x1x256xf32>
    %98 = vector.shape_cast %97 : vector<1x1x256xf32> to vector<1x256xf32>
    %99 = vector.broadcast %98 : vector<1x256xf32> to vector<8x256xf32>
    %100 = arith.addf %96, %99 : vector<8x256xf32>
    %101 = arith.truncf %100 : vector<8x256xf32> to vector<8x256xbf16>
    %c1_48 = arith.constant 1 : index
    %c0_49 = arith.constant 0 : index
    %c0_50 = arith.constant 0 : index
    %102 = vector.load %arg7[%c1_48, %c0_49, %c0_50] : memref<4x256x256xbf16, #tpu.memory_space<vmem>>, vector<1x256x256xbf16>
    %103 = vector.shape_cast %102 : vector<1x256x256xbf16> to vector<256x256xbf16>
    %cst_51 = arith.constant dense<0.000000e+00> : vector<8x256xf32>
    %104 = tpu.matmul %1, %103, %cst_51 {dimension_numbers = #tpu.dot_dimension_numbers<[1], [0], [0], [1], [0, 0, 1, 1], [], []>} : vector<8x256xbf16>, vector<256x256xbf16>, vector<8x256xf32> -> vector<8x256xf32>
    %c1_52 = arith.constant 1 : index
    %c0_53 = arith.constant 0 : index
    %c0_54 = arith.constant 0 : index
    %105 = vector.load %arg8[%c1_52, %c0_53, %c0_54] : memref<4x1x256xf32, #tpu.memory_space<vmem>>, vector<1x1x256xf32>
    %106 = vector.shape_cast %105 : vector<1x1x256xf32> to vector<1x256xf32>
    %107 = vector.broadcast %106 : vector<1x256xf32> to vector<8x256xf32>
    %108 = arith.addf %104, %107 : vector<8x256xf32>
    %109 = arith.truncf %108 : vector<8x256xf32> to vector<8x256xbf16>
    %c2 = arith.constant 2 : index
    %c0_55 = arith.constant 0 : index
    %c0_56 = arith.constant 0 : index
    %110 = vector.load %arg7[%c2, %c0_55, %c0_56] : memref<4x256x256xbf16, #tpu.memory_space<vmem>>, vector<1x256x256xbf16>
    %111 = vector.shape_cast %110 : vector<1x256x256xbf16> to vector<256x256xbf16>
    %cst_57 = arith.constant dense<0.000000e+00> : vector<8x256xf32>
    %112 = tpu.matmul %1, %111, %cst_57 {dimension_numbers = #tpu.dot_dimension_numbers<[1], [0], [0], [1], [0, 0, 1, 1], [], []>} : vector<8x256xbf16>, vector<256x256xbf16>, vector<8x256xf32> -> vector<8x256xf32>
    %c2_58 = arith.constant 2 : index
    %c0_59 = arith.constant 0 : index
    %c0_60 = arith.constant 0 : index
    %113 = vector.load %arg8[%c2_58, %c0_59, %c0_60] : memref<4x1x256xf32, #tpu.memory_space<vmem>>, vector<1x1x256xf32>
    %114 = vector.shape_cast %113 : vector<1x1x256xf32> to vector<1x256xf32>
    %115 = vector.broadcast %114 : vector<1x256xf32> to vector<8x256xf32>
    %116 = arith.addf %112, %115 : vector<8x256xf32>
    %117 = arith.truncf %116 : vector<8x256xf32> to vector<8x256xbf16>
    %c3 = arith.constant 3 : index
    %c0_61 = arith.constant 0 : index
    %c0_62 = arith.constant 0 : index
    %118 = vector.load %arg7[%c3, %c0_61, %c0_62] : memref<4x256x256xbf16, #tpu.memory_space<vmem>>, vector<1x256x256xbf16>
    %119 = vector.shape_cast %118 : vector<1x256x256xbf16> to vector<256x256xbf16>
    %cst_63 = arith.constant dense<0.000000e+00> : vector<8x256xf32>
    %120 = tpu.matmul %1, %119, %cst_63 {dimension_numbers = #tpu.dot_dimension_numbers<[1], [0], [0], [1], [0, 0, 1, 1], [], []>} : vector<8x256xbf16>, vector<256x256xbf16>, vector<8x256xf32> -> vector<8x256xf32>
    %c3_64 = arith.constant 3 : index
    %c0_65 = arith.constant 0 : index
    %c0_66 = arith.constant 0 : index
    %121 = vector.load %arg8[%c3_64, %c0_65, %c0_66] : memref<4x1x256xf32, #tpu.memory_space<vmem>>, vector<1x1x256xf32>
    %122 = vector.shape_cast %121 : vector<1x1x256xf32> to vector<1x256xf32>
    %123 = vector.broadcast %122 : vector<1x256xf32> to vector<8x256xf32>
    %124 = arith.addf %120, %123 : vector<8x256xf32>
    %125 = arith.truncf %124 : vector<8x256xf32> to vector<8x256xbf16>
    %cst_67 = arith.constant 0.000000e+00 : f32
    %126 = vector.broadcast %cst_67 : f32 to vector<8x256xf32>
    %cst_68 = arith.constant dense<0.000000e+00> : vector<8x8xf32>
    %127 = tpu.matmul %101, %47, %cst_68 {dimension_numbers = #tpu.dot_dimension_numbers<[1], [1], [0], [0], [0, 0, 1, 0], [], []>} : vector<8x256xbf16>, vector<8x256xbf16>, vector<8x8xf32> -> vector<8x8xf32>
    %cst_69 = arith.constant dense<0xFF800000> : vector<8xf32>
    %128 = vector.multi_reduction <maximumf>, %127, %cst_69 [1] : vector<8x8xf32> to vector<8xf32>
    %129 = vector.shape_cast %128 : vector<8xf32> to vector<8x1xf32>
    %130 = vector.broadcast %129 : vector<8x1xf32> to vector<8x8xf32>
    %131 = arith.subf %127, %130 : vector<8x8xf32>
    %132 = math.exp %131 : vector<8x8xf32>
    %cst_70 = arith.constant dense<0.000000e+00> : vector<8xf32>
    %133 = vector.multi_reduction <add>, %132, %cst_70 [1] : vector<8x8xf32> to vector<8xf32>
    %134 = vector.shape_cast %133 : vector<8xf32> to vector<8x1xf32>
    %135 = tpu.reciprocal %134 {approx = true} : vector<8x1xf32> -> vector<8x1xf32>
    %136 = vector.broadcast %135 : vector<8x1xf32> to vector<8x8xf32>
    %137 = arith.mulf %132, %136 : vector<8x8xf32>
    %138 = arith.truncf %137 : vector<8x8xf32> to vector<8x8xbf16>
    %cst_71 = arith.constant dense<0.000000e+00> : vector<8x256xf32>
    %139 = tpu.matmul %138, %47, %cst_71 {dimension_numbers = #tpu.dot_dimension_numbers<[1], [0], [0], [1], [0, 0, 1, 1], [], []>} : vector<8x8xbf16>, vector<8x256xbf16>, vector<8x256xf32> -> vector<8x256xf32>
    %140 = arith.truncf %139 : vector<8x256xf32> to vector<8x256xbf16>
    %c0_72 = arith.constant 0 : index
    %c0_73 = arith.constant 0 : index
    %c0_74 = arith.constant 0 : index
    %141 = vector.load %arg9[%c0_72, %c0_73, %c0_74] : memref<4x256x256xbf16, #tpu.memory_space<vmem>>, vector<1x256x256xbf16>
    %142 = vector.shape_cast %141 : vector<1x256x256xbf16> to vector<256x256xbf16>
    %cst_75 = arith.constant dense<0.000000e+00> : vector<8x256xf32>
    %143 = tpu.matmul %140, %142, %cst_75 {dimension_numbers = #tpu.dot_dimension_numbers<[1], [0], [0], [1], [0, 0, 1, 1], [], []>} : vector<8x256xbf16>, vector<256x256xbf16>, vector<8x256xf32> -> vector<8x256xf32>
    %144 = arith.addf %126, %143 : vector<8x256xf32>
    %cst_76 = arith.constant dense<0.000000e+00> : vector<8x8xf32>
    %145 = tpu.matmul %109, %47, %cst_76 {dimension_numbers = #tpu.dot_dimension_numbers<[1], [1], [0], [0], [0, 0, 1, 0], [], []>} : vector<8x256xbf16>, vector<8x256xbf16>, vector<8x8xf32> -> vector<8x8xf32>
    %cst_77 = arith.constant dense<0xFF800000> : vector<8xf32>
    %146 = vector.multi_reduction <maximumf>, %145, %cst_77 [1] : vector<8x8xf32> to vector<8xf32>
    %147 = vector.shape_cast %146 : vector<8xf32> to vector<8x1xf32>
    %148 = vector.broadcast %147 : vector<8x1xf32> to vector<8x8xf32>
    %149 = arith.subf %145, %148 : vector<8x8xf32>
    %150 = math.exp %149 : vector<8x8xf32>
    %cst_78 = arith.constant dense<0.000000e+00> : vector<8xf32>
    %151 = vector.multi_reduction <add>, %150, %cst_78 [1] : vector<8x8xf32> to vector<8xf32>
    %152 = vector.shape_cast %151 : vector<8xf32> to vector<8x1xf32>
    %153 = tpu.reciprocal %152 {approx = true} : vector<8x1xf32> -> vector<8x1xf32>
    %154 = vector.broadcast %153 : vector<8x1xf32> to vector<8x8xf32>
    %155 = arith.mulf %150, %154 : vector<8x8xf32>
    %156 = arith.truncf %155 : vector<8x8xf32> to vector<8x8xbf16>
    %cst_79 = arith.constant dense<0.000000e+00> : vector<8x256xf32>
    %157 = tpu.matmul %156, %47, %cst_79 {dimension_numbers = #tpu.dot_dimension_numbers<[1], [0], [0], [1], [0, 0, 1, 1], [], []>} : vector<8x8xbf16>, vector<8x256xbf16>, vector<8x256xf32> -> vector<8x256xf32>
    %158 = arith.truncf %157 : vector<8x256xf32> to vector<8x256xbf16>
    %c1_80 = arith.constant 1 : index
    %c0_81 = arith.constant 0 : index
    %c0_82 = arith.constant 0 : index
    %159 = vector.load %arg9[%c1_80, %c0_81, %c0_82] : memref<4x256x256xbf16, #tpu.memory_space<vmem>>, vector<1x256x256xbf16>
    %160 = vector.shape_cast %159 : vector<1x256x256xbf16> to vector<256x256xbf16>
    %cst_83 = arith.constant dense<0.000000e+00> : vector<8x256xf32>
    %161 = tpu.matmul %158, %160, %cst_83 {dimension_numbers = #tpu.dot_dimension_numbers<[1], [0], [0], [1], [0, 0, 1, 1], [], []>} : vector<8x256xbf16>, vector<256x256xbf16>, vector<8x256xf32> -> vector<8x256xf32>
    %162 = arith.addf %144, %161 : vector<8x256xf32>
    %cst_84 = arith.constant dense<0.000000e+00> : vector<8x8xf32>
    %163 = tpu.matmul %117, %47, %cst_84 {dimension_numbers = #tpu.dot_dimension_numbers<[1], [1], [0], [0], [0, 0, 1, 0], [], []>} : vector<8x256xbf16>, vector<8x256xbf16>, vector<8x8xf32> -> vector<8x8xf32>
    %cst_85 = arith.constant dense<0xFF800000> : vector<8xf32>
    %164 = vector.multi_reduction <maximumf>, %163, %cst_85 [1] : vector<8x8xf32> to vector<8xf32>
    %165 = vector.shape_cast %164 : vector<8xf32> to vector<8x1xf32>
    %166 = vector.broadcast %165 : vector<8x1xf32> to vector<8x8xf32>
    %167 = arith.subf %163, %166 : vector<8x8xf32>
    %168 = math.exp %167 : vector<8x8xf32>
    %cst_86 = arith.constant dense<0.000000e+00> : vector<8xf32>
    %169 = vector.multi_reduction <add>, %168, %cst_86 [1] : vector<8x8xf32> to vector<8xf32>
    %170 = vector.shape_cast %169 : vector<8xf32> to vector<8x1xf32>
    %171 = tpu.reciprocal %170 {approx = true} : vector<8x1xf32> -> vector<8x1xf32>
    %172 = vector.broadcast %171 : vector<8x1xf32> to vector<8x8xf32>
    %173 = arith.mulf %168, %172 : vector<8x8xf32>
    %174 = arith.truncf %173 : vector<8x8xf32> to vector<8x8xbf16>
    %cst_87 = arith.constant dense<0.000000e+00> : vector<8x256xf32>
    %175 = tpu.matmul %174, %47, %cst_87 {dimension_numbers = #tpu.dot_dimension_numbers<[1], [0], [0], [1], [0, 0, 1, 1], [], []>} : vector<8x8xbf16>, vector<8x256xbf16>, vector<8x256xf32> -> vector<8x256xf32>
    %176 = arith.truncf %175 : vector<8x256xf32> to vector<8x256xbf16>
    %c2_88 = arith.constant 2 : index
    %c0_89 = arith.constant 0 : index
    %c0_90 = arith.constant 0 : index
    %177 = vector.load %arg9[%c2_88, %c0_89, %c0_90] : memref<4x256x256xbf16, #tpu.memory_space<vmem>>, vector<1x256x256xbf16>
    %178 = vector.shape_cast %177 : vector<1x256x256xbf16> to vector<256x256xbf16>
    %cst_91 = arith.constant dense<0.000000e+00> : vector<8x256xf32>
    %179 = tpu.matmul %176, %178, %cst_91 {dimension_numbers = #tpu.dot_dimension_numbers<[1], [0], [0], [1], [0, 0, 1, 1], [], []>} : vector<8x256xbf16>, vector<256x256xbf16>, vector<8x256xf32> -> vector<8x256xf32>
    %180 = arith.addf %162, %179 : vector<8x256xf32>
    %cst_92 = arith.constant dense<0.000000e+00> : vector<8x8xf32>
    %181 = tpu.matmul %125, %47, %cst_92 {dimension_numbers = #tpu.dot_dimension_numbers<[1], [1], [0], [0], [0, 0, 1, 0], [], []>} : vector<8x256xbf16>, vector<8x256xbf16>, vector<8x8xf32> -> vector<8x8xf32>
    %cst_93 = arith.constant dense<0xFF800000> : vector<8xf32>
    %182 = vector.multi_reduction <maximumf>, %181, %cst_93 [1] : vector<8x8xf32> to vector<8xf32>
    %183 = vector.shape_cast %182 : vector<8xf32> to vector<8x1xf32>
    %184 = vector.broadcast %183 : vector<8x1xf32> to vector<8x8xf32>
    %185 = arith.subf %181, %184 : vector<8x8xf32>
    %186 = math.exp %185 : vector<8x8xf32>
    %cst_94 = arith.constant dense<0.000000e+00> : vector<8xf32>
    %187 = vector.multi_reduction <add>, %186, %cst_94 [1] : vector<8x8xf32> to vector<8xf32>
    %188 = vector.shape_cast %187 : vector<8xf32> to vector<8x1xf32>
    %189 = tpu.reciprocal %188 {approx = true} : vector<8x1xf32> -> vector<8x1xf32>
    %190 = vector.broadcast %189 : vector<8x1xf32> to vector<8x8xf32>
    %191 = arith.mulf %186, %190 : vector<8x8xf32>
    %192 = arith.truncf %191 : vector<8x8xf32> to vector<8x8xbf16>
    %cst_95 = arith.constant dense<0.000000e+00> : vector<8x256xf32>
    %193 = tpu.matmul %192, %47, %cst_95 {dimension_numbers = #tpu.dot_dimension_numbers<[1], [0], [0], [1], [0, 0, 1, 1], [], []>} : vector<8x8xbf16>, vector<8x256xbf16>, vector<8x256xf32> -> vector<8x256xf32>
    %194 = arith.truncf %193 : vector<8x256xf32> to vector<8x256xbf16>
    %c3_96 = arith.constant 3 : index
    %c0_97 = arith.constant 0 : index
    %c0_98 = arith.constant 0 : index
    %195 = vector.load %arg9[%c3_96, %c0_97, %c0_98] : memref<4x256x256xbf16, #tpu.memory_space<vmem>>, vector<1x256x256xbf16>
    %196 = vector.shape_cast %195 : vector<1x256x256xbf16> to vector<256x256xbf16>
    %cst_99 = arith.constant dense<0.000000e+00> : vector<8x256xf32>
    %197 = tpu.matmul %194, %196, %cst_99 {dimension_numbers = #tpu.dot_dimension_numbers<[1], [0], [0], [1], [0, 0, 1, 1], [], []>} : vector<8x256xbf16>, vector<256x256xbf16>, vector<8x256xf32> -> vector<8x256xf32>
    %198 = arith.addf %180, %197 : vector<8x256xf32>
    %c0_100 = arith.constant 0 : index
    %c0_101 = arith.constant 0 : index
    %199 = vector.load %arg10[%c0_100, %c0_101] : memref<1x256xf32, #tpu.memory_space<vmem>>, vector<1x256xf32>
    %200 = vector.broadcast %199 : vector<1x256xf32> to vector<8x256xf32>
    %201 = arith.addf %198, %200 : vector<8x256xf32>
    %cst_102 = arith.constant 0.000000e+00 : f32
    %202 = vector.broadcast %cst_102 : f32 to vector<8x256xf32>
    %cst_103 = arith.constant dense<0.000000e+00> : vector<8x8xf32>
    %203 = tpu.matmul %101, %93, %cst_103 {dimension_numbers = #tpu.dot_dimension_numbers<[1], [1], [0], [0], [0, 0, 1, 0], [], []>} : vector<8x256xbf16>, vector<8x256xbf16>, vector<8x8xf32> -> vector<8x8xf32>
    %cst_104 = arith.constant dense<0xFF800000> : vector<8xf32>
    %204 = vector.multi_reduction <maximumf>, %203, %cst_104 [1] : vector<8x8xf32> to vector<8xf32>
    %205 = vector.shape_cast %204 : vector<8xf32> to vector<8x1xf32>
    %206 = vector.broadcast %205 : vector<8x1xf32> to vector<8x8xf32>
    %207 = arith.subf %203, %206 : vector<8x8xf32>
    %208 = math.exp %207 : vector<8x8xf32>
    %cst_105 = arith.constant dense<0.000000e+00> : vector<8xf32>
    %209 = vector.multi_reduction <add>, %208, %cst_105 [1] : vector<8x8xf32> to vector<8xf32>
    %210 = vector.shape_cast %209 : vector<8xf32> to vector<8x1xf32>
    %211 = tpu.reciprocal %210 {approx = true} : vector<8x1xf32> -> vector<8x1xf32>
    %212 = vector.broadcast %211 : vector<8x1xf32> to vector<8x8xf32>
    %213 = arith.mulf %208, %212 : vector<8x8xf32>
    %214 = arith.truncf %213 : vector<8x8xf32> to vector<8x8xbf16>
    %cst_106 = arith.constant dense<0.000000e+00> : vector<8x256xf32>
    %215 = tpu.matmul %214, %93, %cst_106 {dimension_numbers = #tpu.dot_dimension_numbers<[1], [0], [0], [1], [0, 0, 1, 1], [], []>} : vector<8x8xbf16>, vector<8x256xbf16>, vector<8x256xf32> -> vector<8x256xf32>
    %216 = arith.truncf %215 : vector<8x256xf32> to vector<8x256xbf16>
    %c0_107 = arith.constant 0 : index
    %c0_108 = arith.constant 0 : index
    %c0_109 = arith.constant 0 : index
    %217 = vector.load %arg9[%c0_107, %c0_108, %c0_109] : memref<4x256x256xbf16, #tpu.memory_space<vmem>>, vector<1x256x256xbf16>
    %218 = vector.shape_cast %217 : vector<1x256x256xbf16> to vector<256x256xbf16>
    %cst_110 = arith.constant dense<0.000000e+00> : vector<8x256xf32>
    %219 = tpu.matmul %216, %218, %cst_110 {dimension_numbers = #tpu.dot_dimension_numbers<[1], [0], [0], [1], [0, 0, 1, 1], [], []>} : vector<8x256xbf16>, vector<256x256xbf16>, vector<8x256xf32> -> vector<8x256xf32>
    %220 = arith.addf %202, %219 : vector<8x256xf32>
    %cst_111 = arith.constant dense<0.000000e+00> : vector<8x8xf32>
    %221 = tpu.matmul %109, %93, %cst_111 {dimension_numbers = #tpu.dot_dimension_numbers<[1], [1], [0], [0], [0, 0, 1, 0], [], []>} : vector<8x256xbf16>, vector<8x256xbf16>, vector<8x8xf32> -> vector<8x8xf32>
    %cst_112 = arith.constant dense<0xFF800000> : vector<8xf32>
    %222 = vector.multi_reduction <maximumf>, %221, %cst_112 [1] : vector<8x8xf32> to vector<8xf32>
    %223 = vector.shape_cast %222 : vector<8xf32> to vector<8x1xf32>
    %224 = vector.broadcast %223 : vector<8x1xf32> to vector<8x8xf32>
    %225 = arith.subf %221, %224 : vector<8x8xf32>
    %226 = math.exp %225 : vector<8x8xf32>
    %cst_113 = arith.constant dense<0.000000e+00> : vector<8xf32>
    %227 = vector.multi_reduction <add>, %226, %cst_113 [1] : vector<8x8xf32> to vector<8xf32>
    %228 = vector.shape_cast %227 : vector<8xf32> to vector<8x1xf32>
    %229 = tpu.reciprocal %228 {approx = true} : vector<8x1xf32> -> vector<8x1xf32>
    %230 = vector.broadcast %229 : vector<8x1xf32> to vector<8x8xf32>
    %231 = arith.mulf %226, %230 : vector<8x8xf32>
    %232 = arith.truncf %231 : vector<8x8xf32> to vector<8x8xbf16>
    %cst_114 = arith.constant dense<0.000000e+00> : vector<8x256xf32>
    %233 = tpu.matmul %232, %93, %cst_114 {dimension_numbers = #tpu.dot_dimension_numbers<[1], [0], [0], [1], [0, 0, 1, 1], [], []>} : vector<8x8xbf16>, vector<8x256xbf16>, vector<8x256xf32> -> vector<8x256xf32>
    %234 = arith.truncf %233 : vector<8x256xf32> to vector<8x256xbf16>
    %c1_115 = arith.constant 1 : index
    %c0_116 = arith.constant 0 : index
    %c0_117 = arith.constant 0 : index
    %235 = vector.load %arg9[%c1_115, %c0_116, %c0_117] : memref<4x256x256xbf16, #tpu.memory_space<vmem>>, vector<1x256x256xbf16>
    %236 = vector.shape_cast %235 : vector<1x256x256xbf16> to vector<256x256xbf16>
    %cst_118 = arith.constant dense<0.000000e+00> : vector<8x256xf32>
    %237 = tpu.matmul %234, %236, %cst_118 {dimension_numbers = #tpu.dot_dimension_numbers<[1], [0], [0], [1], [0, 0, 1, 1], [], []>} : vector<8x256xbf16>, vector<256x256xbf16>, vector<8x256xf32> -> vector<8x256xf32>
    %238 = arith.addf %220, %237 : vector<8x256xf32>
    %cst_119 = arith.constant dense<0.000000e+00> : vector<8x8xf32>
    %239 = tpu.matmul %117, %93, %cst_119 {dimension_numbers = #tpu.dot_dimension_numbers<[1], [1], [0], [0], [0, 0, 1, 0], [], []>} : vector<8x256xbf16>, vector<8x256xbf16>, vector<8x8xf32> -> vector<8x8xf32>
    %cst_120 = arith.constant dense<0xFF800000> : vector<8xf32>
    %240 = vector.multi_reduction <maximumf>, %239, %cst_120 [1] : vector<8x8xf32> to vector<8xf32>
    %241 = vector.shape_cast %240 : vector<8xf32> to vector<8x1xf32>
    %242 = vector.broadcast %241 : vector<8x1xf32> to vector<8x8xf32>
    %243 = arith.subf %239, %242 : vector<8x8xf32>
    %244 = math.exp %243 : vector<8x8xf32>
    %cst_121 = arith.constant dense<0.000000e+00> : vector<8xf32>
    %245 = vector.multi_reduction <add>, %244, %cst_121 [1] : vector<8x8xf32> to vector<8xf32>
    %246 = vector.shape_cast %245 : vector<8xf32> to vector<8x1xf32>
    %247 = tpu.reciprocal %246 {approx = true} : vector<8x1xf32> -> vector<8x1xf32>
    %248 = vector.broadcast %247 : vector<8x1xf32> to vector<8x8xf32>
    %249 = arith.mulf %244, %248 : vector<8x8xf32>
    %250 = arith.truncf %249 : vector<8x8xf32> to vector<8x8xbf16>
    %cst_122 = arith.constant dense<0.000000e+00> : vector<8x256xf32>
    %251 = tpu.matmul %250, %93, %cst_122 {dimension_numbers = #tpu.dot_dimension_numbers<[1], [0], [0], [1], [0, 0, 1, 1], [], []>} : vector<8x8xbf16>, vector<8x256xbf16>, vector<8x256xf32> -> vector<8x256xf32>
    %252 = arith.truncf %251 : vector<8x256xf32> to vector<8x256xbf16>
    %c2_123 = arith.constant 2 : index
    %c0_124 = arith.constant 0 : index
    %c0_125 = arith.constant 0 : index
    %253 = vector.load %arg9[%c2_123, %c0_124, %c0_125] : memref<4x256x256xbf16, #tpu.memory_space<vmem>>, vector<1x256x256xbf16>
    %254 = vector.shape_cast %253 : vector<1x256x256xbf16> to vector<256x256xbf16>
    %cst_126 = arith.constant dense<0.000000e+00> : vector<8x256xf32>
    %255 = tpu.matmul %252, %254, %cst_126 {dimension_numbers = #tpu.dot_dimension_numbers<[1], [0], [0], [1], [0, 0, 1, 1], [], []>} : vector<8x256xbf16>, vector<256x256xbf16>, vector<8x256xf32> -> vector<8x256xf32>
    %256 = arith.addf %238, %255 : vector<8x256xf32>
    %cst_127 = arith.constant dense<0.000000e+00> : vector<8x8xf32>
    %257 = tpu.matmul %125, %93, %cst_127 {dimension_numbers = #tpu.dot_dimension_numbers<[1], [1], [0], [0], [0, 0, 1, 0], [], []>} : vector<8x256xbf16>, vector<8x256xbf16>, vector<8x8xf32> -> vector<8x8xf32>
    %cst_128 = arith.constant dense<0xFF800000> : vector<8xf32>
    %258 = vector.multi_reduction <maximumf>, %257, %cst_128 [1] : vector<8x8xf32> to vector<8xf32>
    %259 = vector.shape_cast %258 : vector<8xf32> to vector<8x1xf32>
    %260 = vector.broadcast %259 : vector<8x1xf32> to vector<8x8xf32>
    %261 = arith.subf %257, %260 : vector<8x8xf32>
    %262 = math.exp %261 : vector<8x8xf32>
    %cst_129 = arith.constant dense<0.000000e+00> : vector<8xf32>
    %263 = vector.multi_reduction <add>, %262, %cst_129 [1] : vector<8x8xf32> to vector<8xf32>
    %264 = vector.shape_cast %263 : vector<8xf32> to vector<8x1xf32>
    %265 = tpu.reciprocal %264 {approx = true} : vector<8x1xf32> -> vector<8x1xf32>
    %266 = vector.broadcast %265 : vector<8x1xf32> to vector<8x8xf32>
    %267 = arith.mulf %262, %266 : vector<8x8xf32>
    %268 = arith.truncf %267 : vector<8x8xf32> to vector<8x8xbf16>
    %cst_130 = arith.constant dense<0.000000e+00> : vector<8x256xf32>
    %269 = tpu.matmul %268, %93, %cst_130 {dimension_numbers = #tpu.dot_dimension_numbers<[1], [0], [0], [1], [0, 0, 1, 1], [], []>} : vector<8x8xbf16>, vector<8x256xbf16>, vector<8x256xf32> -> vector<8x256xf32>
    %270 = arith.truncf %269 : vector<8x256xf32> to vector<8x256xbf16>
    %c3_131 = arith.constant 3 : index
    %c0_132 = arith.constant 0 : index
    %c0_133 = arith.constant 0 : index
    %271 = vector.load %arg9[%c3_131, %c0_132, %c0_133] : memref<4x256x256xbf16, #tpu.memory_space<vmem>>, vector<1x256x256xbf16>
    %272 = vector.shape_cast %271 : vector<1x256x256xbf16> to vector<256x256xbf16>
    %cst_134 = arith.constant dense<0.000000e+00> : vector<8x256xf32>
    %273 = tpu.matmul %270, %272, %cst_134 {dimension_numbers = #tpu.dot_dimension_numbers<[1], [0], [0], [1], [0, 0, 1, 1], [], []>} : vector<8x256xbf16>, vector<256x256xbf16>, vector<8x256xf32> -> vector<8x256xf32>
    %274 = arith.addf %256, %273 : vector<8x256xf32>
    %c0_135 = arith.constant 0 : index
    %c0_136 = arith.constant 0 : index
    %275 = vector.load %arg10[%c0_135, %c0_136] : memref<1x256xf32, #tpu.memory_space<vmem>>, vector<1x256xf32>
    %276 = vector.broadcast %275 : vector<1x256xf32> to vector<8x256xf32>
    %277 = arith.addf %274, %276 : vector<8x256xf32>
    %278 = arith.truncf %201 : vector<8x256xf32> to vector<8x256xbf16>
    %279 = arith.truncf %277 : vector<8x256xf32> to vector<8x256xbf16>
    %c0_137 = arith.constant 0 : index
    %c0_138 = arith.constant 0 : index
    %280 = vector.load %arg11[%c0_137, %c0_138] : memref<768x256xbf16, #tpu.memory_space<vmem>>, vector<256x256xbf16>
    %cst_139 = arith.constant dense<0.000000e+00> : vector<8x256xf32>
    %281 = tpu.matmul %1, %280, %cst_139 {dimension_numbers = #tpu.dot_dimension_numbers<[1], [0], [0], [1], [0, 0, 1, 1], [], []>} : vector<8x256xbf16>, vector<256x256xbf16>, vector<8x256xf32> -> vector<8x256xf32>
    %c256 = arith.constant 256 : index
    %c0_140 = arith.constant 0 : index
    %282 = vector.load %arg11[%c256, %c0_140] : memref<768x256xbf16, #tpu.memory_space<vmem>>, vector<256x256xbf16>
    %cst_141 = arith.constant dense<0.000000e+00> : vector<8x256xf32>
    %283 = tpu.matmul %278, %282, %cst_141 {dimension_numbers = #tpu.dot_dimension_numbers<[1], [0], [0], [1], [0, 0, 1, 1], [], []>} : vector<8x256xbf16>, vector<256x256xbf16>, vector<8x256xf32> -> vector<8x256xf32>
    %284 = arith.addf %281, %283 : vector<8x256xf32>
    %c512 = arith.constant 512 : index
    %c0_142 = arith.constant 0 : index
    %285 = vector.load %arg11[%c512, %c0_142] : memref<768x256xbf16, #tpu.memory_space<vmem>>, vector<256x256xbf16>
    %cst_143 = arith.constant dense<0.000000e+00> : vector<8x256xf32>
    %286 = tpu.matmul %279, %285, %cst_143 {dimension_numbers = #tpu.dot_dimension_numbers<[1], [0], [0], [1], [0, 0, 1, 1], [], []>} : vector<8x256xbf16>, vector<256x256xbf16>, vector<8x256xf32> -> vector<8x256xf32>
    %287 = arith.addf %284, %286 : vector<8x256xf32>
    %c0_144 = arith.constant 0 : index
    %c0_145 = arith.constant 0 : index
    %288 = vector.load %arg12[%c0_144, %c0_145] : memref<1x256xf32, #tpu.memory_space<vmem>>, vector<1x256xf32>
    %289 = vector.broadcast %288 : vector<1x256xf32> to vector<8x256xf32>
    %290 = arith.addf %287, %289 : vector<8x256xf32>
    %cst_146 = arith.constant 0.000000e+00 : f32
    %291 = vector.broadcast %cst_146 : f32 to vector<8x256xf32>
    %292 = arith.subf %291, %290 : vector<8x256xf32>
    %293 = math.exp %292 : vector<8x256xf32>
    %cst_147 = arith.constant 1.000000e+00 : f32
    %294 = vector.broadcast %cst_147 : f32 to vector<8x256xf32>
    %295 = arith.addf %294, %293 : vector<8x256xf32>
    %296 = tpu.reciprocal %295 {approx = true} : vector<8x256xf32> -> vector<8x256xf32>
    %297 = arith.mulf %296, %0 : vector<8x256xf32>
    %298 = arith.truncf %297 : vector<8x256xf32> to vector<8x256xbf16>
    %cst_148 = arith.constant 1.000000e+00 : f32
    %299 = vector.broadcast %cst_148 : f32 to vector<8x256xf32>
    %300 = arith.subf %299, %296 : vector<8x256xf32>
    %301 = arith.mulf %300, %277 : vector<8x256xf32>
    %302 = arith.truncf %301 : vector<8x256xf32> to vector<8x256xbf16>
    %c0_149 = arith.constant 0 : index
    %c0_150 = arith.constant 0 : index
    %303 = vector.load %arg13[%c0_149, %c0_150] : memref<512x64xbf16, #tpu.memory_space<vmem>>, vector<256x64xbf16>
    %cst_151 = arith.constant dense<0.000000e+00> : vector<8x64xf32>
    %304 = tpu.matmul %298, %303, %cst_151 {dimension_numbers = #tpu.dot_dimension_numbers<[1], [0], [0], [1], [0, 0, 1, 1], [], []>} : vector<8x256xbf16>, vector<256x64xbf16>, vector<8x64xf32> -> vector<8x64xf32>
    %c256_152 = arith.constant 256 : index
    %c0_153 = arith.constant 0 : index
    %305 = vector.load %arg13[%c256_152, %c0_153] : memref<512x64xbf16, #tpu.memory_space<vmem>>, vector<256x64xbf16>
    %cst_154 = arith.constant dense<0.000000e+00> : vector<8x64xf32>
    %306 = tpu.matmul %302, %305, %cst_154 {dimension_numbers = #tpu.dot_dimension_numbers<[1], [0], [0], [1], [0, 0, 1, 1], [], []>} : vector<8x256xbf16>, vector<256x64xbf16>, vector<8x64xf32> -> vector<8x64xf32>
    %307 = arith.addf %304, %306 : vector<8x64xf32>
    %c0_155 = arith.constant 0 : index
    %c0_156 = arith.constant 0 : index
    %308 = vector.load %arg14[%c0_155, %c0_156] : memref<1x64xf32, #tpu.memory_space<vmem>>, vector<1x64xf32>
    %309 = vector.broadcast %308 : vector<1x64xf32> to vector<8x64xf32>
    %310 = arith.addf %307, %309 : vector<8x64xf32>
    %c0_157 = arith.constant 0 : index
    %c0_158 = arith.constant 0 : index
    %311 = vector.load %arg15[%c0_157, %c0_158] : memref<1x64xf32, #tpu.memory_space<vmem>>, vector<1x64xf32>
    %c0_159 = arith.constant 0 : index
    %c0_160 = arith.constant 0 : index
    %312 = vector.load %arg16[%c0_159, %c0_160] : memref<1x64xf32, #tpu.memory_space<vmem>>, vector<1x64xf32>
    %cst_161 = arith.constant dense<0.000000e+00> : vector<8xf32>
    %313 = vector.multi_reduction <add>, %310, %cst_161 [1] : vector<8x64xf32> to vector<8xf32>
    %314 = vector.shape_cast %313 : vector<8xf32> to vector<8x1xf32>
    %cst_162 = arith.constant 6.400000e+01 : f32
    %315 = vector.broadcast %cst_162 : f32 to vector<8x1xf32>
    %316 = arith.divf %314, %315 : vector<8x1xf32>
    %317 = vector.broadcast %316 : vector<8x1xf32> to vector<8x64xf32>
    %318 = arith.subf %310, %317 : vector<8x64xf32>
    %319 = arith.mulf %318, %318 : vector<8x64xf32>
    %cst_163 = arith.constant dense<0.000000e+00> : vector<8xf32>
    %320 = vector.multi_reduction <add>, %319, %cst_163 [1] : vector<8x64xf32> to vector<8xf32>
    %321 = vector.shape_cast %320 : vector<8xf32> to vector<8x1xf32>
    %cst_164 = arith.constant 6.400000e+01 : f32
    %322 = vector.broadcast %cst_164 : f32 to vector<8x1xf32>
    %323 = arith.divf %321, %322 : vector<8x1xf32>
    %324 = vector.broadcast %316 : vector<8x1xf32> to vector<8x64xf32>
    %325 = arith.subf %310, %324 : vector<8x64xf32>
    %cst_165 = arith.constant 9.99999974E-6 : f32
    %326 = vector.broadcast %cst_165 : f32 to vector<8x1xf32>
    %327 = arith.addf %323, %326 : vector<8x1xf32>
    %328 = math.rsqrt %327 : vector<8x1xf32>
    %329 = vector.broadcast %328 : vector<8x1xf32> to vector<8x64xf32>
    %330 = arith.mulf %325, %329 : vector<8x64xf32>
    %331 = vector.broadcast %311 : vector<1x64xf32> to vector<8x64xf32>
    %332 = arith.mulf %330, %331 : vector<8x64xf32>
    %333 = vector.broadcast %312 : vector<1x64xf32> to vector<8x64xf32>
    %334 = arith.addf %332, %333 : vector<8x64xf32>
    %cst_166 = arith.constant 5.000000e-01 : f32
    %335 = vector.broadcast %cst_166 : f32 to vector<8x64xf32>
    %336 = arith.mulf %335, %334 : vector<8x64xf32>
    %cst_167 = arith.constant 4.471500e-02 : f32
    %337 = vector.broadcast %cst_167 : f32 to vector<8x64xf32>
    %338 = arith.mulf %337, %334 : vector<8x64xf32>
    %339 = arith.mulf %338, %334 : vector<8x64xf32>
    %340 = arith.mulf %339, %334 : vector<8x64xf32>
    %341 = arith.addf %334, %340 : vector<8x64xf32>
    %cst_168 = arith.constant 0.797884583 : f32
    %342 = vector.broadcast %cst_168 : f32 to vector<8x64xf32>
    %343 = arith.mulf %342, %341 : vector<8x64xf32>
    %344 = math.tanh %343 : vector<8x64xf32>
    %cst_169 = arith.constant 1.000000e+00 : f32
    %345 = vector.broadcast %cst_169 : f32 to vector<8x64xf32>
    %346 = arith.addf %345, %344 : vector<8x64xf32>
    %347 = arith.mulf %336, %346 : vector<8x64xf32>
    %348 = arith.truncf %347 : vector<8x64xf32> to vector<8x64xbf16>
    %c0_170 = arith.constant 0 : index
    %c0_171 = arith.constant 0 : index
    %349 = vector.load %arg17[%c0_170, %c0_171] : memref<64x128xbf16, #tpu.memory_space<vmem>>, vector<64x128xbf16>
    %cst_172 = arith.constant dense<0.000000e+00> : vector<8x128xf32>
    %350 = tpu.matmul %348, %349, %cst_172 {dimension_numbers = #tpu.dot_dimension_numbers<[1], [0], [0], [1], [0, 0, 1, 1], [], []>} : vector<8x64xbf16>, vector<64x128xbf16>, vector<8x128xf32> -> vector<8x128xf32>
    %c0_173 = arith.constant 0 : index
    %c0_174 = arith.constant 0 : index
    %351 = vector.load %arg18[%c0_173, %c0_174] : memref<1x128xf32, #tpu.memory_space<vmem>>, vector<1x128xf32>
    %352 = vector.broadcast %351 : vector<1x128xf32> to vector<8x128xf32>
    %353 = arith.addf %350, %352 : vector<8x128xf32>
    %354 = math.tanh %353 : vector<8x128xf32>
    %c0_175 = arith.constant 0 : index
    %c0_176 = arith.constant 0 : index
    %355 = vector.load %arg19[%c0_175, %c0_176] : memref<8x128xf32, #tpu.memory_space<vmem>>, vector<8x128xf32>
    tpu.vector_store %arg19[%c0_175, %c0_176], %354 {strides = array<i32>} : memref<8x128xf32, #tpu.memory_space<vmem>>, vector<8x128xf32>,
    return
  }
  func.func @transform_0(%arg0: i32) -> (i32, i32) {
    %c0_i32 = arith.constant 0 : i32
    %c0_i32_0 = arith.constant 0 : i32
    return %arg0, %c0_i32 : i32, i32
  }
  func.func @transform_1(%arg0: i32) -> (i32, i32, i32) {
    %c0_i32 = arith.constant 0 : i32
    %c0_i32_0 = arith.constant 0 : i32
    %c0_i32_1 = arith.constant 0 : i32
    return %c0_i32, %arg0, %c0_i32_0 : i32, i32, i32
  }
  func.func @transform_2(%arg0: i32) -> (i32, i32) {
    %c0_i32 = arith.constant 0 : i32
    %c0_i32_0 = arith.constant 0 : i32
    %c0_i32_1 = arith.constant 0 : i32
    return %c0_i32, %c0_i32_0 : i32, i32
  }
  func.func @transform_3(%arg0: i32) -> (i32, i32) {
    %c0_i32 = arith.constant 0 : i32
    %c0_i32_0 = arith.constant 0 : i32
    %c0_i32_1 = arith.constant 0 : i32
    return %c0_i32, %c0_i32_0 : i32, i32
  }
  func.func @transform_4(%arg0: i32) -> (i32, i32) {
    %c0_i32 = arith.constant 0 : i32
    %c0_i32_0 = arith.constant 0 : i32
    %c0_i32_1 = arith.constant 0 : i32
    return %c0_i32, %c0_i32_0 : i32, i32
  }
  func.func @transform_5(%arg0: i32) -> (i32, i32) {
    %c0_i32 = arith.constant 0 : i32
    %c0_i32_0 = arith.constant 0 : i32
    %c0_i32_1 = arith.constant 0 : i32
    return %c0_i32, %c0_i32_0 : i32, i32
  }
  func.func @transform_6(%arg0: i32) -> (i32, i32, i32) {
    %c0_i32 = arith.constant 0 : i32
    %c0_i32_0 = arith.constant 0 : i32
    %c0_i32_1 = arith.constant 0 : i32
    %c0_i32_2 = arith.constant 0 : i32
    return %c0_i32, %c0_i32_0, %c0_i32_1 : i32, i32, i32
  }
  func.func @transform_7(%arg0: i32) -> (i32, i32, i32) {
    %c0_i32 = arith.constant 0 : i32
    %c0_i32_0 = arith.constant 0 : i32
    %c0_i32_1 = arith.constant 0 : i32
    %c0_i32_2 = arith.constant 0 : i32
    return %c0_i32, %c0_i32_0, %c0_i32_1 : i32, i32, i32
  }
  func.func @transform_8(%arg0: i32) -> (i32, i32, i32) {
    %c0_i32 = arith.constant 0 : i32
    %c0_i32_0 = arith.constant 0 : i32
    %c0_i32_1 = arith.constant 0 : i32
    %c0_i32_2 = arith.constant 0 : i32
    return %c0_i32, %c0_i32_0, %c0_i32_1 : i32, i32, i32
  }
  func.func @transform_9(%arg0: i32) -> (i32, i32) {
    %c0_i32 = arith.constant 0 : i32
    %c0_i32_0 = arith.constant 0 : i32
    %c0_i32_1 = arith.constant 0 : i32
    return %c0_i32, %c0_i32_0 : i32, i32
  }
  func.func @transform_10(%arg0: i32) -> (i32, i32) {
    %c0_i32 = arith.constant 0 : i32
    %c0_i32_0 = arith.constant 0 : i32
    %c0_i32_1 = arith.constant 0 : i32
    return %c0_i32, %c0_i32_0 : i32, i32
  }
  func.func @transform_11(%arg0: i32) -> (i32, i32) {
    %c0_i32 = arith.constant 0 : i32
    %c0_i32_0 = arith.constant 0 : i32
    %c0_i32_1 = arith.constant 0 : i32
    return %c0_i32, %c0_i32_0 : i32, i32
  }
  func.func @transform_12(%arg0: i32) -> (i32, i32) {
    %c0_i32 = arith.constant 0 : i32
    %c0_i32_0 = arith.constant 0 : i32
    %c0_i32_1 = arith.constant 0 : i32
    return %c0_i32, %c0_i32_0 : i32, i32
  }
  func.func @transform_13(%arg0: i32) -> (i32, i32) {
    %c0_i32 = arith.constant 0 : i32
    %c0_i32_0 = arith.constant 0 : i32
    %c0_i32_1 = arith.constant 0 : i32
    return %c0_i32, %c0_i32_0 : i32, i32
  }
  func.func @transform_14(%arg0: i32) -> (i32, i32) {
    %c0_i32 = arith.constant 0 : i32
    %c0_i32_0 = arith.constant 0 : i32
    %c0_i32_1 = arith.constant 0 : i32
    return %c0_i32, %c0_i32_0 : i32, i32
  }
  func.func @transform_15(%arg0: i32) -> (i32, i32) {
    %c0_i32 = arith.constant 0 : i32
    %c0_i32_0 = arith.constant 0 : i32
    %c0_i32_1 = arith.constant 0 : i32
    return %c0_i32, %c0_i32_0 : i32, i32
  }
  func.func @transform_16(%arg0: i32) -> (i32, i32) {
    %c0_i32 = arith.constant 0 : i32
    %c0_i32_0 = arith.constant 0 : i32
    %c0_i32_1 = arith.constant 0 : i32
    return %c0_i32, %c0_i32_0 : i32, i32
  }
  func.func @transform_17(%arg0: i32) -> (i32, i32) {
    %c0_i32 = arith.constant 0 : i32
    %c0_i32_0 = arith.constant 0 : i32
    %c0_i32_1 = arith.constant 0 : i32
    return %c0_i32, %c0_i32_0 : i32, i32
  }
  func.func @transform_18(%arg0: i32) -> (i32, i32) {
    %c0_i32 = arith.constant 0 : i32
    %c0_i32_0 = arith.constant 0 : i32
    return %arg0, %c0_i32 : i32, i32
  }
}

</mosaic_0001>

<llo_original>
// kernel: my_model_forward.1
$region0: #{my_model_forward.1}
  #allocation0 [shape = 'u32[]', space=smem, size = 0x4, offset = 0x4, fixed_abs, tag = 'smem constant byte address 0x4 - core index']
  #allocation1 [shape = 'u32[72,128]{1,0:T(1,128)}', space=vmem, size = 0x9000, scoped, tag = 'internal scratch']
  %s0 = inlined_call_operand.vmem [shape: f32[16,256], index: 0, kind: input, shape index: {}]
  %s1 = inlined_call_operand.vmem [shape: f32[2,16,128], index: 1, kind: input, shape index: {}]
  %s2 = inlined_call_operand.vmem [shape: bf16[128,256], index: 2, kind: input, shape index: {}]
  %s3 = inlined_call_operand.vmem [shape: f32[1,256], index: 3, kind: input, shape index: {}]
  %s4 = inlined_call_operand.vmem [shape: f32[1,256], index: 4, kind: input, shape index: {}]
  %s5 = inlined_call_operand.vmem [shape: f32[1,256], index: 5, kind: input, shape index: {}]
  %s6 = inlined_call_operand.vmem [shape: bf16[4,256,256], index: 6, kind: input, shape index: {}]
  %s7 = inlined_call_operand.vmem [shape: f32[4,1,256], index: 7, kind: input, shape index: {}]
  %s8 = inlined_call_operand.vmem [shape: bf16[4,256,256], index: 8, kind: input, shape index: {}]
  %s9 = inlined_call_operand.vmem [shape: f32[1,256], index: 9, kind: input, shape index: {}]
  %s10 = inlined_call_operand.vmem [shape: bf16[768,256], index: 10, kind: input, shape index: {}]
  %s11 = inlined_call_operand.vmem [shape: f32[1,256], index: 11, kind: input, shape index: {}]
  %s12 = inlined_call_operand.vmem [shape: bf16[512,64], index: 12, kind: input, shape index: {}]
  %s13 = inlined_call_operand.vmem [shape: f32[1,64], index: 13, kind: input, shape index: {}]
  %s14 = inlined_call_operand.vmem [shape: f32[1,64], index: 14, kind: input, shape index: {}]
  %s15 = inlined_call_operand.vmem [shape: f32[1,64], index: 15, kind: input, shape index: {}]
  %s16 = inlined_call_operand.vmem [shape: bf16[64,128], index: 16, kind: input, shape index: {}]
  %s17 = inlined_call_operand.vmem [shape: f32[1,128], index: 17, kind: input, shape index: {}]
  %s18 = inlined_call_operand.vmem [shape: f32[16,128], index: 18, kind: output, shape index: {}]
  %s19 = sld [smem:[#allocation0]]
  $region143: #{my_model_forward.1} parent=0
    _
  %s21 = ssub.s32 1, %s19
  %s22 = scalar_select 0, %s21, %s19
  $region1: #{my_model_forward.1} parent=0
    #allocation2 [shape = 'u8[16384]{0}', space=vmem, size = 0x4000, scoped, tag = 'input window, operand 1']
    loop: start=0, step=1, limit=4
    $region2: #{my_model_forward.1} parent=1 // loop_pre_header
      _
    $region3: #{my_model_forward.1} parent=1 // loop_header
      %s24 = sphi 0, %s28
      %p25 = scmp.ge.s32.totalorder %s24, 4
      %s34 = sphi 0, %s36
      %s37 = sphi 0, %s34
      %s38 = sphi 0, %s37
      %s54 = sphi 0, %s38
      %s60 = sphi 0, %s62
      %s63 = sphi 0, %s60
      %s64 = sphi 0, %s63
      %s80 = sphi 0, %s64
      %s84 = sphi 0, %s84
      %s86 = sphi 0, %s84
      %s87 = sphi 0, %s86
      %s101 = sphi 0, %s87
      %s105 = sphi 0, %s105
      %s107 = sphi 0, %s105
      %s108 = sphi 0, %s107
      %s122 = sphi 0, %s108
      %s126 = sphi 0, %s126
      %s128 = sphi 0, %s126
      %s129 = sphi 0, %s128
      %s143 = sphi 0, %s129
      %s147 = sphi 0, %s147
      %s149 = sphi 0, %s147
      %s150 = sphi 0, %s149
      %s164 = sphi 0, %s150
      %s168 = sphi 0, %s168
      %s170 = sphi 0, %s168
      %s171 = sphi 0, %s170
      %s185 = sphi 0, %s171
      %s189 = sphi 0, %s189
      %s191 = sphi 0, %s189
      %s192 = sphi 0, %s191
      %s206 = sphi 0, %s192
      %s210 = sphi 0, %s210
      %s212 = sphi 0, %s210
      %s213 = sphi 0, %s212
      %s227 = sphi 0, %s213
      %s231 = sphi 0, %s231
      %s233 = sphi 0, %s231
      %s234 = sphi 0, %s233
      %s248 = sphi 0, %s234
      %s252 = sphi 0, %s252
      %s254 = sphi 0, %s252
      %s255 = sphi 0, %s254
      %s269 = sphi 0, %s255
      %s273 = sphi 0, %s273
      %s275 = sphi 0, %s273
      %s276 = sphi 0, %s275
      %s290 = sphi 0, %s276
      %s294 = sphi 0, %s294
      %s296 = sphi 0, %s294
      %s297 = sphi 0, %s296
      %s311 = sphi 0, %s297
      %s315 = sphi 0, %s315
      %s317 = sphi 0, %s315
      %s318 = sphi 0, %s317
      %s332 = sphi 0, %s318
      %s336 = sphi 0, %s336
      %s338 = sphi 0, %s336
      %s339 = sphi 0, %s338
      %s353 = sphi 0, %s339
      %s357 = sphi 0, %s357
      %s359 = sphi 0, %s357
      %s360 = sphi 0, %s359
      %s374 = sphi 0, %s360
      %s378 = sphi 0, %s378
      %s380 = sphi 0, %s378
      %s381 = sphi 0, %s380
      %s395 = sphi 0, %s381
      %s399 = sphi 0, %s399
      %s401 = sphi 0, %s399
      %s402 = sphi 0, %s401
      %s416 = sphi 0, %s402
      %s422 = sphi 0, %s424
      %s425 = sphi 0, %s422
      %s426 = sphi 0, %s425
      %s442 = sphi 0, %s426
    $region4: #{my_model_forward.1} parent=1 // loop_header_branch
      %27 = sbr.rel (%p25) target = $region8
    $region5: #{my_model_forward.1} parent=1 // loop_body
      %s29 = ssub.s32 %s24, 1
      %s30 = ssub.s32 %s24, 2
      %s31 = sadd.s32 %s24, 1
      %s32 = ssub.s32 %s24, %s31
      %p33 = scmp.eq.s32.totalorder %s32, 0
      %s35 = sadd.s32 %s34, 1
      %s36 = scalar_select %p33, %s34, %s35
      %p39 = pneg %p33
      %p40 = scmp.eq.s32.totalorder %s24, 1
      %p41 = por %p39, %p40
      %p42 = scmp.ne.s32.totalorder %s34, %s37
      %p43 = scmp.eq.s32.totalorder %s24, 0
      %p44 = por %p42, %p43
      %p45 = scmp.ne.s32.totalorder %s34, %s37
      %p46 = scmp.eq.s32.totalorder %s29, 1
      %p47 = por %p45, %p46
      %p48 = scmp.ne.s32.totalorder %s37, %s38
      %p49 = scmp.eq.s32.totalorder %s29, 0
      %p50 = por %p48, %p49
      %p51 = scmp.ne.s32.totalorder %s37, %s38
      %p52 = scmp.eq.s32.totalorder %s30, 1
      %p53 = por %p51, %p52
      %p55 = scmp.ne.s32.totalorder %s38, %s54
      %p56 = scmp.eq.s32.totalorder %s30, 0
      %p57 = por %p55, %p56
      %s58 = ssub.s32 %s24, %s31
      %p59 = scmp.eq.s32.totalorder %s58, 0
      %s61 = sadd.s32 %s60, 1
      %s62 = scalar_select %p59, %s60, %s61
      %p65 = pneg %p59
      %p66 = scmp.eq.s32.totalorder %s24, 1
      %p67 = por %p65, %p66
      %p68 = scmp.ne.s32.totalorder %s60, %s63
      %p69 = scmp.eq.s32.totalorder %s24, 0
      %p70 = por %p68, %p69
      %p71 = scmp.ne.s32.totalorder %s60, %s63
      %p72 = scmp.eq.s32.totalorder %s29, 1
      %p73 = por %p71, %p72
      %p74 = scmp.ne.s32.totalorder %s63, %s64
      %p75 = scmp.eq.s32.totalorder %s29, 0
      %p76 = por %p74, %p75
      %p77 = scmp.ne.s32.totalorder %s63, %s64
      %p78 = scmp.eq.s32.totalorder %s30, 1
      %p79 = por %p77, %p78
      %p81 = scmp.ne.s32.totalorder %s64, %s80
      %p82 = scmp.eq.s32.totalorder %s30, 0
      %p83 = por %p81, %p82
      %s85 = sadd.s32 %s84, 1
      %p88 = scmp.eq.s32.totalorder %s24, 1
      %p89 = scmp.ne.s32.totalorder %s84, %s86
      %p90 = scmp.eq.s32.totalorder %s24, 0
      %p91 = por %p89, %p90
      %p92 = scmp.ne.s32.totalorder %s84, %s86
      %p93 = scmp.eq.s32.totalorder %s29, 1
      %p94 = por %p92, %p93
      %p95 = scmp.ne.s32.totalorder %s86, %s87
      %p96 = scmp.eq.s32.totalorder %s29, 0
      %p97 = por %p95, %p96
      %p98 = scmp.ne.s32.totalorder %s86, %s87
      %p99 = scmp.eq.s32.totalorder %s30, 1
      %p100 = por %p98, %p99
      %p102 = scmp.ne.s32.totalorder %s87, %s101
      %p103 = scmp.eq.s32.totalorder %s30, 0
      %p104 = por %p102, %p103
      %s106 = sadd.s32 %s105, 1
      %p109 = scmp.eq.s32.totalorder %s24, 1
      %p110 = scmp.ne.s32.totalorder %s105, %s107
      %p111 = scmp.eq.s32.totalorder %s24, 0
      %p112 = por %p110, %p111
      %p113 = scmp.ne.s32.totalorder %s105, %s107
      %p114 = scmp.eq.s32.totalorder %s29, 1
      %p115 = por %p113, %p114
      %p116 = scmp.ne.s32.totalorder %s107, %s108
      %p117 = scmp.eq.s32.totalorder %s29, 0
      %p118 = por %p116, %p117
      %p119 = scmp.ne.s32.totalorder %s107, %s108
      %p120 = scmp.eq.s32.totalorder %s30, 1
      %p121 = por %p119, %p120
      %p123 = scmp.ne.s32.totalorder %s108, %s122
      %p124 = scmp.eq.s32.totalorder %s30, 0
      %p125 = por %p123, %p124
      %s127 = sadd.s32 %s126, 1
      %p130 = scmp.eq.s32.totalorder %s24, 1
      %p131 = scmp.ne.s32.totalorder %s126, %s128
      %p132 = scmp.eq.s32.totalorder %s24, 0
      %p133 = por %p131, %p132
      %p134 = scmp.ne.s32.totalorder %s126, %s128
      %p135 = scmp.eq.s32.totalorder %s29, 1
      %p136 = por %p134, %p135
      %p137 = scmp.ne.s32.totalorder %s128, %s129
      %p138 = scmp.eq.s32.totalorder %s29, 0
      %p139 = por %p137, %p138
      %p140 = scmp.ne.s32.totalorder %s128, %s129
      %p141 = scmp.eq.s32.totalorder %s30, 1
      %p142 = por %p140, %p141
      %p144 = scmp.ne.s32.totalorder %s129, %s143
      %p145 = scmp.eq.s32.totalorder %s30, 0
      %p146 = por %p144, %p145
      %s148 = sadd.s32 %s147, 1
      %p151 = scmp.eq.s32.totalorder %s24, 1
      %p152 = scmp.ne.s32.totalorder %s147, %s149
      %p153 = scmp.eq.s32.totalorder %s24, 0
      %p154 = por %p152, %p153
      %p155 = scmp.ne.s32.totalorder %s147, %s149
      %p156 = scmp.eq.s32.totalorder %s29, 1
      %p157 = por %p155, %p156
      %p158 = scmp.ne.s32.totalorder %s149, %s150
      %p159 = scmp.eq.s32.totalorder %s29, 0
      %p160 = por %p158, %p159
      %p161 = scmp.ne.s32.totalorder %s149, %s150
      %p162 = scmp.eq.s32.totalorder %s30, 1
      %p163 = por %p161, %p162
      %p165 = scmp.ne.s32.totalorder %s150, %s164
      %p166 = scmp.eq.s32.totalorder %s30, 0
      %p167 = por %p165, %p166
      %s169 = sadd.s32 %s168, 1
      %p172 = scmp.eq.s32.totalorder %s24, 1
      %p173 = scmp.ne.s32.totalorder %s168, %s170
      %p174 = scmp.eq.s32.totalorder %s24, 0
      %p175 = por %p173, %p174
      %p176 = scmp.ne.s32.totalorder %s168, %s170
      %p177 = scmp.eq.s32.totalorder %s29, 1
      %p178 = por %p176, %p177
      %p179 = scmp.ne.s32.totalorder %s170, %s171
      %p180 = scmp.eq.s32.totalorder %s29, 0
      %p181 = por %p179, %p180
      %p182 = scmp.ne.s32.totalorder %s170, %s171
      %p183 = scmp.eq.s32.totalorder %s30, 1
      %p184 = por %p182, %p183
      %p186 = scmp.ne.s32.totalorder %s171, %s185
      %p187 = scmp.eq.s32.totalorder %s30, 0
      %p188 = por %p186, %p187
      %s190 = sadd.s32 %s189, 1
      %p193 = scmp.eq.s32.totalorder %s24, 1
      %p194 = scmp.ne.s32.totalorder %s189, %s191
      %p195 = scmp.eq.s32.totalorder %s24, 0
      %p196 = por %p194, %p195
      %p197 = scmp.ne.s32.totalorder %s189, %s191
      %p198 = scmp.eq.s32.totalorder %s29, 1
      %p199 = por %p197, %p198
      %p200 = scmp.ne.s32.totalorder %s191, %s192
      %p201 = scmp.eq.s32.totalorder %s29, 0
      %p202 = por %p200, %p201
      %p203 = scmp.ne.s32.totalorder %s191, %s192
      %p204 = scmp.eq.s32.totalorder %s30, 1
      %p205 = por %p203, %p204
      %p207 = scmp.ne.s32.totalorder %s192, %s206
      %p208 = scmp.eq.s32.totalorder %s30, 0
      %p209 = por %p207, %p208
      %s211 = sadd.s32 %s210, 1
      %p214 = scmp.eq.s32.totalorder %s24, 1
      %p215 = scmp.ne.s32.totalorder %s210, %s212
      %p216 = scmp.eq.s32.totalorder %s24, 0
      %p217 = por %p215, %p216
      %p218 = scmp.ne.s32.totalorder %s210, %s212
      %p219 = scmp.eq.s32.totalorder %s29, 1
      %p220 = por %p218, %p219
      %p221 = scmp.ne.s32.totalorder %s212, %s213
      %p222 = scmp.eq.s32.totalorder %s29, 0
      %p223 = por %p221, %p222
      %p224 = scmp.ne.s32.totalorder %s212, %s213
      %p225 = scmp.eq.s32.totalorder %s30, 1
      %p226 = por %p224, %p225
      %p228 = scmp.ne.s32.totalorder %s213, %s227
      %p229 = scmp.eq.s32.totalorder %s30, 0
      %p230 = por %p228, %p229
      %s232 = sadd.s32 %s231, 1
      %p235 = scmp.eq.s32.totalorder %s24, 1
      %p236 = scmp.ne.s32.totalorder %s231, %s233
      %p237 = scmp.eq.s32.totalorder %s24, 0
      %p238 = por %p236, %p237
      %p239 = scmp.ne.s32.totalorder %s231, %s233
      %p240 = scmp.eq.s32.totalorder %s29, 1
      %p241 = por %p239, %p240
      %p242 = scmp.ne.s32.totalorder %s233, %s234
      %p243 = scmp.eq.s32.totalorder %s29, 0
      %p244 = por %p242, %p243
      %p245 = scmp.ne.s32.totalorder %s233, %s234
      %p246 = scmp.eq.s32.totalorder %s30, 1
      %p247 = por %p245, %p246
      %p249 = scmp.ne.s32.totalorder %s234, %s248
      %p250 = scmp.eq.s32.totalorder %s30, 0
      %p251 = por %p249, %p250
      %s253 = sadd.s32 %s252, 1
      %p256 = scmp.eq.s32.totalorder %s24, 1
      %p257 = scmp.ne.s32.totalorder %s252, %s254
      %p258 = scmp.eq.s32.totalorder %s24, 0
      %p259 = por %p257, %p258
      %p260 = scmp.ne.s32.totalorder %s252, %s254
      %p261 = scmp.eq.s32.totalorder %s29, 1
      %p262 = por %p260, %p261
      %p263 = scmp.ne.s32.totalorder %s254, %s255
      %p264 = scmp.eq.s32.totalorder %s29, 0
      %p265 = por %p263, %p264
      %p266 = scmp.ne.s32.totalorder %s254, %s255
      %p267 = scmp.eq.s32.totalorder %s30, 1
      %p268 = por %p266, %p267
      %p270 = scmp.ne.s32.totalorder %s255, %s269
      %p271 = scmp.eq.s32.totalorder %s30, 0
      %p272 = por %p270, %p271
      %s274 = sadd.s32 %s273, 1
      %p277 = scmp.eq.s32.totalorder %s24, 1
      %p278 = scmp.ne.s32.totalorder %s273, %s275
      %p279 = scmp.eq.s32.totalorder %s24, 0
      %p280 = por %p278, %p279
      %p281 = scmp.ne.s32.totalorder %s273, %s275
      %p282 = scmp.eq.s32.totalorder %s29, 1
      %p283 = por %p281, %p282
      %p284 = scmp.ne.s32.totalorder %s275, %s276
      %p285 = scmp.eq.s32.totalorder %s29, 0
      %p286 = por %p284, %p285
      %p287 = scmp.ne.s32.totalorder %s275, %s276
      %p288 = scmp.eq.s32.totalorder %s30, 1
      %p289 = por %p287, %p288
      %p291 = scmp.ne.s32.totalorder %s276, %s290
      %p292 = scmp.eq.s32.totalorder %s30, 0
      %p293 = por %p291, %p292
      %s295 = sadd.s32 %s294, 1
      %p298 = scmp.eq.s32.totalorder %s24, 1
      %p299 = scmp.ne.s32.totalorder %s294, %s296
      %p300 = scmp.eq.s32.totalorder %s24, 0
      %p301 = por %p299, %p300
      %p302 = scmp.ne.s32.totalorder %s294, %s296
      %p303 = scmp.eq.s32.totalorder %s29, 1
      %p304 = por %p302, %p303
      %p305 = scmp.ne.s32.totalorder %s296, %s297
      %p306 = scmp.eq.s32.totalorder %s29, 0
      %p307 = por %p305, %p306
      %p308 = scmp.ne.s32.totalorder %s296, %s297
      %p309 = scmp.eq.s32.totalorder %s30, 1
      %p310 = por %p308, %p309
      %p312 = scmp.ne.s32.totalorder %s297, %s311
      %p313 = scmp.eq.s32.totalorder %s30, 0
      %p314 = por %p312, %p313
      %s316 = sadd.s32 %s315, 1
      %p319 = scmp.eq.s32.totalorder %s24, 1
      %p320 = scmp.ne.s32.totalorder %s315, %s317
      %p321 = scmp.eq.s32.totalorder %s24, 0
      %p322 = por %p320, %p321
      %p323 = scmp.ne.s32.totalorder %s315, %s317
      %p324 = scmp.eq.s32.totalorder %s29, 1
      %p325 = por %p323, %p324
      %p326 = scmp.ne.s32.totalorder %s317, %s318
      %p327 = scmp.eq.s32.totalorder %s29, 0
      %p328 = por %p326, %p327
      %p329 = scmp.ne.s32.totalorder %s317, %s318
      %p330 = scmp.eq.s32.totalorder %s30, 1
      %p331 = por %p329, %p330
      %p333 = scmp.ne.s32.totalorder %s318, %s332
      %p334 = scmp.eq.s32.totalorder %s30, 0
      %p335 = por %p333, %p334
      %s337 = sadd.s32 %s336, 1
      %p340 = scmp.eq.s32.totalorder %s24, 1
      %p341 = scmp.ne.s32.totalorder %s336, %s338
      %p342 = scmp.eq.s32.totalorder %s24, 0
      %p343 = por %p341, %p342
      %p344 = scmp.ne.s32.totalorder %s336, %s338
      %p345 = scmp.eq.s32.totalorder %s29, 1
      %p346 = por %p344, %p345
      %p347 = scmp.ne.s32.totalorder %s338, %s339
      %p348 = scmp.eq.s32.totalorder %s29, 0
      %p349 = por %p347, %p348
      %p350 = scmp.ne.s32.totalorder %s338, %s339
      %p351 = scmp.eq.s32.totalorder %s30, 1
      %p352 = por %p350, %p351
      %p354 = scmp.ne.s32.totalorder %s339, %s353
      %p355 = scmp.eq.s32.totalorder %s30, 0
      %p356 = por %p354, %p355
      %s358 = sadd.s32 %s357, 1
      %p361 = scmp.eq.s32.totalorder %s24, 1
      %p362 = scmp.ne.s32.totalorder %s357, %s359
      %p363 = scmp.eq.s32.totalorder %s24, 0
      %p364 = por %p362, %p363
      %p365 = scmp.ne.s32.totalorder %s357, %s359
      %p366 = scmp.eq.s32.totalorder %s29, 1
      %p367 = por %p365, %p366
      %p368 = scmp.ne.s32.totalorder %s359, %s360
      %p369 = scmp.eq.s32.totalorder %s29, 0
      %p370 = por %p368, %p369
      %p371 = scmp.ne.s32.totalorder %s359, %s360
      %p372 = scmp.eq.s32.totalorder %s30, 1
      %p373 = por %p371, %p372
      %p375 = scmp.ne.s32.totalorder %s360, %s374
      %p376 = scmp.eq.s32.totalorder %s30, 0
      %p377 = por %p375, %p376
      %s379 = sadd.s32 %s378, 1
      %p382 = scmp.eq.s32.totalorder %s24, 1
      %p383 = scmp.ne.s32.totalorder %s378, %s380
      %p384 = scmp.eq.s32.totalorder %s24, 0
      %p385 = por %p383, %p384
      %p386 = scmp.ne.s32.totalorder %s378, %s380
      %p387 = scmp.eq.s32.totalorder %s29, 1
      %p388 = por %p386, %p387
      %p389 = scmp.ne.s32.totalorder %s380, %s381
      %p390 = scmp.eq.s32.totalorder %s29, 0
      %p391 = por %p389, %p390
      %p392 = scmp.ne.s32.totalorder %s380, %s381
      %p393 = scmp.eq.s32.totalorder %s30, 1
      %p394 = por %p392, %p393
      %p396 = scmp.ne.s32.totalorder %s381, %s395
      %p397 = scmp.eq.s32.totalorder %s30, 0
      %p398 = por %p396, %p397
      %s400 = sadd.s32 %s399, 1
      %p403 = scmp.eq.s32.totalorder %s24, 1
      %p404 = scmp.ne.s32.totalorder %s399, %s401
      %p405 = scmp.eq.s32.totalorder %s24, 0
      %p406 = por %p404, %p405
      %p407 = scmp.ne.s32.totalorder %s399, %s401
      %p408 = scmp.eq.s32.totalorder %s29, 1
      %p409 = por %p407, %p408
      %p410 = scmp.ne.s32.totalorder %s401, %s402
      %p411 = scmp.eq.s32.totalorder %s29, 0
      %p412 = por %p410, %p411
      %p413 = scmp.ne.s32.totalorder %s401, %s402
      %p414 = scmp.eq.s32.totalorder %s30, 1
      %p415 = por %p413, %p414
      %p417 = scmp.ne.s32.totalorder %s402, %s416
      %p418 = scmp.eq.s32.totalorder %s30, 0
      %p419 = por %p417, %p418
      %s420 = ssub.s32 %s24, %s31
      %p421 = scmp.eq.s32.totalorder %s420, 0
      %s423 = sadd.s32 %s422, 1
      %s424 = scalar_select %p421, %s422, %s423
      %p427 = pneg %p421
      %p428 = scmp.eq.s32.totalorder %s24, 1
      %p429 = por %p427, %p428
      %p430 = scmp.ne.s32.totalorder %s422, %s425
      %p431 = scmp.eq.s32.totalorder %s24, 0
      %p432 = por %p430, %p431
      %p433 = scmp.ne.s32.totalorder %s422, %s425
      %p434 = scmp.eq.s32.totalorder %s29, 1
      %p435 = por %p433, %p434
      %p436 = scmp.ne.s32.totalorder %s425, %s426
      %p437 = scmp.eq.s32.totalorder %s29, 0
      %p438 = por %p436, %p437
      %p439 = scmp.ne.s32.totalorder %s425, %s426
      %p440 = scmp.eq.s32.totalorder %s30, 1
      %p441 = por %p439, %p440
      %p443 = scmp.ne.s32.totalorder %s426, %s442
      %p444 = scmp.eq.s32.totalorder %s30, 0
      %p445 = por %p443, %p444
      %p446 = scmp.le.s32.totalorder 1, %s24
      %p447 = scmp.lt.s32.totalorder %s24, 3
      %p448 = pnand %p446, %p447
      %p449 = pneg %p448
      // Predicated region
      $region9: #{my_model_forward.1} parent=5 // pred_check
        _
      $region10: #{my_model_forward.1} parent=5 // pred_check_branch
        %451 = sbr.rel (%p448) target = $region12
      $region11: #{my_model_forward.1} parent=5 // pred_region
        %s452 = ssub.s32 %s24, 1
        // Predicated region
        $region13: #{my_model_forward.1} parent=11 // pred_check
          %p453 = pneg %p97
        $region14: #{my_model_forward.1} parent=11 // pred_check_branch
          %455 = sbr.rel (%p453) target = $region16
        $region15: #{my_model_forward.1} parent=11 // pred_region
          _
        $region16: #{my_model_forward.1} parent=11 // pred_fallthru
          _
        // Predicated region
        $region17: #{my_model_forward.1} parent=11 // pred_check
          %p456 = pneg %p118
        $region18: #{my_model_forward.1} parent=11 // pred_check_branch
          %458 = sbr.rel (%p456) target = $region20
        $region19: #{my_model_forward.1} parent=11 // pred_region
          _
        $region20: #{my_model_forward.1} parent=11 // pred_fallthru
          _
        // Predicated region
        $region21: #{my_model_forward.1} parent=11 // pred_check
          %p459 = pneg %p139
        $region22: #{my_model_forward.1} parent=11 // pred_check_branch
          %461 = sbr.rel (%p459) target = $region24
        $region23: #{my_model_forward.1} parent=11 // pred_region
          _
        $region24: #{my_model_forward.1} parent=11 // pred_fallthru
          _
        // Predicated region
        $region25: #{my_model_forward.1} parent=11 // pred_check
          %p462 = pneg %p160
        $region26: #{my_model_forward.1} parent=11 // pred_check_branch
          %464 = sbr.rel (%p462) target = $region28
        $region27: #{my_model_forward.1} parent=11 // pred_region
          _
        $region28: #{my_model_forward.1} parent=11 // pred_fallthru
          _
        // Predicated region
        $region29: #{my_model_forward.1} parent=11 // pred_check
          %p465 = pneg %p181
        $region30: #{my_model_forward.1} parent=11 // pred_check_branch
          %467 = sbr.rel (%p465) target = $region32
        $region31: #{my_model_forward.1} parent=11 // pred_region
          _
        $region32: #{my_model_forward.1} parent=11 // pred_fallthru
          _
        // Predicated region
        $region33: #{my_model_forward.1} parent=11 // pred_check
          %p468 = pneg %p202
        $region34: #{my_model_forward.1} parent=11 // pred_check_branch
          %470 = sbr.rel (%p468) target = $region36
        $region35: #{my_model_forward.1} parent=11 // pred_region
          _
        $region36: #{my_model_forward.1} parent=11 // pred_fallthru
          _
        // Predicated region
        $region37: #{my_model_forward.1} parent=11 // pred_check
          %p471 = pneg %p223
        $region38: #{my_model_forward.1} parent=11 // pred_check_branch
          %473 = sbr.rel (%p471) target = $region40
        $region39: #{my_model_forward.1} parent=11 // pred_region
          _
        $region40: #{my_model_forward.1} parent=11 // pred_fallthru
          _
        // Predicated region
        $region41: #{my_model_forward.1} parent=11 // pred_check
          %p474 = pneg %p244
        $region42: #{my_model_forward.1} parent=11 // pred_check_branch
          %476 = sbr.rel (%p474) target = $region44
        $region43: #{my_model_forward.1} parent=11 // pred_region
          _
        $region44: #{my_model_forward.1} parent=11 // pred_fallthru
          _
        // Predicated region
        $region45: #{my_model_forward.1} parent=11 // pred_check
          %p477 = pneg %p265
        $region46: #{my_model_forward.1} parent=11 // pred_check_branch
          %479 = sbr.rel (%p477) target = $region48
        $region47: #{my_model_forward.1} parent=11 // pred_region
          _
        $region48: #{my_model_forward.1} parent=11 // pred_fallthru
          _
        // Predicated region
        $region49: #{my_model_forward.1} parent=11 // pred_check
          %p480 = pneg %p286
        $region50: #{my_model_forward.1} parent=11 // pred_check_branch
          %482 = sbr.rel (%p480) target = $region52
        $region51: #{my_model_forward.1} parent=11 // pred_region
          _
        $region52: #{my_model_forward.1} parent=11 // pred_fallthru
          _
        // Predicated region
        $region53: #{my_model_forward.1} parent=11 // pred_check
          %p483 = pneg %p307
        $region54: #{my_model_forward.1} parent=11 // pred_check_branch
          %485 = sbr.rel (%p483) target = $region56
        $region55: #{my_model_forward.1} parent=11 // pred_region
          _
        $region56: #{my_model_forward.1} parent=11 // pred_fallthru
          _
        // Predicated region
        $region57: #{my_model_forward.1} parent=11 // pred_check
          %p486 = pneg %p328
        $region58: #{my_model_forward.1} parent=11 // pred_check_branch
          %488 = sbr.rel (%p486) target = $region60
        $region59: #{my_model_forward.1} parent=11 // pred_region
          _
        $region60: #{my_model_forward.1} parent=11 // pred_fallthru
          _
        // Predicated region
        $region61: #{my_model_forward.1} parent=11 // pred_check
          %p489 = pneg %p349
        $region62: #{my_model_forward.1} parent=11 // pred_check_branch
          %491 = sbr.rel (%p489) target = $region64
        $region63: #{my_model_forward.1} parent=11 // pred_region
          _
        $region64: #{my_model_forward.1} parent=11 // pred_fallthru
          _
        // Predicated region
        $region65: #{my_model_forward.1} parent=11 // pred_check
          %p492 = pneg %p370
        $region66: #{my_model_forward.1} parent=11 // pred_check_branch
          %494 = sbr.rel (%p492) target = $region68
        $region67: #{my_model_forward.1} parent=11 // pred_region
          _
        $region68: #{my_model_forward.1} parent=11 // pred_fallthru
          _
        // Predicated region
        $region69: #{my_model_forward.1} parent=11 // pred_check
          %p495 = pneg %p391
        $region70: #{my_model_forward.1} parent=11 // pred_check_branch
          %497 = sbr.rel (%p495) target = $region72
        $region71: #{my_model_forward.1} parent=11 // pred_region
          _
        $region72: #{my_model_forward.1} parent=11 // pred_fallthru
          _
        // Predicated region
        $region73: #{my_model_forward.1} parent=11 // pred_check
          %p498 = pneg %p412
        $region74: #{my_model_forward.1} parent=11 // pred_check_branch
          %500 = sbr.rel (%p498) target = $region76
        $region75: #{my_model_forward.1} parent=11 // pred_region
          _
        $region76: #{my_model_forward.1} parent=11 // pred_fallthru
          _
      $region12: #{my_model_forward.1} parent=5 // pred_fallthru
        _
      %p501 = scmp.lt.s32.totalorder %s24, 2
      // Predicated region
      $region77: #{my_model_forward.1} parent=5 // pred_check
        %p502 = pneg %p501
      $region78: #{my_model_forward.1} parent=5 // pred_check_branch
        %504 = sbr.rel (%p502) target = $region80
      $region79: #{my_model_forward.1} parent=5 // pred_region
        // Predicated region
        $region81: #{my_model_forward.1} parent=79 // pred_check
          %p505 = pneg %p44
        $region82: #{my_model_forward.1} parent=79 // pred_check_branch
          %507 = sbr.rel (%p505) target = $region84
        $region83: #{my_model_forward.1} parent=79 // pred_region
          %p508 = scmp.lt.s32.totalorder %s24, 1
          %s509 = scalar_select %p508, %s24, 1
          %s510 = smul.addr %s509, 2
          %s511 = smul.addr %s510, 8
          %s512 = scalar_lea.vmem %s0, %s511
        $region84: #{my_model_forward.1} parent=79 // pred_fallthru
          _
        // Predicated region
        $region85: #{my_model_forward.1} parent=79 // pred_check
          %p513 = pneg %p70
        $region86: #{my_model_forward.1} parent=79 // pred_check_branch
          %515 = sbr.rel (%p513) target = $region88
        $region87: #{my_model_forward.1} parent=79 // pred_region
          %s516 = sand.u32 %s60, 1
          %s517 = sand.u32 %s60, 1
          %s518 = smul.addr %s517, 16
          %s519 = scalar_lea.vmem [#allocation2], %s518
          %s520 = smul.addr %s24, 8
          %s521 = scalar_lea.vmem %s1, %s520
          // Predicated region
          $region89: #{my_model_forward.1} parent=87 // pred_check
            _
          $region90: #{my_model_forward.1} parent=87 // pred_check_branch
            %523 = sbr.rel (0) target = $region92
          $region91: #{my_model_forward.1} parent=87 // pred_region
            // Predicated region
            $region93: #{my_model_forward.1} parent=91 // pred_check
              _
            $region94: #{my_model_forward.1} parent=91 // pred_check_branch
              %525 = sbr.rel (0) target = $region96
            $region95: #{my_model_forward.1} parent=91 // pred_region
              // Predicated region
              $region108: #{my_model_forward.1} parent=95 // pred_check
                _
              $region109: #{my_model_forward.1} parent=95 // pred_check_branch
                %543 = sbr.rel (0) target = $region111
              $region110: #{my_model_forward.1} parent=95 // pred_region
                loop: start=0, step=1, limit=1
                $region112: #{my_model_forward.1} parent=110 // loop_pre_header
                  _
                $region113: #{my_model_forward.1} parent=110 // loop_header
                  %s545 = sphi 0, %s549
                  %p546 = scmp.ge.s32.totalorder %s545, 1
                  %s550 = sphi %s521, %s521
                  %s551 = sphi %s519, %s519
                $region114: #{my_model_forward.1} parent=110 // loop_header_branch
                  %548 = sbr.rel (%p546) target = $region118
                $region115: #{my_model_forward.1} parent=110 // loop_body
                  %v552 = vld [vmem:[%s550] sm:$0xff]
                  %553 = vst [vmem:[%s551] sm:$0xff] %v552
                  %v554 = vld [vmem:[%s550 + $0x10] sm:$0xff]
                  %555 = vst [vmem:[%s551 + $0x8] sm:$0xff] %v554
                $region116: #{my_model_forward.1} parent=110 // loop_footer
                  %s549 = sadd.s32 1, %s545
                $region117: #{my_model_forward.1} parent=110 // loop_footer_branch
                  %544 = sbr.rel target = $region113
                $region118: #{my_model_forward.1} parent=110 // loop_exit
                  _
              $region111: #{my_model_forward.1} parent=95 // pred_fallthru
                _
              // Predicated region
              $region119: #{my_model_forward.1} parent=95 // pred_check
                _
              $region120: #{my_model_forward.1} parent=95 // pred_check_branch
                %557 = sbr.rel target = $region122
              $region121: #{my_model_forward.1} parent=95 // pred_region
                _
              $region122: #{my_model_forward.1} parent=95 // pred_fallthru
                _
            $region96: #{my_model_forward.1} parent=91 // pred_fallthru
              _
            // Predicated region
            $region97: #{my_model_forward.1} parent=91 // pred_check
              _
            $region98: #{my_model_forward.1} parent=91 // pred_check_branch
              %527 = sbr.rel target = $region100
            $region99: #{my_model_forward.1} parent=91 // pred_region
              %s529 = ssub.s32 256, 1
              loop: start=0, step=1, limit=1
              $region101: #{my_model_forward.1} parent=99 // loop_pre_header
                _
              $region102: #{my_model_forward.1} parent=99 // loop_header
                %s531 = sphi 0, %s535
                %p532 = scmp.ge.s32.totalorder %s531, 1
                %s536 = sphi %s521, %s521
                %s537 = sphi %s519, %s519
              $region103: #{my_model_forward.1} parent=99 // loop_header_branch
                %534 = sbr.rel (%p532) target = $region107
              $region104: #{my_model_forward.1} parent=99 // loop_body
                %v538 = vld [vmem:[%s536] sm:%s529]
                %539 = vst [vmem:[%s537] sm:%s529] %v538
                %v540 = vld [vmem:[%s536 + $0x10] sm:%s529]
                %541 = vst [vmem:[%s537 + $0x8] sm:%s529] %v540
              $region105: #{my_model_forward.1} parent=99 // loop_footer
                %s535 = sadd.s32 1, %s531
              $region106: #{my_model_forward.1} parent=99 // loop_footer_branch
                %530 = sbr.rel target = $region102
              $region107: #{my_model_forward.1} parent=99 // loop_exit
                _
            $region100: #{my_model_forward.1} parent=91 // pred_fallthru
              _
          $region92: #{my_model_forward.1} parent=87 // pred_fallthru
            _
          %558 = vnop
        $region88: #{my_model_forward.1} parent=79 // pred_fallthru
          _
      $region80: #{my_model_forward.1} parent=5 // pred_fallthru
        _
      %p559 = scmp.le.s32.totalorder 1, %s24
      %p560 = scmp.lt.s32.totalorder %s24, 3
      %p561 = pnand %p559, %p560
      %p562 = pneg %p561
      // Predicated region
      $region123: #{my_model_forward.1} parent=5 // pred_check
        _
      $region124: #{my_model_forward.1} parent=5 // pred_check_branch
        %564 = sbr.rel (%p561) target = $region126
      $region125: #{my_model_forward.1} parent=5 // pred_region
        %s565 = ssub.s32 %s24, 1
        %s566 = sand.u32 %s63, 1
        %s567 = sand.u32 %s63, 1
        %s568 = smul.addr %s567, 16
        %s569 = scalar_lea.vmem [#allocation2], %s568
        // Predicated region
        $region127: #{my_model_forward.1} parent=125 // pred_check
          %p570 = pneg %p76
        $region128: #{my_model_forward.1} parent=125 // pred_check_branch
          %572 = sbr.rel (%p570) target = $region130
        $region129: #{my_model_forward.1} parent=125 // pred_region
          _
        $region130: #{my_model_forward.1} parent=125 // pred_fallthru
          _
        %p573 = scmp.lt.s32.totalorder %s29, 1
        %s574 = scalar_select %p573, %s29, 1
        %s575 = smul.addr %s574, 2
        %s576 = smul.addr %s575, 8
        %s577 = scalar_lea.vmem %s0, %s576
        %p578 = pneg %p50
        %p579 = pneg %p47
        %s580 = sand.u32 %s63, 1
        %s581 = sand.u32 %s63, 1
        %s582 = smul.addr %s581, 16
        %s583 = scalar_lea.vmem [#allocation2], %s582
        %p584 = pneg %p76
        %p585 = pneg %p73
        %p586 = pneg %p97
        %p587 = pneg %p94
        %p588 = pneg %p118
        %p589 = pneg %p115
        %p590 = pneg %p139
        %p591 = pneg %p136
        %p592 = pneg %p160
        %p593 = pneg %p157
        %p594 = pneg %p181
        %p595 = pneg %p178
        %p596 = pneg %p202
        %p597 = pneg %p199
        %p598 = pneg %p223
        %p599 = pneg %p220
        %p600 = pneg %p244
        %p601 = pneg %p241
        %p602 = pneg %p265
        %p603 = pneg %p262
        %p604 = pneg %p286
        %p605 = pneg %p283
        %p606 = pneg %p307
        %p607 = pneg %p304
        %p608 = pneg %p328
        %p609 = pneg %p325
        %p610 = pneg %p349
        %p611 = pneg %p346
        %p612 = pneg %p370
        %p613 = pneg %p367
        %p614 = pneg %p391
        %p615 = pneg %p388
        %p616 = pneg %p412
        %p617 = pneg %p409
        %p618 = pneg %p438
        %p619 = pneg %p435
        %p620 = scmp.lt.s32.totalorder %s29, 1
        %s621 = scalar_select %p620, %s29, 1
        %s622 = smul.addr %s621, 8
        %s623 = scalar_lea.vmem %s18, %s622
        %p624 = scmp.lt.s32.totalorder %s29, 1
        %s625 = scalar_select %p624, %s29, 1
        %s626 = smul.addr %s625, 2
        %s627 = smul.addr %s626, 8
        %s628 = scalar_lea.vmem %s0, %s627
        %p629 = scmp.lt.s32.totalorder %s29, 1
        %s630 = scalar_select %p629, %s29, 1
        %s631 = smul.addr %s630, 8
        %s632 = scalar_lea.vmem %s18, %s631
        %v634 = vld [vmem:[%s628] sm:$0xff]
        %v635 = vld [vmem:[%s628 + $0x8] sm:$0xff]
        %v636 = vpack.c.bf16 %v634, %v634
        %v637 = vpack.c.bf16 %v635, %v635
        %v638 = vld [vmem:[%s569] sm:$0xff]
        %v639 = vpack.c.bf16 %v638, %v638
        %v640 = vld [vmem:[%s2] sm:$0xff]
        %v641 = vld [vmem:[%s2 + $0x8] sm:$0xff]
        %v642 = vld [vmem:[%s2 + $0x10] sm:$0xff]
        %v643 = vld [vmem:[%s2 + $0x18] sm:$0xff]
        %v644 = vld [vmem:[%s2 + $0x20] sm:$0xff]
        %v645 = vld [vmem:[%s2 + $0x28] sm:$0xff]
        %v646 = vld [vmem:[%s2 + $0x30] sm:$0xff]
        %v647 = vld [vmem:[%s2 + $0x38] sm:$0xff]
        %v648 = vld [vmem:[%s2 + $0x40] sm:$0xff]
        %v649 = vld [vmem:[%s2 + $0x48] sm:$0xff]
        %v650 = vld [vmem:[%s2 + $0x50] sm:$0xff]
        %v651 = vld [vmem:[%s2 + $0x58] sm:$0xff]
        %v652 = vld [vmem:[%s2 + $0x60] sm:$0xff]
        %v653 = vld [vmem:[%s2 + $0x68] sm:$0xff]
        %v654 = vld [vmem:[%s2 + $0x70] sm:$0xff]
        %v655 = vld [vmem:[%s2 + $0x78] sm:$0xff]
        %v656 = vld [vmem:[%s3] sm:$0x3]
        %v658 = vperm.slane %v656, 0
        %v659 = vperm.slane %v656, 1
        %v678 = vunpack.c.l.b16 %v640
        %v679 = vunpack.c.h.b16 %v640
        %v680 = vunpack.c.l.b16 %v641
        %v681 = vunpack.c.h.b16 %v641
        %v682 = vunpack.c.l.b16 %v642
        %v683 = vunpack.c.h.b16 %v642
        %v684 = vunpack.c.l.b16 %v643
        %v685 = vunpack.c.h.b16 %v643
        %v686 = vunpack.c.l.b16 %v644
        %v687 = vunpack.c.h.b16 %v644
        %v688 = vunpack.c.l.b16 %v645
        %v689 = vunpack.c.h.b16 %v645
        %v690 = vunpack.c.l.b16 %v646
        %v691 = vunpack.c.h.b16 %v646
        %v692 = vunpack.c.l.b16 %v647
        %v693 = vunpack.c.h.b16 %v647
        %v694 = vunpack.c.l.b16 %v648
        %v695 = vunpack.c.h.b16 %v648
        %v696 = vunpack.c.l.b16 %v649
        %v697 = vunpack.c.h.b16 %v649
        %v698 = vunpack.c.l.b16 %v650
        %v699 = vunpack.c.h.b16 %v650
        %v700 = vunpack.c.l.b16 %v651
        %v701 = vunpack.c.h.b16 %v651
        %v702 = vunpack.c.l.b16 %v652
        %v703 = vunpack.c.h.b16 %v652
        %v704 = vunpack.c.l.b16 %v653
        %v705 = vunpack.c.h.b16 %v653
        %v706 = vunpack.c.l.b16 %v654
        %v707 = vunpack.c.h.b16 %v654
        %v708 = vunpack.c.l.b16 %v655
        %v709 = vunpack.c.h.b16 %v655
        %v710 = vpack.c.b16 %v680, %v678
        %v711 = vpack.c.b16 %v681, %v679
        %v712 = vpack.c.b16 %v684, %v682
        %v713 = vpack.c.b16 %v685, %v683
        %v714 = vpack.c.b16 %v688, %v686
        %v715 = vpack.c.b16 %v689, %v687
        %v716 = vpack.c.b16 %v692, %v690
        %v717 = vpack.c.b16 %v693, %v691
        %v718 = vpack.c.b16 %v696, %v694
        %v719 = vpack.c.b16 %v697, %v695
        %v720 = vpack.c.b16 %v700, %v698
        %v721 = vpack.c.b16 %v701, %v699
        %v722 = vpack.c.b16 %v704, %v702
        %v723 = vpack.c.b16 %v705, %v703
        %v724 = vpack.c.b16 %v708, %v706
        %v725 = vpack.c.b16 %v709, %v707
        %742 = vmatpush.bf16.msra.mxu0 %v724
        %743 = vmatpush.bf16.msra.mxu0 %v722
        %744 = vmatpush.bf16.msra.mxu0 %v720
        %745 = vmatpush.bf16.msra.mxu0 %v718
        %746 = vmatpush.bf16.msra.mxu0 %v716
        %747 = vmatpush.bf16.msra.mxu0 %v714
        %748 = vmatpush.bf16.msra.mxu0 %v712
        %749 = vmatpush.bf16.msra.mxu0 %v710
        %750 = vmatmul.bf16.gmra.mxu0 %v639
        %v751 = vpop.f32.mrf.mxu0
        %v752 = vadd.f32 %v658, %v751
        %v753 = vpop.f32.mrf.mxu0
        %754 = vdwg.mxu0
        %755 = vmatpush.bf16.msra.mxu0 %v725
        %756 = vmatpush.bf16.msra.mxu0 %v723
        %757 = vmatpush.bf16.msra.mxu0 %v721
        %758 = vmatpush.bf16.msra.mxu0 %v719
        %759 = vmatpush.bf16.msra.mxu0 %v717
        %760 = vmatpush.bf16.msra.mxu0 %v715
        %761 = vmatpush.bf16.msra.mxu0 %v713
        %762 = vmatpush.bf16.msra.mxu0 %v711
        %763 = vmatmul.bf16.gmra.mxu0 %v639
        %v764 = vpop.f32.mrf.mxu0
        %v765 = vadd.f32 %v659, %v764
        %v766 = vpop.f32.mrf.mxu0
        %767 = vdwg.mxu0
        %v768 = vld [vmem:[%s4] sm:$0x3]
        %v769 = vld [vmem:[%s5] sm:$0x3]
        %v770 = vadd.f32 %v752, %v765
        %771 = vadd.xlane.f32.xlu0 %v770
        %v772 = vpop.xlane.xlu0 %771
        %v773 = vrcp.pop 256.0
        %v774 = vmul.f32 256.0, %v773
        %v775 = vsub.f32 1.0, %v774
        %v776 = vmul.f32 %v773, %v775
        %v777 = vadd.f32 %v773, %v776
        %vm778 = vweird.f32 %v773
        %v779 = vsel %vm778, %v773, %v777
        %v780 = vmul.f32 %v772, %v779
        %v781 = vsub.f32 %v752, %v780
        %v782 = vsub.f32 %v765, %v780
        %v783 = vmul.f32 %v781, %v781
        %v784 = vmul.f32 %v782, %v782
        %v785 = vadd.f32 %v783, %v784
        %786 = vadd.xlane.f32.xlu0 %v785
        %v787 = vpop.xlane.xlu0 %786
        %v788 = vmul.f32 %v787, %v779
        %v789 = vadd.f32 %v788, 1e-05
        %v790 = vrsqrt.pop %v789
        %v791 = vmul.f32 %v790, %v789
        %v792 = vmul.f32 %v791, %v790
        %v793 = vmul.f32 0.5, %v792
        %v794 = vsub.f32 1.5, %v793
        %v795 = vmul.f32 %v790, %v794
        %vm796 = vweird.f32 %v789
        %vm797 = vweird.f32 %v790
        %vm798 = vmor %vm796, %vm797
        %v799 = vsel %vm798, %v790, %v795
        %v800 = vmul.f32 %v781, %v799
        %v801 = vmul.f32 %v782, %v799
        %v803 = vperm.slane %v768, 0
        %v804 = vperm.slane %v768, 1
        %v807 = vmul.f32 %v800, %v803
        %v808 = vmul.f32 %v801, %v804
        %v810 = vperm.slane %v769, 0
        %v811 = vperm.slane %v769, 1
        %v814 = vadd.f32 %v807, %v810
        %v815 = vadd.f32 %v808, %v811
        %v816 = vmul.f32 %v814, 0.5
        %v817 = vmul.f32 %v815, 0.5
        %v818 = vmul.f32 %v814, 0.044715
        %v819 = vmul.f32 %v815, 0.044715
        %v820 = vmul.f32 %v818, %v814
        %v821 = vmul.f32 %v819, %v815
        %v822 = vmul.f32 %v820, %v814
        %v823 = vmul.f32 %v821, %v815
        %v824 = vadd.f32 %v814, %v822
        %v825 = vadd.f32 %v815, %v823
        %v826 = vmul.f32 %v824, 0.7978846
        %v827 = vmul.f32 %v825, 0.7978846
        %v828 = vtanh.pop %v826
        %v829 = vtanh.pop %v827
        %v830 = vadd.f32 %v828, 1.0
        %v831 = vadd.f32 %v829, 1.0
        %v832 = vmul.f32 %v816, %v830
        %v833 = vmul.f32 %v817, %v831
        %v834 = vpack.c.bf16 %v832, %v832
        %v835 = vpack.c.bf16 %v833, %v833
        %s836 = scalar_lea.vmem %s569, 8 [#allocation2]
        %v837 = vld [vmem:[%s836] sm:$0xff]
        %v838 = vpack.c.bf16 %v837, %v837
        %839 = vmatpush.bf16.msra.mxu0 %v724
        %840 = vmatpush.bf16.msra.mxu0 %v722
        %841 = vmatpush.bf16.msra.mxu0 %v720
        %842 = vmatpush.bf16.msra.mxu0 %v718
        %843 = vmatpush.bf16.msra.mxu0 %v716
        %844 = vmatpush.bf16.msra.mxu0 %v714
        %845 = vmatpush.bf16.msra.mxu0 %v712
        %846 = vmatpush.bf16.msra.mxu0 %v710
        %847 = vmatmul.bf16.gmra.mxu0 %v838
        %v848 = vpop.f32.mrf.mxu0
        %v849 = vadd.f32 %v658, %v848
        %v850 = vpop.f32.mrf.mxu0
        %851 = vdwg.mxu0
        %852 = vmatpush.bf16.msra.mxu0 %v725
        %853 = vmatpush.bf16.msra.mxu0 %v723
        %854 = vmatpush.bf16.msra.mxu0 %v721
        %855 = vmatpush.bf16.msra.mxu0 %v719
        %856 = vmatpush.bf16.msra.mxu0 %v717
        %857 = vmatpush.bf16.msra.mxu0 %v715
        %858 = vmatpush.bf16.msra.mxu0 %v713
        %859 = vmatpush.bf16.msra.mxu0 %v711
        %860 = vmatmul.bf16.gmra.mxu0 %v838
        %v861 = vpop.f32.mrf.mxu0
        %v862 = vadd.f32 %v659, %v861
        %v863 = vpop.f32.mrf.mxu0
        %864 = vdwg.mxu0
        %v865 = vadd.f32 %v849, %v862
        %866 = vadd.xlane.f32.xlu0 %v865
        %v867 = vpop.xlane.xlu0 %866
        %v868 = vmul.f32 %v867, %v779
        %v869 = vsub.f32 %v849, %v868
        %v870 = vsub.f32 %v862, %v868
        %v871 = vmul.f32 %v869, %v869
        %v872 = vmul.f32 %v870, %v870
        %v873 = vadd.f32 %v871, %v872
        %874 = vadd.xlane.f32.xlu0 %v873
        %v875 = vpop.xlane.xlu0 %874
        %v876 = vmul.f32 %v875, %v779
        %v877 = vadd.f32 %v876, 1e-05
        %v878 = vrsqrt.pop %v877
        %v879 = vmul.f32 %v878, %v877
        %v880 = vmul.f32 %v879, %v878
        %v881 = vmul.f32 0.5, %v880
        %v882 = vsub.f32 1.5, %v881
        %v883 = vmul.f32 %v878, %v882
        %vm884 = vweird.f32 %v877
        %vm885 = vweird.f32 %v878
        %vm886 = vmor %vm884, %vm885
        %v887 = vsel %vm886, %v878, %v883
        %v888 = vmul.f32 %v869, %v887
        %v889 = vmul.f32 %v870, %v887
        %v890 = vmul.f32 %v888, %v803
        %v891 = vmul.f32 %v889, %v804
        %v892 = vadd.f32 %v890, %v810
        %v893 = vadd.f32 %v891, %v811
        %v894 = vmul.f32 %v892, 0.5
        %v895 = vmul.f32 %v893, 0.5
        %v896 = vmul.f32 %v892, 0.044715
        %v897 = vmul.f32 %v893, 0.044715
        %v898 = vmul.f32 %v896, %v892
        %v899 = vmul.f32 %v897, %v893
        %v900 = vmul.f32 %v898, %v892
        %v901 = vmul.f32 %v899, %v893
        %v902 = vadd.f32 %v892, %v900
        %v903 = vadd.f32 %v893, %v901
        %v904 = vmul.f32 %v902, 0.7978846
        %v905 = vmul.f32 %v903, 0.7978846
        %v906 = vtanh.pop %v904
        %v907 = vtanh.pop %v905
        %v908 = vadd.f32 %v906, 1.0
        %v909 = vadd.f32 %v907, 1.0
        %v910 = vmul.f32 %v894, %v908
        %v911 = vmul.f32 %v895, %v909
        %v912 = vpack.c.bf16 %v910, %v910
        %v913 = vpack.c.bf16 %v911, %v911
        %v914 = vld [vmem:[%s6] sm:$0xff]
        %v915 = vld [vmem:[%s6 + $0x8] sm:$0xff]
        %v916 = vld [vmem:[%s6 + $0x10] sm:$0xff]
        %v917 = vld [vmem:[%s6 + $0x18] sm:$0xff]
        %v918 = vld [vmem:[%s6 + $0x20] sm:$0xff]
        %v919 = vld [vmem:[%s6 + $0x28] sm:$0xff]
        %v920 = vld [vmem:[%s6 + $0x30] sm:$0xff]
        %v921 = vld [vmem:[%s6 + $0x38] sm:$0xff]
        %v922 = vld [vmem:[%s6 + $0x40] sm:$0xff]
        %v923 = vld [vmem:[%s6 + $0x48] sm:$0xff]
        %v924 = vld [vmem:[%s6 + $0x50] sm:$0xff]
        %v925 = vld [vmem:[%s6 + $0x58] sm:$0xff]
        %v926 = vld [vmem:[%s6 + $0x60] sm:$0xff]
        %v927 = vld [vmem:[%s6 + $0x68] sm:$0xff]
        %v928 = vld [vmem:[%s6 + $0x70] sm:$0xff]
        %v929 = vld [vmem:[%s6 + $0x78] sm:$0xff]
        %v930 = vld [vmem:[%s6 + $0x80] sm:$0xff]
        %v931 = vld [vmem:[%s6 + $0x88] sm:$0xff]
        %v932 = vld [vmem:[%s6 + $0x90] sm:$0xff]
        %v933 = vld [vmem:[%s6 + $0x98] sm:$0xff]
        %v934 = vld [vmem:[%s6 + $0xa0] sm:$0xff]
        %v935 = vld [vmem:[%s6 + $0xa8] sm:$0xff]
        %v936 = vld [vmem:[%s6 + $0xb0] sm:$0xff]
        %v937 = vld [vmem:[%s6 + $0xb8] sm:$0xff]
        %v938 = vld [vmem:[%s6 + $0xc0] sm:$0xff]
        %v939 = vld [vmem:[%s6 + $0xc8] sm:$0xff]
        %v940 = vld [vmem:[%s6 + $0xd0] sm:$0xff]
        %v941 = vld [vmem:[%s6 + $0xd8] sm:$0xff]
        %v942 = vld [vmem:[%s6 + $0xe0] sm:$0xff]
        %v943 = vld [vmem:[%s6 + $0xe8] sm:$0xff]
        %v944 = vld [vmem:[%s6 + $0xf0] sm:$0xff]
        %v945 = vld [vmem:[%s6 + $0xf8] sm:$0xff]
        %v946 = vld [vmem:[%s7] sm:$0x3]
        %v948 = vperm.slane %v946, 0
        %v949 = vperm.slane %v946, 1
        %v984 = vunpack.c.l.b16 %v914
        %v985 = vunpack.c.h.b16 %v914
        %v986 = vunpack.c.l.b16 %v915
        %v987 = vunpack.c.h.b16 %v915
        %v988 = vunpack.c.l.b16 %v916
        %v989 = vunpack.c.h.b16 %v916
        %v990 = vunpack.c.l.b16 %v917
        %v991 = vunpack.c.h.b16 %v917
        %v992 = vunpack.c.l.b16 %v918
        %v993 = vunpack.c.h.b16 %v918
        %v994 = vunpack.c.l.b16 %v919
        %v995 = vunpack.c.h.b16 %v919
        %v996 = vunpack.c.l.b16 %v920
        %v997 = vunpack.c.h.b16 %v920
        %v998 = vunpack.c.l.b16 %v921
        %v999 = vunpack.c.h.b16 %v921
        %v1000 = vunpack.c.l.b16 %v922
        %v1001 = vunpack.c.h.b16 %v922
        %v1002 = vunpack.c.l.b16 %v923
        %v1003 = vunpack.c.h.b16 %v923
        %v1004 = vunpack.c.l.b16 %v924
        %v1005 = vunpack.c.h.b16 %v924
        %v1006 = vunpack.c.l.b16 %v925
        %v1007 = vunpack.c.h.b16 %v925
        %v1008 = vunpack.c.l.b16 %v926
        %v1009 = vunpack.c.h.b16 %v926
        %v1010 = vunpack.c.l.b16 %v927
        %v1011 = vunpack.c.h.b16 %v927
        %v1012 = vunpack.c.l.b16 %v928
        %v1013 = vunpack.c.h.b16 %v928
        %v1014 = vunpack.c.l.b16 %v929
        %v1015 = vunpack.c.h.b16 %v929
        %v1016 = vunpack.c.l.b16 %v930
        %v1017 = vunpack.c.h.b16 %v930
        %v1018 = vunpack.c.l.b16 %v931
        %v1019 = vunpack.c.h.b16 %v931
        %v1020 = vunpack.c.l.b16 %v932
        %v1021 = vunpack.c.h.b16 %v932
        %v1022 = vunpack.c.l.b16 %v933
        %v1023 = vunpack.c.h.b16 %v933
        %v1024 = vunpack.c.l.b16 %v934
        %v1025 = vunpack.c.h.b16 %v934
        %v1026 = vunpack.c.l.b16 %v935
        %v1027 = vunpack.c.h.b16 %v935
        %v1028 = vunpack.c.l.b16 %v936
        %v1029 = vunpack.c.h.b16 %v936
        %v1030 = vunpack.c.l.b16 %v937
        %v1031 = vunpack.c.h.b16 %v937
        %v1032 = vunpack.c.l.b16 %v938
        %v1033 = vunpack.c.h.b16 %v938
        %v1034 = vunpack.c.l.b16 %v939
        %v1035 = vunpack.c.h.b16 %v939
        %v1036 = vunpack.c.l.b16 %v940
        %v1037 = vunpack.c.h.b16 %v940
        %v1038 = vunpack.c.l.b16 %v941
        %v1039 = vunpack.c.h.b16 %v941
        %v1040 = vunpack.c.l.b16 %v942
        %v1041 = vunpack.c.h.b16 %v942
        %v1042 = vunpack.c.l.b16 %v943
        %v1043 = vunpack.c.h.b16 %v943
        %v1044 = vunpack.c.l.b16 %v944
        %v1045 = vunpack.c.h.b16 %v944
        %v1046 = vunpack.c.l.b16 %v945
        %v1047 = vunpack.c.h.b16 %v945
        %v1048 = vpack.c.b16 %v986, %v984
        %v1049 = vpack.c.b16 %v987, %v985
        %v1050 = vpack.c.b16 %v990, %v988
        %v1051 = vpack.c.b16 %v991, %v989
        %v1052 = vpack.c.b16 %v994, %v992
        %v1053 = vpack.c.b16 %v995, %v993
        %v1054 = vpack.c.b16 %v998, %v996
        %v1055 = vpack.c.b16 %v999, %v997
        %v1056 = vpack.c.b16 %v1002, %v1000
        %v1057 = vpack.c.b16 %v1003, %v1001
        %v1058 = vpack.c.b16 %v1006, %v1004
        %v1059 = vpack.c.b16 %v1007, %v1005
        %v1060 = vpack.c.b16 %v1010, %v1008
        %v1061 = vpack.c.b16 %v1011, %v1009
        %v1062 = vpack.c.b16 %v1014, %v1012
        %v1063 = vpack.c.b16 %v1015, %v1013
        %v1064 = vpack.c.b16 %v1018, %v1016
        %v1065 = vpack.c.b16 %v1019, %v1017
        %v1066 = vpack.c.b16 %v1022, %v1020
        %v1067 = vpack.c.b16 %v1023, %v1021
        %v1068 = vpack.c.b16 %v1026, %v1024
        %v1069 = vpack.c.b16 %v1027, %v1025
        %v1070 = vpack.c.b16 %v1030, %v1028
        %v1071 = vpack.c.b16 %v1031, %v1029
        %v1072 = vpack.c.b16 %v1034, %v1032
        %v1073 = vpack.c.b16 %v1035, %v1033
        %v1074 = vpack.c.b16 %v1038, %v1036
        %v1075 = vpack.c.b16 %v1039, %v1037
        %v1076 = vpack.c.b16 %v1042, %v1040
        %v1077 = vpack.c.b16 %v1043, %v1041
        %v1078 = vpack.c.b16 %v1046, %v1044
        %v1079 = vpack.c.b16 %v1047, %v1045
        %1112 = vmatpush.bf16.msra.mxu0 %v1062
        %1113 = vmatpush.bf16.msra.mxu0 %v1060
        %1114 = vmatpush.bf16.msra.mxu0 %v1058
        %1115 = vmatpush.bf16.msra.mxu0 %v1056
        %1116 = vmatpush.bf16.msra.mxu0 %v1054
        %1117 = vmatpush.bf16.msra.mxu0 %v1052
        %1118 = vmatpush.bf16.msra.mxu0 %v1050
        %1119 = vmatpush.bf16.msra.mxu0 %v1048
        %1120 = vmatmul.bf16.gmra.mxu0 %v636
        %v1121 = vpop.f32.mrf.mxu0
        %v1122 = vadd.f32 %v948, %v1121
        %v1123 = vpop.f32.mrf.mxu0
        %1124 = vdwg.mxu0
        %1125 = vmatpush.bf16.msra.mxu0 %v1078
        %1126 = vmatpush.bf16.msra.mxu0 %v1076
        %1127 = vmatpush.bf16.msra.mxu0 %v1074
        %1128 = vmatpush.bf16.msra.mxu0 %v1072
        %1129 = vmatpush.bf16.msra.mxu0 %v1070
        %1130 = vmatpush.bf16.msra.mxu0 %v1068
        %1131 = vmatpush.bf16.msra.mxu0 %v1066
        %1132 = vmatpush.bf16.msra.mxu0 %v1064
        %1133 = vmatmul.bf16.gmra.mxu0 %v637
        %v1134 = vpop.f32.mrf.mxu0
        %v1135 = vadd.f32 %v1122, %v1134
        %v1136 = vpop.f32.mrf.mxu0
        %1137 = vdwg.mxu0
        %1138 = vmatpush.bf16.msra.mxu0 %v1063
        %1139 = vmatpush.bf16.msra.mxu0 %v1061
        %1140 = vmatpush.bf16.msra.mxu0 %v1059
        %1141 = vmatpush.bf16.msra.mxu0 %v1057
        %1142 = vmatpush.bf16.msra.mxu0 %v1055
        %1143 = vmatpush.bf16.msra.mxu0 %v1053
        %1144 = vmatpush.bf16.msra.mxu0 %v1051
        %1145 = vmatpush.bf16.msra.mxu0 %v1049
        %1146 = vmatmul.bf16.gmra.mxu0 %v636
        %v1147 = vpop.f32.mrf.mxu0
        %v1148 = vadd.f32 %v949, %v1147
        %v1149 = vpop.f32.mrf.mxu0
        %1150 = vdwg.mxu0
        %1151 = vmatpush.bf16.msra.mxu0 %v1079
        %1152 = vmatpush.bf16.msra.mxu0 %v1077
        %1153 = vmatpush.bf16.msra.mxu0 %v1075
        %1154 = vmatpush.bf16.msra.mxu0 %v1073
        %1155 = vmatpush.bf16.msra.mxu0 %v1071
        %1156 = vmatpush.bf16.msra.mxu0 %v1069
        %1157 = vmatpush.bf16.msra.mxu0 %v1067
        %1158 = vmatpush.bf16.msra.mxu0 %v1065
        %1159 = vmatmul.bf16.gmra.mxu0 %v637
        %v1160 = vpop.f32.mrf.mxu0
        %v1161 = vadd.f32 %v1148, %v1160
        %v1162 = vpop.f32.mrf.mxu0
        %1163 = vdwg.mxu0
        %v1164 = vpack.c.bf16 %v1135, %v1135
        %v1165 = vpack.c.bf16 %v1161, %v1161
        %s1166 = scalar_lea.vmem %s6, 256
        %v1167 = vld [vmem:[%s1166] sm:$0xff]
        %v1168 = vld [vmem:[%s1166 + $0x8] sm:$0xff]
        %v1169 = vld [vmem:[%s1166 + $0x10] sm:$0xff]
        %v1170 = vld [vmem:[%s1166 + $0x18] sm:$0xff]
        %v1171 = vld [vmem:[%s1166 + $0x20] sm:$0xff]
        %v1172 = vld [vmem:[%s1166 + $0x28] sm:$0xff]
        %v1173 = vld [vmem:[%s1166 + $0x30] sm:$0xff]
        %v1174 = vld [vmem:[%s1166 + $0x38] sm:$0xff]
        %v1175 = vld [vmem:[%s1166 + $0x40] sm:$0xff]
        %v1176 = vld [vmem:[%s1166 + $0x48] sm:$0xff]
        %v1177 = vld [vmem:[%s1166 + $0x50] sm:$0xff]
        %v1178 = vld [vmem:[%s1166 + $0x58] sm:$0xff]
        %v1179 = vld [vmem:[%s1166 + $0x60] sm:$0xff]
        %v1180 = vld [vmem:[%s1166 + $0x68] sm:$0xff]
        %v1181 = vld [vmem:[%s1166 + $0x70] sm:$0xff]
        %v1182 = vld [vmem:[%s1166 + $0x78] sm:$0xff]
        %v1183 = vld [vmem:[%s1166 + $0x80] sm:$0xff]
        %v1184 = vld [vmem:[%s1166 + $0x88] sm:$0xff]
        %v1185 = vld [vmem:[%s1166 + $0x90] sm:$0xff]
        %v1186 = vld [vmem:[%s1166 + $0x98] sm:$0xff]
        %v1187 = vld [vmem:[%s1166 + $0xa0] sm:$0xff]
        %v1188 = vld [vmem:[%s1166 + $0xa8] sm:$0xff]
        %v1189 = vld [vmem:[%s1166 + $0xb0] sm:$0xff]
        %v1190 = vld [vmem:[%s1166 + $0xb8] sm:$0xff]
        %v1191 = vld [vmem:[%s1166 + $0xc0] sm:$0xff]
        %v1192 = vld [vmem:[%s1166 + $0xc8] sm:$0xff]
        %v1193 = vld [vmem:[%s1166 + $0xd0] sm:$0xff]
        %v1194 = vld [vmem:[%s1166 + $0xd8] sm:$0xff]
        %v1195 = vld [vmem:[%s1166 + $0xe0] sm:$0xff]
        %v1196 = vld [vmem:[%s1166 + $0xe8] sm:$0xff]
        %v1197 = vld [vmem:[%s1166 + $0xf0] sm:$0xff]
        %v1198 = vld [vmem:[%s1166 + $0xf8] sm:$0xff]
        %s1199 = scalar_lea.vmem %s7, 2
        %v1200 = vld [vmem:[%s1199] sm:$0x3]
        %v1202 = vperm.slane %v1200, 0
        %v1203 = vperm.slane %v1200, 1
        %v1238 = vunpack.c.l.b16 %v1167
        %v1239 = vunpack.c.h.b16 %v1167
        %v1240 = vunpack.c.l.b16 %v1168
        %v1241 = vunpack.c.h.b16 %v1168
        %v1242 = vunpack.c.l.b16 %v1169
        %v1243 = vunpack.c.h.b16 %v1169
        %v1244 = vunpack.c.l.b16 %v1170
        %v1245 = vunpack.c.h.b16 %v1170
        %v1246 = vunpack.c.l.b16 %v1171
        %v1247 = vunpack.c.h.b16 %v1171
        %v1248 = vunpack.c.l.b16 %v1172
        %v1249 = vunpack.c.h.b16 %v1172
        %v1250 = vunpack.c.l.b16 %v1173
        %v1251 = vunpack.c.h.b16 %v1173
        %v1252 = vunpack.c.l.b16 %v1174
        %v1253 = vunpack.c.h.b16 %v1174
        %v1254 = vunpack.c.l.b16 %v1175
        %v1255 = vunpack.c.h.b16 %v1175
        %v1256 = vunpack.c.l.b16 %v1176
        %v1257 = vunpack.c.h.b16 %v1176
        %v1258 = vunpack.c.l.b16 %v1177
        %v1259 = vunpack.c.h.b16 %v1177
        %v1260 = vunpack.c.l.b16 %v1178
        %v1261 = vunpack.c.h.b16 %v1178
        %v1262 = vunpack.c.l.b16 %v1179
        %v1263 = vunpack.c.h.b16 %v1179
        %v1264 = vunpack.c.l.b16 %v1180
        %v1265 = vunpack.c.h.b16 %v1180
        %v1266 = vunpack.c.l.b16 %v1181
        %v1267 = vunpack.c.h.b16 %v1181
        %v1268 = vunpack.c.l.b16 %v1182
        %v1269 = vunpack.c.h.b16 %v1182
        %v1270 = vunpack.c.l.b16 %v1183
        %v1271 = vunpack.c.h.b16 %v1183
        %v1272 = vunpack.c.l.b16 %v1184
        %v1273 = vunpack.c.h.b16 %v1184
        %v1274 = vunpack.c.l.b16 %v1185
        %v1275 = vunpack.c.h.b16 %v1185
        %v1276 = vunpack.c.l.b16 %v1186
        %v1277 = vunpack.c.h.b16 %v1186
        %v1278 = vunpack.c.l.b16 %v1187
        %v1279 = vunpack.c.h.b16 %v1187
        %v1280 = vunpack.c.l.b16 %v1188
        %v1281 = vunpack.c.h.b16 %v1188
        %v1282 = vunpack.c.l.b16 %v1189
        %v1283 = vunpack.c.h.b16 %v1189
        %v1284 = vunpack.c.l.b16 %v1190
        %v1285 = vunpack.c.h.b16 %v1190
        %v1286 = vunpack.c.l.b16 %v1191
        %v1287 = vunpack.c.h.b16 %v1191
        %v1288 = vunpack.c.l.b16 %v1192
        %v1289 = vunpack.c.h.b16 %v1192
        %v1290 = vunpack.c.l.b16 %v1193
        %v1291 = vunpack.c.h.b16 %v1193
        %v1292 = vunpack.c.l.b16 %v1194
        %v1293 = vunpack.c.h.b16 %v1194
        %v1294 = vunpack.c.l.b16 %v1195
        %v1295 = vunpack.c.h.b16 %v1195
        %v1296 = vunpack.c.l.b16 %v1196
        %v1297 = vunpack.c.h.b16 %v1196
        %v1298 = vunpack.c.l.b16 %v1197
        %v1299 = vunpack.c.h.b16 %v1197
        %v1300 = vunpack.c.l.b16 %v1198
        %v1301 = vunpack.c.h.b16 %v1198
        %v1302 = vpack.c.b16 %v1240, %v1238
        %v1303 = vpack.c.b16 %v1241, %v1239
        %v1304 = vpack.c.b16 %v1244, %v1242
        %v1305 = vpack.c.b16 %v1245, %v1243
        %v1306 = vpack.c.b16 %v1248, %v1246
        %v1307 = vpack.c.b16 %v1249, %v1247
        %v1308 = vpack.c.b16 %v1252, %v1250
        %v1309 = vpack.c.b16 %v1253, %v1251
        %v1310 = vpack.c.b16 %v1256, %v1254
        %v1311 = vpack.c.b16 %v1257, %v1255
        %v1312 = vpack.c.b16 %v1260, %v1258
        %v1313 = vpack.c.b16 %v1261, %v1259
        %v1314 = vpack.c.b16 %v1264, %v1262
        %v1315 = vpack.c.b16 %v1265, %v1263
        %v1316 = vpack.c.b16 %v1268, %v1266
        %v1317 = vpack.c.b16 %v1269, %v1267
        %v1318 = vpack.c.b16 %v1272, %v1270
        %v1319 = vpack.c.b16 %v1273, %v1271
        %v1320 = vpack.c.b16 %v1276, %v1274
        %v1321 = vpack.c.b16 %v1277, %v1275
        %v1322 = vpack.c.b16 %v1280, %v1278
        %v1323 = vpack.c.b16 %v1281, %v1279
        %v1324 = vpack.c.b16 %v1284, %v1282
        %v1325 = vpack.c.b16 %v1285, %v1283
        %v1326 = vpack.c.b16 %v1288, %v1286
        %v1327 = vpack.c.b16 %v1289, %v1287
        %v1328 = vpack.c.b16 %v1292, %v1290
        %v1329 = vpack.c.b16 %v1293, %v1291
        %v1330 = vpack.c.b16 %v1296, %v1294
        %v1331 = vpack.c.b16 %v1297, %v1295
        %v1332 = vpack.c.b16 %v1300, %v1298
        %v1333 = vpack.c.b16 %v1301, %v1299
        %1366 = vmatpush.bf16.msra.mxu0 %v1316
        %1367 = vmatpush.bf16.msra.mxu0 %v1314
        %1368 = vmatpush.bf16.msra.mxu0 %v1312
        %1369 = vmatpush.bf16.msra.mxu0 %v1310
        %1370 = vmatpush.bf16.msra.mxu0 %v1308
        %1371 = vmatpush.bf16.msra.mxu0 %v1306
        %1372 = vmatpush.bf16.msra.mxu0 %v1304
        %1373 = vmatpush.bf16.msra.mxu0 %v1302
        %1374 = vmatmul.bf16.gmra.mxu0 %v636
        %v1375 = vpop.f32.mrf.mxu0
        %v1376 = vadd.f32 %v1202, %v1375
        %v1377 = vpop.f32.mrf.mxu0
        %1378 = vdwg.mxu0
        %1379 = vmatpush.bf16.msra.mxu0 %v1332
        %1380 = vmatpush.bf16.msra.mxu0 %v1330
        %1381 = vmatpush.bf16.msra.mxu0 %v1328
        %1382 = vmatpush.bf16.msra.mxu0 %v1326
        %1383 = vmatpush.bf16.msra.mxu0 %v1324
        %1384 = vmatpush.bf16.msra.mxu0 %v1322
        %1385 = vmatpush.bf16.msra.mxu0 %v1320
        %1386 = vmatpush.bf16.msra.mxu0 %v1318
        %1387 = vmatmul.bf16.gmra.mxu0 %v637
        %v1388 = vpop.f32.mrf.mxu0
        %v1389 = vadd.f32 %v1376, %v1388
        %v1390 = vpop.f32.mrf.mxu0
        %1391 = vdwg.mxu0
        %1392 = vmatpush.bf16.msra.mxu0 %v1317
        %1393 = vmatpush.bf16.msra.mxu0 %v1315
        %1394 = vmatpush.bf16.msra.mxu0 %v1313
        %1395 = vmatpush.bf16.msra.mxu0 %v1311
        %1396 = vmatpush.bf16.msra.mxu0 %v1309
        %1397 = vmatpush.bf16.msra.mxu0 %v1307
        %1398 = vmatpush.bf16.msra.mxu0 %v1305
        %1399 = vmatpush.bf16.msra.mxu0 %v1303
        %1400 = vmatmul.bf16.gmra.mxu0 %v636
        %v1401 = vpop.f32.mrf.mxu0
        %v1402 = vadd.f32 %v1203, %v1401
        %v1403 = vpop.f32.mrf.mxu0
        %1404 = vdwg.mxu0
        %1405 = vmatpush.bf16.msra.mxu0 %v1333
        %1406 = vmatpush.bf16.msra.mxu0 %v1331
        %1407 = vmatpush.bf16.msra.mxu0 %v1329
        %1408 = vmatpush.bf16.msra.mxu0 %v1327
        %1409 = vmatpush.bf16.msra.mxu0 %v1325
        %1410 = vmatpush.bf16.msra.mxu0 %v1323
        %1411 = vmatpush.bf16.msra.mxu0 %v1321
        %1412 = vmatpush.bf16.msra.mxu0 %v1319
        %1413 = vmatmul.bf16.gmra.mxu0 %v637
        %v1414 = vpop.f32.mrf.mxu0
        %v1415 = vadd.f32 %v1402, %v1414
        %v1416 = vpop.f32.mrf.mxu0
        %1417 = vdwg.mxu0
        %v1418 = vpack.c.bf16 %v1389, %v1389
        %v1419 = vpack.c.bf16 %v1415, %v1415
        %s1420 = scalar_lea.vmem %s6, 512
        %v1421 = vld [vmem:[%s1420] sm:$0xff]
        %v1422 = vld [vmem:[%s1420 + $0x8] sm:$0xff]
        %v1423 = vld [vmem:[%s1420 + $0x10] sm:$0xff]
        %v1424 = vld [vmem:[%s1420 + $0x18] sm:$0xff]
        %v1425 = vld [vmem:[%s1420 + $0x20] sm:$0xff]
        %v1426 = vld [vmem:[%s1420 + $0x28] sm:$0xff]
        %v1427 = vld [vmem:[%s1420 + $0x30] sm:$0xff]
        %v1428 = vld [vmem:[%s1420 + $0x38] sm:$0xff]
        %v1429 = vld [vmem:[%s1420 + $0x40] sm:$0xff]
        %v1430 = vld [vmem:[%s1420 + $0x48] sm:$0xff]
        %v1431 = vld [vmem:[%s1420 + $0x50] sm:$0xff]
        %v1432 = vld [vmem:[%s1420 + $0x58] sm:$0xff]
        %v1433 = vld [vmem:[%s1420 + $0x60] sm:$0xff]
        %v1434 = vld [vmem:[%s1420 + $0x68] sm:$0xff]
        %v1435 = vld [vmem:[%s1420 + $0x70] sm:$0xff]
        %v1436 = vld [vmem:[%s1420 + $0x78] sm:$0xff]
        %v1437 = vld [vmem:[%s1420 + $0x80] sm:$0xff]
        %v1438 = vld [vmem:[%s1420 + $0x88] sm:$0xff]
        %v1439 = vld [vmem:[%s1420 + $0x90] sm:$0xff]
        %v1440 = vld [vmem:[%s1420 + $0x98] sm:$0xff]
        %v1441 = vld [vmem:[%s1420 + $0xa0] sm:$0xff]
        %v1442 = vld [vmem:[%s1420 + $0xa8] sm:$0xff]
        %v1443 = vld [vmem:[%s1420 + $0xb0] sm:$0xff]
        %v1444 = vld [vmem:[%s1420 + $0xb8] sm:$0xff]
        %v1445 = vld [vmem:[%s1420 + $0xc0] sm:$0xff]
        %v1446 = vld [vmem:[%s1420 + $0xc8] sm:$0xff]
        %v1447 = vld [vmem:[%s1420 + $0xd0] sm:$0xff]
        %v1448 = vld [vmem:[%s1420 + $0xd8] sm:$0xff]
        %v1449 = vld [vmem:[%s1420 + $0xe0] sm:$0xff]
        %v1450 = vld [vmem:[%s1420 + $0xe8] sm:$0xff]
        %v1451 = vld [vmem:[%s1420 + $0xf0] sm:$0xff]
        %v1452 = vld [vmem:[%s1420 + $0xf8] sm:$0xff]
        %s1453 = scalar_lea.vmem %s7, 4
        %v1454 = vld [vmem:[%s1453] sm:$0x3]
        %v1456 = vperm.slane %v1454, 0
        %v1457 = vperm.slane %v1454, 1
        %v1492 = vunpack.c.l.b16 %v1421
        %v1493 = vunpack.c.h.b16 %v1421
        %v1494 = vunpack.c.l.b16 %v1422
        %v1495 = vunpack.c.h.b16 %v1422
        %v1496 = vunpack.c.l.b16 %v1423
        %v1497 = vunpack.c.h.b16 %v1423
        %v1498 = vunpack.c.l.b16 %v1424
        %v1499 = vunpack.c.h.b16 %v1424
        %v1500 = vunpack.c.l.b16 %v1425
        %v1501 = vunpack.c.h.b16 %v1425
        %v1502 = vunpack.c.l.b16 %v1426
        %v1503 = vunpack.c.h.b16 %v1426
        %v1504 = vunpack.c.l.b16 %v1427
        %v1505 = vunpack.c.h.b16 %v1427
        %v1506 = vunpack.c.l.b16 %v1428
        %v1507 = vunpack.c.h.b16 %v1428
        %v1508 = vunpack.c.l.b16 %v1429
        %v1509 = vunpack.c.h.b16 %v1429
        %v1510 = vunpack.c.l.b16 %v1430
        %v1511 = vunpack.c.h.b16 %v1430
        %v1512 = vunpack.c.l.b16 %v1431
        %v1513 = vunpack.c.h.b16 %v1431
        %v1514 = vunpack.c.l.b16 %v1432
        %v1515 = vunpack.c.h.b16 %v1432
        %v1516 = vunpack.c.l.b16 %v1433
        %v1517 = vunpack.c.h.b16 %v1433
        %v1518 = vunpack.c.l.b16 %v1434
        %v1519 = vunpack.c.h.b16 %v1434
        %v1520 = vunpack.c.l.b16 %v1435
        %v1521 = vunpack.c.h.b16 %v1435
        %v1522 = vunpack.c.l.b16 %v1436
        %v1523 = vunpack.c.h.b16 %v1436
        %v1524 = vunpack.c.l.b16 %v1437
        %v1525 = vunpack.c.h.b16 %v1437
        %v1526 = vunpack.c.l.b16 %v1438
        %v1527 = vunpack.c.h.b16 %v1438
        %v1528 = vunpack.c.l.b16 %v1439
        %v1529 = vunpack.c.h.b16 %v1439
        %v1530 = vunpack.c.l.b16 %v1440
        %v1531 = vunpack.c.h.b16 %v1440
        %v1532 = vunpack.c.l.b16 %v1441
        %v1533 = vunpack.c.h.b16 %v1441
        %v1534 = vunpack.c.l.b16 %v1442
        %v1535 = vunpack.c.h.b16 %v1442
        %v1536 = vunpack.c.l.b16 %v1443
        %v1537 = vunpack.c.h.b16 %v1443
        %v1538 = vunpack.c.l.b16 %v1444
        %v1539 = vunpack.c.h.b16 %v1444
        %v1540 = vunpack.c.l.b16 %v1445
        %v1541 = vunpack.c.h.b16 %v1445
        %v1542 = vunpack.c.l.b16 %v1446
        %v1543 = vunpack.c.h.b16 %v1446
        %v1544 = vunpack.c.l.b16 %v1447
        %v1545 = vunpack.c.h.b16 %v1447
        %v1546 = vunpack.c.l.b16 %v1448
        %v1547 = vunpack.c.h.b16 %v1448
        %v1548 = vunpack.c.l.b16 %v1449
        %v1549 = vunpack.c.h.b16 %v1449
        %v1550 = vunpack.c.l.b16 %v1450
        %v1551 = vunpack.c.h.b16 %v1450
        %v1552 = vunpack.c.l.b16 %v1451
        %v1553 = vunpack.c.h.b16 %v1451
        %v1554 = vunpack.c.l.b16 %v1452
        %v1555 = vunpack.c.h.b16 %v1452
        %v1556 = vpack.c.b16 %v1494, %v1492
        %v1557 = vpack.c.b16 %v1495, %v1493
        %v1558 = vpack.c.b16 %v1498, %v1496
        %v1559 = vpack.c.b16 %v1499, %v1497
        %v1560 = vpack.c.b16 %v1502, %v1500
        %v1561 = vpack.c.b16 %v1503, %v1501
        %v1562 = vpack.c.b16 %v1506, %v1504
        %v1563 = vpack.c.b16 %v1507, %v1505
        %v1564 = vpack.c.b16 %v1510, %v1508
        %v1565 = vpack.c.b16 %v1511, %v1509
        %v1566 = vpack.c.b16 %v1514, %v1512
        %v1567 = vpack.c.b16 %v1515, %v1513
        %v1568 = vpack.c.b16 %v1518, %v1516
        %v1569 = vpack.c.b16 %v1519, %v1517
        %v1570 = vpack.c.b16 %v1522, %v1520
        %v1571 = vpack.c.b16 %v1523, %v1521
        %v1572 = vpack.c.b16 %v1526, %v1524
        %v1573 = vpack.c.b16 %v1527, %v1525
        %v1574 = vpack.c.b16 %v1530, %v1528
        %v1575 = vpack.c.b16 %v1531, %v1529
        %v1576 = vpack.c.b16 %v1534, %v1532
        %v1577 = vpack.c.b16 %v1535, %v1533
        %v1578 = vpack.c.b16 %v1538, %v1536
        %v1579 = vpack.c.b16 %v1539, %v1537
        %v1580 = vpack.c.b16 %v1542, %v1540
        %v1581 = vpack.c.b16 %v1543, %v1541
        %v1582 = vpack.c.b16 %v1546, %v1544
        %v1583 = vpack.c.b16 %v1547, %v1545
        %v1584 = vpack.c.b16 %v1550, %v1548
        %v1585 = vpack.c.b16 %v1551, %v1549
        %v1586 = vpack.c.b16 %v1554, %v1552
        %v1587 = vpack.c.b16 %v1555, %v1553
        %1620 = vmatpush.bf16.msra.mxu0 %v1570
        %1621 = vmatpush.bf16.msra.mxu0 %v1568
        %1622 = vmatpush.bf16.msra.mxu0 %v1566
        %1623 = vmatpush.bf16.msra.mxu0 %v1564
        %1624 = vmatpush.bf16.msra.mxu0 %v1562
        %1625 = vmatpush.bf16.msra.mxu0 %v1560
        %1626 = vmatpush.bf16.msra.mxu0 %v1558
        %1627 = vmatpush.bf16.msra.mxu0 %v1556
        %1628 = vmatmul.bf16.gmra.mxu0 %v636
        %v1629 = vpop.f32.mrf.mxu0
        %v1630 = vadd.f32 %v1456, %v1629
        %v1631 = vpop.f32.mrf.mxu0
        %1632 = vdwg.mxu0
        %1633 = vmatpush.bf16.msra.mxu0 %v1586
        %1634 = vmatpush.bf16.msra.mxu0 %v1584
        %1635 = vmatpush.bf16.msra.mxu0 %v1582
        %1636 = vmatpush.bf16.msra.mxu0 %v1580
        %1637 = vmatpush.bf16.msra.mxu0 %v1578
        %1638 = vmatpush.bf16.msra.mxu0 %v1576
        %1639 = vmatpush.bf16.msra.mxu0 %v1574
        %1640 = vmatpush.bf16.msra.mxu0 %v1572
        %1641 = vmatmul.bf16.gmra.mxu0 %v637
        %v1642 = vpop.f32.mrf.mxu0
        %v1643 = vadd.f32 %v1630, %v1642
        %v1644 = vpop.f32.mrf.mxu0
        %1645 = vdwg.mxu0
        %1646 = vmatpush.bf16.msra.mxu0 %v1571
        %1647 = vmatpush.bf16.msra.mxu0 %v1569
        %1648 = vmatpush.bf16.msra.mxu0 %v1567
        %1649 = vmatpush.bf16.msra.mxu0 %v1565
        %1650 = vmatpush.bf16.msra.mxu0 %v1563
        %1651 = vmatpush.bf16.msra.mxu0 %v1561
        %1652 = vmatpush.bf16.msra.mxu0 %v1559
        %1653 = vmatpush.bf16.msra.mxu0 %v1557
        %1654 = vmatmul.bf16.gmra.mxu0 %v636
        %v1655 = vpop.f32.mrf.mxu0
        %v1656 = vadd.f32 %v1457, %v1655
        %v1657 = vpop.f32.mrf.mxu0
        %1658 = vdwg.mxu0
        %1659 = vmatpush.bf16.msra.mxu0 %v1587
        %1660 = vmatpush.bf16.msra.mxu0 %v1585
        %1661 = vmatpush.bf16.msra.mxu0 %v1583
        %1662 = vmatpush.bf16.msra.mxu0 %v1581
        %1663 = vmatpush.bf16.msra.mxu0 %v1579
        %1664 = vmatpush.bf16.msra.mxu0 %v1577
        %1665 = vmatpush.bf16.msra.mxu0 %v1575
        %1666 = vmatpush.bf16.msra.mxu0 %v1573
        %1667 = vmatmul.bf16.gmra.mxu0 %v637
        %v1668 = vpop.f32.mrf.mxu0
        %v1669 = vadd.f32 %v1656, %v1668
        %v1670 = vpop.f32.mrf.mxu0
        %1671 = vdwg.mxu0
        %v1672 = vpack.c.bf16 %v1643, %v1643
        %v1673 = vpack.c.bf16 %v1669, %v1669
        %s1674 = scalar_lea.vmem %s6, 768
        %v1675 = vld [vmem:[%s1674] sm:$0xff]
        %v1676 = vld [vmem:[%s1674 + $0x8] sm:$0xff]
        %v1677 = vld [vmem:[%s1674 + $0x10] sm:$0xff]
        %v1678 = vld [vmem:[%s1674 + $0x18] sm:$0xff]
        %v1679 = vld [vmem:[%s1674 + $0x20] sm:$0xff]
        %v1680 = vld [vmem:[%s1674 + $0x28] sm:$0xff]
        %v1681 = vld [vmem:[%s1674 + $0x30] sm:$0xff]
        %v1682 = vld [vmem:[%s1674 + $0x38] sm:$0xff]
        %v1683 = vld [vmem:[%s1674 + $0x40] sm:$0xff]
        %v1684 = vld [vmem:[%s1674 + $0x48] sm:$0xff]
        %v1685 = vld [vmem:[%s1674 + $0x50] sm:$0xff]
        %v1686 = vld [vmem:[%s1674 + $0x58] sm:$0xff]
        %v1687 = vld [vmem:[%s1674 + $0x60] sm:$0xff]
        %v1688 = vld [vmem:[%s1674 + $0x68] sm:$0xff]
        %v1689 = vld [vmem:[%s1674 + $0x70] sm:$0xff]
        %v1690 = vld [vmem:[%s1674 + $0x78] sm:$0xff]
        %v1691 = vld [vmem:[%s1674 + $0x80] sm:$0xff]
        %v1692 = vld [vmem:[%s1674 + $0x88] sm:$0xff]
        %v1693 = vld [vmem:[%s1674 + $0x90] sm:$0xff]
        %v1694 = vld [vmem:[%s1674 + $0x98] sm:$0xff]
        %v1695 = vld [vmem:[%s1674 + $0xa0] sm:$0xff]
        %v1696 = vld [vmem:[%s1674 + $0xa8] sm:$0xff]
        %v1697 = vld [vmem:[%s1674 + $0xb0] sm:$0xff]
        %v1698 = vld [vmem:[%s1674 + $0xb8] sm:$0xff]
        %v1699 = vld [vmem:[%s1674 + $0xc0] sm:$0xff]
        %v1700 = vld [vmem:[%s1674 + $0xc8] sm:$0xff]
        %v1701 = vld [vmem:[%s1674 + $0xd0] sm:$0xff]
        %v1702 = vld [vmem:[%s1674 + $0xd8] sm:$0xff]
        %v1703 = vld [vmem:[%s1674 + $0xe0] sm:$0xff]
        %v1704 = vld [vmem:[%s1674 + $0xe8] sm:$0xff]
        %v1705 = vld [vmem:[%s1674 + $0xf0] sm:$0xff]
        %v1706 = vld [vmem:[%s1674 + $0xf8] sm:$0xff]
        %s1707 = scalar_lea.vmem %s7, 6
        %v1708 = vld [vmem:[%s1707] sm:$0x3]
        %v1710 = vperm.slane %v1708, 0
        %v1711 = vperm.slane %v1708, 1
        %v1746 = vunpack.c.l.b16 %v1675
        %v1747 = vunpack.c.h.b16 %v1675
        %v1748 = vunpack.c.l.b16 %v1676
        %v1749 = vunpack.c.h.b16 %v1676
        %v1750 = vunpack.c.l.b16 %v1677
        %v1751 = vunpack.c.h.b16 %v1677
        %v1752 = vunpack.c.l.b16 %v1678
        %v1753 = vunpack.c.h.b16 %v1678
        %v1754 = vunpack.c.l.b16 %v1679
        %v1755 = vunpack.c.h.b16 %v1679
        %v1756 = vunpack.c.l.b16 %v1680
        %v1757 = vunpack.c.h.b16 %v1680
        %v1758 = vunpack.c.l.b16 %v1681
        %v1759 = vunpack.c.h.b16 %v1681
        %v1760 = vunpack.c.l.b16 %v1682
        %v1761 = vunpack.c.h.b16 %v1682
        %v1762 = vunpack.c.l.b16 %v1683
        %v1763 = vunpack.c.h.b16 %v1683
        %v1764 = vunpack.c.l.b16 %v1684
        %v1765 = vunpack.c.h.b16 %v1684
        %v1766 = vunpack.c.l.b16 %v1685
        %v1767 = vunpack.c.h.b16 %v1685
        %v1768 = vunpack.c.l.b16 %v1686
        %v1769 = vunpack.c.h.b16 %v1686
        %v1770 = vunpack.c.l.b16 %v1687
        %v1771 = vunpack.c.h.b16 %v1687
        %v1772 = vunpack.c.l.b16 %v1688
        %v1773 = vunpack.c.h.b16 %v1688
        %v1774 = vunpack.c.l.b16 %v1689
        %v1775 = vunpack.c.h.b16 %v1689
        %v1776 = vunpack.c.l.b16 %v1690
        %v1777 = vunpack.c.h.b16 %v1690
        %v1778 = vunpack.c.l.b16 %v1691
        %v1779 = vunpack.c.h.b16 %v1691
        %v1780 = vunpack.c.l.b16 %v1692
        %v1781 = vunpack.c.h.b16 %v1692
        %v1782 = vunpack.c.l.b16 %v1693
        %v1783 = vunpack.c.h.b16 %v1693
        %v1784 = vunpack.c.l.b16 %v1694
        %v1785 = vunpack.c.h.b16 %v1694
        %v1786 = vunpack.c.l.b16 %v1695
        %v1787 = vunpack.c.h.b16 %v1695
        %v1788 = vunpack.c.l.b16 %v1696
        %v1789 = vunpack.c.h.b16 %v1696
        %v1790 = vunpack.c.l.b16 %v1697
        %v1791 = vunpack.c.h.b16 %v1697
        %v1792 = vunpack.c.l.b16 %v1698
        %v1793 = vunpack.c.h.b16 %v1698
        %v1794 = vunpack.c.l.b16 %v1699
        %v1795 = vunpack.c.h.b16 %v1699
        %v1796 = vunpack.c.l.b16 %v1700
        %v1797 = vunpack.c.h.b16 %v1700
        %v1798 = vunpack.c.l.b16 %v1701
        %v1799 = vunpack.c.h.b16 %v1701
        %v1800 = vunpack.c.l.b16 %v1702
        %v1801 = vunpack.c.h.b16 %v1702
        %v1802 = vunpack.c.l.b16 %v1703
        %v1803 = vunpack.c.h.b16 %v1703
        %v1804 = vunpack.c.l.b16 %v1704
        %v1805 = vunpack.c.h.b16 %v1704
        %v1806 = vunpack.c.l.b16 %v1705
        %v1807 = vunpack.c.h.b16 %v1705
        %v1808 = vunpack.c.l.b16 %v1706
        %v1809 = vunpack.c.h.b16 %v1706
        %v1810 = vpack.c.b16 %v1748, %v1746
        %v1811 = vpack.c.b16 %v1749, %v1747
        %v1812 = vpack.c.b16 %v1752, %v1750
        %v1813 = vpack.c.b16 %v1753, %v1751
        %v1814 = vpack.c.b16 %v1756, %v1754
        %v1815 = vpack.c.b16 %v1757, %v1755
        %v1816 = vpack.c.b16 %v1760, %v1758
        %v1817 = vpack.c.b16 %v1761, %v1759
        %v1818 = vpack.c.b16 %v1764, %v1762
        %v1819 = vpack.c.b16 %v1765, %v1763
        %v1820 = vpack.c.b16 %v1768, %v1766
        %v1821 = vpack.c.b16 %v1769, %v1767
        %v1822 = vpack.c.b16 %v1772, %v1770
        %v1823 = vpack.c.b16 %v1773, %v1771
        %v1824 = vpack.c.b16 %v1776, %v1774
        %v1825 = vpack.c.b16 %v1777, %v1775
        %v1826 = vpack.c.b16 %v1780, %v1778
        %v1827 = vpack.c.b16 %v1781, %v1779
        %v1828 = vpack.c.b16 %v1784, %v1782
        %v1829 = vpack.c.b16 %v1785, %v1783
        %v1830 = vpack.c.b16 %v1788, %v1786
        %v1831 = vpack.c.b16 %v1789, %v1787
        %v1832 = vpack.c.b16 %v1792, %v1790
        %v1833 = vpack.c.b16 %v1793, %v1791
        %v1834 = vpack.c.b16 %v1796, %v1794
        %v1835 = vpack.c.b16 %v1797, %v1795
        %v1836 = vpack.c.b16 %v1800, %v1798
        %v1837 = vpack.c.b16 %v1801, %v1799
        %v1838 = vpack.c.b16 %v1804, %v1802
        %v1839 = vpack.c.b16 %v1805, %v1803
        %v1840 = vpack.c.b16 %v1808, %v1806
        %v1841 = vpack.c.b16 %v1809, %v1807
        %1874 = vmatpush.bf16.msra.mxu0 %v1824
        %1875 = vmatpush.bf16.msra.mxu0 %v1822
        %1876 = vmatpush.bf16.msra.mxu0 %v1820
        %1877 = vmatpush.bf16.msra.mxu0 %v1818
        %1878 = vmatpush.bf16.msra.mxu0 %v1816
        %1879 = vmatpush.bf16.msra.mxu0 %v1814
        %1880 = vmatpush.bf16.msra.mxu0 %v1812
        %1881 = vmatpush.bf16.msra.mxu0 %v1810
        %1882 = vmatmul.bf16.gmra.mxu0 %v636
        %v1883 = vpop.f32.mrf.mxu0
        %v1884 = vadd.f32 %v1710, %v1883
        %v1885 = vpop.f32.mrf.mxu0
        %1886 = vdwg.mxu0
        %1887 = vmatpush.bf16.msra.mxu0 %v1840
        %1888 = vmatpush.bf16.msra.mxu0 %v1838
        %1889 = vmatpush.bf16.msra.mxu0 %v1836
        %1890 = vmatpush.bf16.msra.mxu0 %v1834
        %1891 = vmatpush.bf16.msra.mxu0 %v1832
        %1892 = vmatpush.bf16.msra.mxu0 %v1830
        %1893 = vmatpush.bf16.msra.mxu0 %v1828
        %1894 = vmatpush.bf16.msra.mxu0 %v1826
        %1895 = vmatmul.bf16.gmra.mxu0 %v637
        %v1896 = vpop.f32.mrf.mxu0
        %v1897 = vadd.f32 %v1884, %v1896
        %v1898 = vpop.f32.mrf.mxu0
        %1899 = vdwg.mxu0
        %1900 = vmatpush.bf16.msra.mxu0 %v1825
        %1901 = vmatpush.bf16.msra.mxu0 %v1823
        %1902 = vmatpush.bf16.msra.mxu0 %v1821
        %1903 = vmatpush.bf16.msra.mxu0 %v1819
        %1904 = vmatpush.bf16.msra.mxu0 %v1817
        %1905 = vmatpush.bf16.msra.mxu0 %v1815
        %1906 = vmatpush.bf16.msra.mxu0 %v1813
        %1907 = vmatpush.bf16.msra.mxu0 %v1811
        %1908 = vmatmul.bf16.gmra.mxu0 %v636
        %v1909 = vpop.f32.mrf.mxu0
        %v1910 = vadd.f32 %v1711, %v1909
        %v1911 = vpop.f32.mrf.mxu0
        %1912 = vdwg.mxu0
        %1913 = vmatpush.bf16.msra.mxu0 %v1841
        %1914 = vmatpush.bf16.msra.mxu0 %v1839
        %1915 = vmatpush.bf16.msra.mxu0 %v1837
        %1916 = vmatpush.bf16.msra.mxu0 %v1835
        %1917 = vmatpush.bf16.msra.mxu0 %v1833
        %1918 = vmatpush.bf16.msra.mxu0 %v1831
        %1919 = vmatpush.bf16.msra.mxu0 %v1829
        %1920 = vmatpush.bf16.msra.mxu0 %v1827
        %1921 = vmatmul.bf16.gmra.mxu0 %v637
        %v1922 = vpop.f32.mrf.mxu0
        %v1923 = vadd.f32 %v1910, %v1922
        %v1924 = vpop.f32.mrf.mxu0
        %1925 = vdwg.mxu0
        %v1926 = vpack.c.bf16 %v1897, %v1897
        %v1927 = vpack.c.bf16 %v1923, %v1923
        %1928 = vmatpush.bf16.xpose.msra.mxu0 0
        %1929 = vmatpush.bf16.xpose.msra.mxu0 0
        %1930 = vmatpush.bf16.xpose.msra.mxu0 0
        %1931 = vmatpush.bf16.xpose.msra.mxu0 0
        %1932 = vmatpush.bf16.xpose.msra.mxu0 0
        %1933 = vmatpush.bf16.xpose.msra.mxu0 0
        %1934 = vmatpush.bf16.xpose.msra.mxu0 0
        %1935 = vmatpush.bf16.xpose.msra.mxu0 %v834
        %1936 = vmatmul.bf16.gmra.mxu0 %v1164
        %v1937 = vpop.f32.mrf.mxu0
        %v1938 = vadd.f32 0.0, %v1937
        %v1939 = vpop.f32.mrf.mxu0
        %1940 = vdwg.mxu0
        %1941 = vmatpush.bf16.xpose.msra.mxu0 0
        %1942 = vmatpush.bf16.xpose.msra.mxu0 0
        %1943 = vmatpush.bf16.xpose.msra.mxu0 0
        %1944 = vmatpush.bf16.xpose.msra.mxu0 0
        %1945 = vmatpush.bf16.xpose.msra.mxu0 0
        %1946 = vmatpush.bf16.xpose.msra.mxu0 0
        %1947 = vmatpush.bf16.xpose.msra.mxu0 0
        %1948 = vmatpush.bf16.xpose.msra.mxu0 %v835
        %1949 = vmatmul.bf16.gmra.mxu0 %v1165
        %v1950 = vpop.f32.mrf.mxu0
        %v1951 = vadd.f32 %v1938, %v1950
        %v1952 = vpop.f32.mrf.mxu0
        %1953 = vdwg.mxu0
        %vm1954 = vcmask 64512
        %v1955 = vsel %vm1954, %v1951, -inf
        %1956 = vmax.xlane.f32.xlu0 %v1955
        %v1957 = vpop.xlane.xlu0 %1956
        %v1958 = vsub.f32 %v1951, %v1957
        %v1959 = vmul.f32 %v1958, 1.442695
        %v1960 = vpow.pop %v1959
        %v1961 = vsel %vm1954, %v1960, 0.0
        %1962 = vadd.xlane.f32.xlu0 %v1961
        %v1963 = vpop.xlane.xlu0 %1962
        %v1964 = vrcp.pop %v1963
        %v1965 = vmul.f32 %v1960, %v1964
        %v1966 = vpack.c.bf16 %v1965, %v1965
        %v1968 = vsel %vm1954, %v1966, 0
        %vm1970 = vcmask 1043456
        %v1972 = vsel %vm1970, %v834, 0
        %v1975 = vsel %vm1970, %v835, 0
        %1977 = vmatpush.bf16.msra.mxu0 0
        %1978 = vmatpush.bf16.msra.mxu0 0
        %1979 = vmatpush.bf16.msra.mxu0 0
        %1980 = vmatpush.bf16.msra.mxu0 0
        %1981 = vmatpush.bf16.msra.mxu0 0
        %1982 = vmatpush.bf16.msra.mxu0 0
        %1983 = vmatpush.bf16.msra.mxu0 0
        %1984 = vmatpush.bf16.msra.mxu0 %v1972
        %1985 = vmatmul.bf16.gmra.mxu0 %v1968
        %v1986 = vpop.f32.mrf.mxu0
        %v1987 = vadd.f32 0.0, %v1986
        %v1988 = vpop.f32.mrf.mxu0
        %1989 = vdwg.mxu0
        %1990 = vmatpush.bf16.msra.mxu0 0
        %1991 = vmatpush.bf16.msra.mxu0 0
        %1992 = vmatpush.bf16.msra.mxu0 0
        %1993 = vmatpush.bf16.msra.mxu0 0
        %1994 = vmatpush.bf16.msra.mxu0 0
        %1995 = vmatpush.bf16.msra.mxu0 0
        %1996 = vmatpush.bf16.msra.mxu0 0
        %1997 = vmatpush.bf16.msra.mxu0 %v1975
        %1998 = vmatmul.bf16.gmra.mxu0 %v1968
        %v1999 = vpop.f32.mrf.mxu0
        %v2000 = vadd.f32 0.0, %v1999
        %v2001 = vpop.f32.mrf.mxu0
        %2002 = vdwg.mxu0
        %v2003 = vpack.c.bf16 %v1987, %v1987
        %v2004 = vpack.c.bf16 %v2000, %v2000
        %v2005 = vld [vmem:[%s8] sm:$0xff]
        %v2006 = vld [vmem:[%s8 + $0x8] sm:$0xff]
        %v2007 = vld [vmem:[%s8 + $0x10] sm:$0xff]
        %v2008 = vld [vmem:[%s8 + $0x18] sm:$0xff]
        %v2009 = vld [vmem:[%s8 + $0x20] sm:$0xff]
        %v2010 = vld [vmem:[%s8 + $0x28] sm:$0xff]
        %v2011 = vld [vmem:[%s8 + $0x30] sm:$0xff]
        %v2012 = vld [vmem:[%s8 + $0x38] sm:$0xff]
        %v2013 = vld [vmem:[%s8 + $0x40] sm:$0xff]
        %v2014 = vld [vmem:[%s8 + $0x48] sm:$0xff]
        %v2015 = vld [vmem:[%s8 + $0x50] sm:$0xff]
        %v2016 = vld [vmem:[%s8 + $0x58] sm:$0xff]
        %v2017 = vld [vmem:[%s8 + $0x60] sm:$0xff]
        %v2018 = vld [vmem:[%s8 + $0x68] sm:$0xff]
        %v2019 = vld [vmem:[%s8 + $0x70] sm:$0xff]
        %v2020 = vld [vmem:[%s8 + $0x78] sm:$0xff]
        %v2021 = vld [vmem:[%s8 + $0x80] sm:$0xff]
        %v2022 = vld [vmem:[%s8 + $0x88] sm:$0xff]
        %v2023 = vld [vmem:[%s8 + $0x90] sm:$0xff]
        %v2024 = vld [vmem:[%s8 + $0x98] sm:$0xff]
        %v2025 = vld [vmem:[%s8 + $0xa0] sm:$0xff]
        %v2026 = vld [vmem:[%s8 + $0xa8] sm:$0xff]
        %v2027 = vld [vmem:[%s8 + $0xb0] sm:$0xff]
        %v2028 = vld [vmem:[%s8 + $0xb8] sm:$0xff]
        %v2029 = vld [vmem:[%s8 + $0xc0] sm:$0xff]
        %v2030 = vld [vmem:[%s8 + $0xc8] sm:$0xff]
        %v2031 = vld [vmem:[%s8 + $0xd0] sm:$0xff]
        %v2032 = vld [vmem:[%s8 + $0xd8] sm:$0xff]
        %v2033 = vld [vmem:[%s8 + $0xe0] sm:$0xff]
        %v2034 = vld [vmem:[%s8 + $0xe8] sm:$0xff]
        %v2035 = vld [vmem:[%s8 + $0xf0] sm:$0xff]
        %v2036 = vld [vmem:[%s8 + $0xf8] sm:$0xff]
        %2037 = vmatpush.bf16.xpose.msra.mxu0 0
        %2038 = vmatpush.bf16.xpose.msra.mxu0 0
        %2039 = vmatpush.bf16.xpose.msra.mxu0 0
        %2040 = vmatpush.bf16.xpose.msra.mxu0 0
        %2041 = vmatpush.bf16.xpose.msra.mxu0 0
        %2042 = vmatpush.bf16.xpose.msra.mxu0 0
        %2043 = vmatpush.bf16.xpose.msra.mxu0 0
        %2044 = vmatpush.bf16.xpose.msra.mxu0 %v834
        %2045 = vmatmul.bf16.gmra.mxu0 %v1418
        %v2046 = vpop.f32.mrf.mxu0
        %v2047 = vadd.f32 0.0, %v2046
        %v2048 = vpop.f32.mrf.mxu0
        %2049 = vdwg.mxu0
        %2050 = vmatpush.bf16.xpose.msra.mxu0 0
        %2051 = vmatpush.bf16.xpose.msra.mxu0 0
        %2052 = vmatpush.bf16.xpose.msra.mxu0 0
        %2053 = vmatpush.bf16.xpose.msra.mxu0 0
        %2054 = vmatpush.bf16.xpose.msra.mxu0 0
        %2055 = vmatpush.bf16.xpose.msra.mxu0 0
        %2056 = vmatpush.bf16.xpose.msra.mxu0 0
        %2057 = vmatpush.bf16.xpose.msra.mxu0 %v835
        %2058 = vmatmul.bf16.gmra.mxu0 %v1419
        %v2059 = vpop.f32.mrf.mxu0
        %v2060 = vadd.f32 %v2047, %v2059
        %v2061 = vpop.f32.mrf.mxu0
        %2062 = vdwg.mxu0
        %v2063 = vsel %vm1954, %v2060, -inf
        %2064 = vmax.xlane.f32.xlu0 %v2063
        %v2065 = vpop.xlane.xlu0 %2064
        %v2066 = vsub.f32 %v2060, %v2065
        %v2067 = vmul.f32 %v2066, 1.442695
        %v2068 = vpow.pop %v2067
        %v2069 = vsel %vm1954, %v2068, 0.0
        %2070 = vadd.xlane.f32.xlu0 %v2069
        %v2071 = vpop.xlane.xlu0 %2070
        %v2072 = vrcp.pop %v2071
        %v2073 = vmul.f32 %v2068, %v2072
        %v2074 = vpack.c.bf16 %v2073, %v2073
        %v2076 = vsel %vm1954, %v2074, 0
        %2078 = vmatpush.bf16.msra.mxu0 0
        %2079 = vmatpush.bf16.msra.mxu0 0
        %2080 = vmatpush.bf16.msra.mxu0 0
        %2081 = vmatpush.bf16.msra.mxu0 0
        %2082 = vmatpush.bf16.msra.mxu0 0
        %2083 = vmatpush.bf16.msra.mxu0 0
        %2084 = vmatpush.bf16.msra.mxu0 0
        %2085 = vmatpush.bf16.msra.mxu0 %v1972
        %2086 = vmatmul.bf16.gmra.mxu0 %v2076
        %v2087 = vpop.f32.mrf.mxu0
        %v2088 = vadd.f32 0.0, %v2087
        %v2089 = vpop.f32.mrf.mxu0
        %2090 = vdwg.mxu0
        %2091 = vmatpush.bf16.msra.mxu0 0
        %2092 = vmatpush.bf16.msra.mxu0 0
        %2093 = vmatpush.bf16.msra.mxu0 0
        %2094 = vmatpush.bf16.msra.mxu0 0
        %2095 = vmatpush.bf16.msra.mxu0 0
        %2096 = vmatpush.bf16.msra.mxu0 0
        %2097 = vmatpush.bf16.msra.mxu0 0
        %2098 = vmatpush.bf16.msra.mxu0 %v1975
        %2099 = vmatmul.bf16.gmra.mxu0 %v2076
        %v2100 = vpop.f32.mrf.mxu0
        %v2101 = vadd.f32 0.0, %v2100
        %v2102 = vpop.f32.mrf.mxu0
        %2103 = vdwg.mxu0
        %v2104 = vpack.c.bf16 %v2088, %v2088
        %v2105 = vpack.c.bf16 %v2101, %v2101
        %s2106 = scalar_lea.vmem %s8, 256
        %v2107 = vld [vmem:[%s2106] sm:$0xff]
        %v2108 = vld [vmem:[%s2106 + $0x8] sm:$0xff]
        %v2109 = vld [vmem:[%s2106 + $0x10] sm:$0xff]
        %v2110 = vld [vmem:[%s2106 + $0x18] sm:$0xff]
        %v2111 = vld [vmem:[%s2106 + $0x20] sm:$0xff]
        %v2112 = vld [vmem:[%s2106 + $0x28] sm:$0xff]
        %v2113 = vld [vmem:[%s2106 + $0x30] sm:$0xff]
        %v2114 = vld [vmem:[%s2106 + $0x38] sm:$0xff]
        %v2115 = vld [vmem:[%s2106 + $0x40] sm:$0xff]
        %v2116 = vld [vmem:[%s2106 + $0x48] sm:$0xff]
        %v2117 = vld [vmem:[%s2106 + $0x50] sm:$0xff]
        %v2118 = vld [vmem:[%s2106 + $0x58] sm:$0xff]
        %v2119 = vld [vmem:[%s2106 + $0x60] sm:$0xff]
        %v2120 = vld [vmem:[%s2106 + $0x68] sm:$0xff]
        %v2121 = vld [vmem:[%s2106 + $0x70] sm:$0xff]
        %v2122 = vld [vmem:[%s2106 + $0x78] sm:$0xff]
        %v2123 = vld [vmem:[%s2106 + $0x80] sm:$0xff]
        %v2124 = vld [vmem:[%s2106 + $0x88] sm:$0xff]
        %v2125 = vld [vmem:[%s2106 + $0x90] sm:$0xff]
        %v2126 = vld [vmem:[%s2106 + $0x98] sm:$0xff]
        %v2127 = vld [vmem:[%s2106 + $0xa0] sm:$0xff]
        %v2128 = vld [vmem:[%s2106 + $0xa8] sm:$0xff]
        %v2129 = vld [vmem:[%s2106 + $0xb0] sm:$0xff]
        %v2130 = vld [vmem:[%s2106 + $0xb8] sm:$0xff]
        %v2131 = vld [vmem:[%s2106 + $0xc0] sm:$0xff]
        %v2132 = vld [vmem:[%s2106 + $0xc8] sm:$0xff]
        %v2133 = vld [vmem:[%s2106 + $0xd0] sm:$0xff]
        %v2134 = vld [vmem:[%s2106 + $0xd8] sm:$0xff]
        %v2135 = vld [vmem:[%s2106 + $0xe0] sm:$0xff]
        %v2136 = vld [vmem:[%s2106 + $0xe8] sm:$0xff]
        %v2137 = vld [vmem:[%s2106 + $0xf0] sm:$0xff]
        %v2138 = vld [vmem:[%s2106 + $0xf8] sm:$0xff]
        %v2171 = vunpack.c.l.b16 %v2107
        %v2172 = vunpack.c.h.b16 %v2107
        %v2173 = vunpack.c.l.b16 %v2108
        %v2174 = vunpack.c.h.b16 %v2108
        %v2175 = vunpack.c.l.b16 %v2109
        %v2176 = vunpack.c.h.b16 %v2109
        %v2177 = vunpack.c.l.b16 %v2110
        %v2178 = vunpack.c.h.b16 %v2110
        %v2179 = vunpack.c.l.b16 %v2111
        %v2180 = vunpack.c.h.b16 %v2111
        %v2181 = vunpack.c.l.b16 %v2112
        %v2182 = vunpack.c.h.b16 %v2112
        %v2183 = vunpack.c.l.b16 %v2113
        %v2184 = vunpack.c.h.b16 %v2113
        %v2185 = vunpack.c.l.b16 %v2114
        %v2186 = vunpack.c.h.b16 %v2114
        %v2187 = vunpack.c.l.b16 %v2115
        %v2188 = vunpack.c.h.b16 %v2115
        %v2189 = vunpack.c.l.b16 %v2116
        %v2190 = vunpack.c.h.b16 %v2116
        %v2191 = vunpack.c.l.b16 %v2117
        %v2192 = vunpack.c.h.b16 %v2117
        %v2193 = vunpack.c.l.b16 %v2118
        %v2194 = vunpack.c.h.b16 %v2118
        %v2195 = vunpack.c.l.b16 %v2119
        %v2196 = vunpack.c.h.b16 %v2119
        %v2197 = vunpack.c.l.b16 %v2120
        %v2198 = vunpack.c.h.b16 %v2120
        %v2199 = vunpack.c.l.b16 %v2121
        %v2200 = vunpack.c.h.b16 %v2121
        %v2201 = vunpack.c.l.b16 %v2122
        %v2202 = vunpack.c.h.b16 %v2122
        %v2203 = vunpack.c.l.b16 %v2123
        %v2204 = vunpack.c.h.b16 %v2123
        %v2205 = vunpack.c.l.b16 %v2124
        %v2206 = vunpack.c.h.b16 %v2124
        %v2207 = vunpack.c.l.b16 %v2125
        %v2208 = vunpack.c.h.b16 %v2125
        %v2209 = vunpack.c.l.b16 %v2126
        %v2210 = vunpack.c.h.b16 %v2126
        %v2211 = vunpack.c.l.b16 %v2127
        %v2212 = vunpack.c.h.b16 %v2127
        %v2213 = vunpack.c.l.b16 %v2128
        %v2214 = vunpack.c.h.b16 %v2128
        %v2215 = vunpack.c.l.b16 %v2129
        %v2216 = vunpack.c.h.b16 %v2129
        %v2217 = vunpack.c.l.b16 %v2130
        %v2218 = vunpack.c.h.b16 %v2130
        %v2219 = vunpack.c.l.b16 %v2131
        %v2220 = vunpack.c.h.b16 %v2131
        %v2221 = vunpack.c.l.b16 %v2132
        %v2222 = vunpack.c.h.b16 %v2132
        %v2223 = vunpack.c.l.b16 %v2133
        %v2224 = vunpack.c.h.b16 %v2133
        %v2225 = vunpack.c.l.b16 %v2134
        %v2226 = vunpack.c.h.b16 %v2134
        %v2227 = vunpack.c.l.b16 %v2135
        %v2228 = vunpack.c.h.b16 %v2135
        %v2229 = vunpack.c.l.b16 %v2136
        %v2230 = vunpack.c.h.b16 %v2136
        %v2231 = vunpack.c.l.b16 %v2137
        %v2232 = vunpack.c.h.b16 %v2137
        %v2233 = vunpack.c.l.b16 %v2138
        %v2234 = vunpack.c.h.b16 %v2138
        %v2235 = vpack.c.b16 %v2173, %v2171
        %v2236 = vpack.c.b16 %v2174, %v2172
        %v2237 = vpack.c.b16 %v2177, %v2175
        %v2238 = vpack.c.b16 %v2178, %v2176
        %v2239 = vpack.c.b16 %v2181, %v2179
        %v2240 = vpack.c.b16 %v2182, %v2180
        %v2241 = vpack.c.b16 %v2185, %v2183
        %v2242 = vpack.c.b16 %v2186, %v2184
        %v2243 = vpack.c.b16 %v2189, %v2187
        %v2244 = vpack.c.b16 %v2190, %v2188
        %v2245 = vpack.c.b16 %v2193, %v2191
        %v2246 = vpack.c.b16 %v2194, %v2192
        %v2247 = vpack.c.b16 %v2197, %v2195
        %v2248 = vpack.c.b16 %v2198, %v2196
        %v2249 = vpack.c.b16 %v2201, %v2199
        %v2250 = vpack.c.b16 %v2202, %v2200
        %v2251 = vpack.c.b16 %v2205, %v2203
        %v2252 = vpack.c.b16 %v2206, %v2204
        %v2253 = vpack.c.b16 %v2209, %v2207
        %v2254 = vpack.c.b16 %v2210, %v2208
        %v2255 = vpack.c.b16 %v2213, %v2211
        %v2256 = vpack.c.b16 %v2214, %v2212
        %v2257 = vpack.c.b16 %v2217, %v2215
        %v2258 = vpack.c.b16 %v2218, %v2216
        %v2259 = vpack.c.b16 %v2221, %v2219
        %v2260 = vpack.c.b16 %v2222, %v2220
        %v2261 = vpack.c.b16 %v2225, %v2223
        %v2262 = vpack.c.b16 %v2226, %v2224
        %v2263 = vpack.c.b16 %v2229, %v2227
        %v2264 = vpack.c.b16 %v2230, %v2228
        %v2265 = vpack.c.b16 %v2233, %v2231
        %v2266 = vpack.c.b16 %v2234, %v2232
        %2299 = vmatpush.bf16.msra.mxu0 %v2249
        %2300 = vmatpush.bf16.msra.mxu0 %v2247
        %2301 = vmatpush.bf16.msra.mxu0 %v2245
        %2302 = vmatpush.bf16.msra.mxu0 %v2243
        %2303 = vmatpush.bf16.msra.mxu0 %v2241
        %2304 = vmatpush.bf16.msra.mxu0 %v2239
        %2305 = vmatpush.bf16.msra.mxu0 %v2237
        %2306 = vmatpush.bf16.msra.mxu0 %v2235
        %2307 = vmatmul.bf16.gmra.mxu0 %v2104
        %v2308 = vpop.f32.mrf.mxu0
        %v2309 = vadd.f32 0.0, %v2308
        %v2310 = vpop.f32.mrf.mxu0
        %2311 = vdwg.mxu0
        %2312 = vmatpush.bf16.msra.mxu0 %v2265
        %2313 = vmatpush.bf16.msra.mxu0 %v2263
        %2314 = vmatpush.bf16.msra.mxu0 %v2261
        %2315 = vmatpush.bf16.msra.mxu0 %v2259
        %2316 = vmatpush.bf16.msra.mxu0 %v2257
        %2317 = vmatpush.bf16.msra.mxu0 %v2255
        %2318 = vmatpush.bf16.msra.mxu0 %v2253
        %2319 = vmatpush.bf16.msra.mxu0 %v2251
        %2320 = vmatmul.bf16.gmra.mxu0 %v2105
        %v2321 = vpop.f32.mrf.mxu0
        %v2322 = vadd.f32 %v2309, %v2321
        %v2323 = vpop.f32.mrf.mxu0
        %2324 = vdwg.mxu0
        %2325 = vmatpush.bf16.msra.mxu0 %v2250
        %2326 = vmatpush.bf16.msra.mxu0 %v2248
        %2327 = vmatpush.bf16.msra.mxu0 %v2246
        %2328 = vmatpush.bf16.msra.mxu0 %v2244
        %2329 = vmatpush.bf16.msra.mxu0 %v2242
        %2330 = vmatpush.bf16.msra.mxu0 %v2240
        %2331 = vmatpush.bf16.msra.mxu0 %v2238
        %2332 = vmatpush.bf16.msra.mxu0 %v2236
        %2333 = vmatmul.bf16.gmra.mxu0 %v2104
        %v2334 = vpop.f32.mrf.mxu0
        %v2335 = vadd.f32 0.0, %v2334
        %v2336 = vpop.f32.mrf.mxu0
        %2337 = vdwg.mxu0
        %2338 = vmatpush.bf16.msra.mxu0 %v2266
        %2339 = vmatpush.bf16.msra.mxu0 %v2264
        %2340 = vmatpush.bf16.msra.mxu0 %v2262
        %2341 = vmatpush.bf16.msra.mxu0 %v2260
        %2342 = vmatpush.bf16.msra.mxu0 %v2258
        %2343 = vmatpush.bf16.msra.mxu0 %v2256
        %2344 = vmatpush.bf16.msra.mxu0 %v2254
        %2345 = vmatpush.bf16.msra.mxu0 %v2252
        %2346 = vmatmul.bf16.gmra.mxu0 %v2105
        %v2347 = vpop.f32.mrf.mxu0
        %v2348 = vadd.f32 %v2335, %v2347
        %v2349 = vpop.f32.mrf.mxu0
        %2350 = vdwg.mxu0
        %v2383 = vunpack.c.l.b16 %v2005
        %v2384 = vunpack.c.h.b16 %v2005
        %v2385 = vunpack.c.l.b16 %v2006
        %v2386 = vunpack.c.h.b16 %v2006
        %v2387 = vunpack.c.l.b16 %v2007
        %v2388 = vunpack.c.h.b16 %v2007
        %v2389 = vunpack.c.l.b16 %v2008
        %v2390 = vunpack.c.h.b16 %v2008
        %v2391 = vunpack.c.l.b16 %v2009
        %v2392 = vunpack.c.h.b16 %v2009
        %v2393 = vunpack.c.l.b16 %v2010
        %v2394 = vunpack.c.h.b16 %v2010
        %v2395 = vunpack.c.l.b16 %v2011
        %v2396 = vunpack.c.h.b16 %v2011
        %v2397 = vunpack.c.l.b16 %v2012
        %v2398 = vunpack.c.h.b16 %v2012
        %v2399 = vunpack.c.l.b16 %v2013
        %v2400 = vunpack.c.h.b16 %v2013
        %v2401 = vunpack.c.l.b16 %v2014
        %v2402 = vunpack.c.h.b16 %v2014
        %v2403 = vunpack.c.l.b16 %v2015
        %v2404 = vunpack.c.h.b16 %v2015
        %v2405 = vunpack.c.l.b16 %v2016
        %v2406 = vunpack.c.h.b16 %v2016
        %v2407 = vunpack.c.l.b16 %v2017
        %v2408 = vunpack.c.h.b16 %v2017
        %v2409 = vunpack.c.l.b16 %v2018
        %v2410 = vunpack.c.h.b16 %v2018
        %v2411 = vunpack.c.l.b16 %v2019
        %v2412 = vunpack.c.h.b16 %v2019
        %v2413 = vunpack.c.l.b16 %v2020
        %v2414 = vunpack.c.h.b16 %v2020
        %v2415 = vunpack.c.l.b16 %v2021
        %v2416 = vunpack.c.h.b16 %v2021
        %v2417 = vunpack.c.l.b16 %v2022
        %v2418 = vunpack.c.h.b16 %v2022
        %v2419 = vunpack.c.l.b16 %v2023
        %v2420 = vunpack.c.h.b16 %v2023
        %v2421 = vunpack.c.l.b16 %v2024
        %v2422 = vunpack.c.h.b16 %v2024
        %v2423 = vunpack.c.l.b16 %v2025
        %v2424 = vunpack.c.h.b16 %v2025
        %v2425 = vunpack.c.l.b16 %v2026
        %v2426 = vunpack.c.h.b16 %v2026
        %v2427 = vunpack.c.l.b16 %v2027
        %v2428 = vunpack.c.h.b16 %v2027
        %v2429 = vunpack.c.l.b16 %v2028
        %v2430 = vunpack.c.h.b16 %v2028
        %v2431 = vunpack.c.l.b16 %v2029
        %v2432 = vunpack.c.h.b16 %v2029
        %v2433 = vunpack.c.l.b16 %v2030
        %v2434 = vunpack.c.h.b16 %v2030
        %v2435 = vunpack.c.l.b16 %v2031
        %v2436 = vunpack.c.h.b16 %v2031
        %v2437 = vunpack.c.l.b16 %v2032
        %v2438 = vunpack.c.h.b16 %v2032
        %v2439 = vunpack.c.l.b16 %v2033
        %v2440 = vunpack.c.h.b16 %v2033
        %v2441 = vunpack.c.l.b16 %v2034
        %v2442 = vunpack.c.h.b16 %v2034
        %v2443 = vunpack.c.l.b16 %v2035
        %v2444 = vunpack.c.h.b16 %v2035
        %v2445 = vunpack.c.l.b16 %v2036
        %v2446 = vunpack.c.h.b16 %v2036
        %v2447 = vpack.c.b16 %v2385, %v2383
        %v2448 = vpack.c.b16 %v2386, %v2384
        %v2449 = vpack.c.b16 %v2389, %v2387
        %v2450 = vpack.c.b16 %v2390, %v2388
        %v2451 = vpack.c.b16 %v2393, %v2391
        %v2452 = vpack.c.b16 %v2394, %v2392
        %v2453 = vpack.c.b16 %v2397, %v2395
        %v2454 = vpack.c.b16 %v2398, %v2396
        %v2455 = vpack.c.b16 %v2401, %v2399
        %v2456 = vpack.c.b16 %v2402, %v2400
        %v2457 = vpack.c.b16 %v2405, %v2403
        %v2458 = vpack.c.b16 %v2406, %v2404
        %v2459 = vpack.c.b16 %v2409, %v2407
        %v2460 = vpack.c.b16 %v2410, %v2408
        %v2461 = vpack.c.b16 %v2413, %v2411
        %v2462 = vpack.c.b16 %v2414, %v2412
        %v2463 = vpack.c.b16 %v2417, %v2415
        %v2464 = vpack.c.b16 %v2418, %v2416
        %v2465 = vpack.c.b16 %v2421, %v2419
        %v2466 = vpack.c.b16 %v2422, %v2420
        %v2467 = vpack.c.b16 %v2425, %v2423
        %v2468 = vpack.c.b16 %v2426, %v2424
        %v2469 = vpack.c.b16 %v2429, %v2427
        %v2470 = vpack.c.b16 %v2430, %v2428
        %v2471 = vpack.c.b16 %v2433, %v2431
        %v2472 = vpack.c.b16 %v2434, %v2432
        %v2473 = vpack.c.b16 %v2437, %v2435
        %v2474 = vpack.c.b16 %v2438, %v2436
        %v2475 = vpack.c.b16 %v2441, %v2439
        %v2476 = vpack.c.b16 %v2442, %v2440
        %v2477 = vpack.c.b16 %v2445, %v2443
        %v2478 = vpack.c.b16 %v2446, %v2444
        %2511 = vmatpush.bf16.msra.mxu0 %v2461
        %2512 = vmatpush.bf16.msra.mxu0 %v2459
        %2513 = vmatpush.bf16.msra.mxu0 %v2457
        %2514 = vmatpush.bf16.msra.mxu0 %v2455
        %2515 = vmatpush.bf16.msra.mxu0 %v2453
        %2516 = vmatpush.bf16.msra.mxu0 %v2451
        %2517 = vmatpush.bf16.msra.mxu0 %v2449
        %2518 = vmatpush.bf16.msra.mxu0 %v2447
        %2519 = vmatmul.bf16.gmra.mxu0 %v2003
        %v2520 = vpop.f32.mrf.mxu0
        %v2521 = vadd.f32 %v2322, %v2520
        %v2522 = vpop.f32.mrf.mxu0
        %2523 = vdwg.mxu0
        %2524 = vmatpush.bf16.msra.mxu0 %v2477
        %2525 = vmatpush.bf16.msra.mxu0 %v2475
        %2526 = vmatpush.bf16.msra.mxu0 %v2473
        %2527 = vmatpush.bf16.msra.mxu0 %v2471
        %2528 = vmatpush.bf16.msra.mxu0 %v2469
        %2529 = vmatpush.bf16.msra.mxu0 %v2467
        %2530 = vmatpush.bf16.msra.mxu0 %v2465
        %2531 = vmatpush.bf16.msra.mxu0 %v2463
        %2532 = vmatmul.bf16.gmra.mxu0 %v2004
        %v2533 = vpop.f32.mrf.mxu0
        %v2534 = vadd.f32 %v2521, %v2533
        %v2535 = vpop.f32.mrf.mxu0
        %2536 = vdwg.mxu0
        %2537 = vmatpush.bf16.msra.mxu0 %v2462
        %2538 = vmatpush.bf16.msra.mxu0 %v2460
        %2539 = vmatpush.bf16.msra.mxu0 %v2458
        %2540 = vmatpush.bf16.msra.mxu0 %v2456
        %2541 = vmatpush.bf16.msra.mxu0 %v2454
        %2542 = vmatpush.bf16.msra.mxu0 %v2452
        %2543 = vmatpush.bf16.msra.mxu0 %v2450
        %2544 = vmatpush.bf16.msra.mxu0 %v2448
        %2545 = vmatmul.bf16.gmra.mxu0 %v2003
        %v2546 = vpop.f32.mrf.mxu0
        %v2547 = vadd.f32 %v2348, %v2546
        %v2548 = vpop.f32.mrf.mxu0
        %2549 = vdwg.mxu0
        %2550 = vmatpush.bf16.msra.mxu0 %v2478
        %2551 = vmatpush.bf16.msra.mxu0 %v2476
        %2552 = vmatpush.bf16.msra.mxu0 %v2474
        %2553 = vmatpush.bf16.msra.mxu0 %v2472
        %2554 = vmatpush.bf16.msra.mxu0 %v2470
        %2555 = vmatpush.bf16.msra.mxu0 %v2468
        %2556 = vmatpush.bf16.msra.mxu0 %v2466
        %2557 = vmatpush.bf16.msra.mxu0 %v2464
        %2558 = vmatmul.bf16.gmra.mxu0 %v2004
        %v2559 = vpop.f32.mrf.mxu0
        %v2560 = vadd.f32 %v2547, %v2559
        %v2561 = vpop.f32.mrf.mxu0
        %2562 = vdwg.mxu0
        %2563 = vmatpush.bf16.xpose.msra.mxu0 0
        %2564 = vmatpush.bf16.xpose.msra.mxu0 0
        %2565 = vmatpush.bf16.xpose.msra.mxu0 0
        %2566 = vmatpush.bf16.xpose.msra.mxu0 0
        %2567 = vmatpush.bf16.xpose.msra.mxu0 0
        %2568 = vmatpush.bf16.xpose.msra.mxu0 0
        %2569 = vmatpush.bf16.xpose.msra.mxu0 0
        %2570 = vmatpush.bf16.xpose.msra.mxu0 %v834
        %2571 = vmatmul.bf16.gmra.mxu0 %v1672
        %v2572 = vpop.f32.mrf.mxu0
        %v2573 = vadd.f32 0.0, %v2572
        %v2574 = vpop.f32.mrf.mxu0
        %2575 = vdwg.mxu0
        %2576 = vmatpush.bf16.xpose.msra.mxu0 0
        %2577 = vmatpush.bf16.xpose.msra.mxu0 0
        %2578 = vmatpush.bf16.xpose.msra.mxu0 0
        %2579 = vmatpush.bf16.xpose.msra.mxu0 0
        %2580 = vmatpush.bf16.xpose.msra.mxu0 0
        %2581 = vmatpush.bf16.xpose.msra.mxu0 0
        %2582 = vmatpush.bf16.xpose.msra.mxu0 0
        %2583 = vmatpush.bf16.xpose.msra.mxu0 %v835
        %2584 = vmatmul.bf16.gmra.mxu0 %v1673
        %v2585 = vpop.f32.mrf.mxu0
        %v2586 = vadd.f32 %v2573, %v2585
        %v2587 = vpop.f32.mrf.mxu0
        %2588 = vdwg.mxu0
        %v2589 = vsel %vm1954, %v2586, -inf
        %2590 = vmax.xlane.f32.xlu0 %v2589
        %v2591 = vpop.xlane.xlu0 %2590
        %v2592 = vsub.f32 %v2586, %v2591
        %v2593 = vmul.f32 %v2592, 1.442695
        %v2594 = vpow.pop %v2593
        %v2595 = vsel %vm1954, %v2594, 0.0
        %2596 = vadd.xlane.f32.xlu0 %v2595
        %v2597 = vpop.xlane.xlu0 %2596
        %v2598 = vrcp.pop %v2597
        %v2599 = vmul.f32 %v2594, %v2598
        %v2600 = vpack.c.bf16 %v2599, %v2599
        %v2602 = vsel %vm1954, %v2600, 0
        %2604 = vmatpush.bf16.msra.mxu0 0
        %2605 = vmatpush.bf16.msra.mxu0 0
        %2606 = vmatpush.bf16.msra.mxu0 0
        %2607 = vmatpush.bf16.msra.mxu0 0
        %2608 = vmatpush.bf16.msra.mxu0 0
        %2609 = vmatpush.bf16.msra.mxu0 0
        %2610 = vmatpush.bf16.msra.mxu0 0
        %2611 = vmatpush.bf16.msra.mxu0 %v1972
        %2612 = vmatmul.bf16.gmra.mxu0 %v2602
        %v2613 = vpop.f32.mrf.mxu0
        %v2614 = vadd.f32 0.0, %v2613
        %v2615 = vpop.f32.mrf.mxu0
        %2616 = vdwg.mxu0
        %2617 = vmatpush.bf16.msra.mxu0 0
        %2618 = vmatpush.bf16.msra.mxu0 0
        %2619 = vmatpush.bf16.msra.mxu0 0
        %2620 = vmatpush.bf16.msra.mxu0 0
        %2621 = vmatpush.bf16.msra.mxu0 0
        %2622 = vmatpush.bf16.msra.mxu0 0
        %2623 = vmatpush.bf16.msra.mxu0 0
        %2624 = vmatpush.bf16.msra.mxu0 %v1975
        %2625 = vmatmul.bf16.gmra.mxu0 %v2602
        %v2626 = vpop.f32.mrf.mxu0
        %v2627 = vadd.f32 0.0, %v2626
        %v2628 = vpop.f32.mrf.mxu0
        %2629 = vdwg.mxu0
        %v2630 = vpack.c.bf16 %v2614, %v2614
        %v2631 = vpack.c.bf16 %v2627, %v2627
        %s2632 = scalar_lea.vmem %s8, 512
        %v2633 = vld [vmem:[%s2632] sm:$0xff]
        %v2634 = vld [vmem:[%s2632 + $0x8] sm:$0xff]
        %v2635 = vld [vmem:[%s2632 + $0x10] sm:$0xff]
        %v2636 = vld [vmem:[%s2632 + $0x18] sm:$0xff]
        %v2637 = vld [vmem:[%s2632 + $0x20] sm:$0xff]
        %v2638 = vld [vmem:[%s2632 + $0x28] sm:$0xff]
        %v2639 = vld [vmem:[%s2632 + $0x30] sm:$0xff]
        %v2640 = vld [vmem:[%s2632 + $0x38] sm:$0xff]
        %v2641 = vld [vmem:[%s2632 + $0x40] sm:$0xff]
        %v2642 = vld [vmem:[%s2632 + $0x48] sm:$0xff]
        %v2643 = vld [vmem:[%s2632 + $0x50] sm:$0xff]
        %v2644 = vld [vmem:[%s2632 + $0x58] sm:$0xff]
        %v2645 = vld [vmem:[%s2632 + $0x60] sm:$0xff]
        %v2646 = vld [vmem:[%s2632 + $0x68] sm:$0xff]
        %v2647 = vld [vmem:[%s2632 + $0x70] sm:$0xff]
        %v2648 = vld [vmem:[%s2632 + $0x78] sm:$0xff]
        %v2649 = vld [vmem:[%s2632 + $0x80] sm:$0xff]
        %v2650 = vld [vmem:[%s2632 + $0x88] sm:$0xff]
        %v2651 = vld [vmem:[%s2632 + $0x90] sm:$0xff]
        %v2652 = vld [vmem:[%s2632 + $0x98] sm:$0xff]
        %v2653 = vld [vmem:[%s2632 + $0xa0] sm:$0xff]
        %v2654 = vld [vmem:[%s2632 + $0xa8] sm:$0xff]
        %v2655 = vld [vmem:[%s2632 + $0xb0] sm:$0xff]
        %v2656 = vld [vmem:[%s2632 + $0xb8] sm:$0xff]
        %v2657 = vld [vmem:[%s2632 + $0xc0] sm:$0xff]
        %v2658 = vld [vmem:[%s2632 + $0xc8] sm:$0xff]
        %v2659 = vld [vmem:[%s2632 + $0xd0] sm:$0xff]
        %v2660 = vld [vmem:[%s2632 + $0xd8] sm:$0xff]
        %v2661 = vld [vmem:[%s2632 + $0xe0] sm:$0xff]
        %v2662 = vld [vmem:[%s2632 + $0xe8] sm:$0xff]
        %v2663 = vld [vmem:[%s2632 + $0xf0] sm:$0xff]
        %v2664 = vld [vmem:[%s2632 + $0xf8] sm:$0xff]
        %v2697 = vunpack.c.l.b16 %v2633
        %v2698 = vunpack.c.h.b16 %v2633
        %v2699 = vunpack.c.l.b16 %v2634
        %v2700 = vunpack.c.h.b16 %v2634
        %v2701 = vunpack.c.l.b16 %v2635
        %v2702 = vunpack.c.h.b16 %v2635
        %v2703 = vunpack.c.l.b16 %v2636
        %v2704 = vunpack.c.h.b16 %v2636
        %v2705 = vunpack.c.l.b16 %v2637
        %v2706 = vunpack.c.h.b16 %v2637
        %v2707 = vunpack.c.l.b16 %v2638
        %v2708 = vunpack.c.h.b16 %v2638
        %v2709 = vunpack.c.l.b16 %v2639
        %v2710 = vunpack.c.h.b16 %v2639
        %v2711 = vunpack.c.l.b16 %v2640
        %v2712 = vunpack.c.h.b16 %v2640
        %v2713 = vunpack.c.l.b16 %v2641
        %v2714 = vunpack.c.h.b16 %v2641
        %v2715 = vunpack.c.l.b16 %v2642
        %v2716 = vunpack.c.h.b16 %v2642
        %v2717 = vunpack.c.l.b16 %v2643
        %v2718 = vunpack.c.h.b16 %v2643
        %v2719 = vunpack.c.l.b16 %v2644
        %v2720 = vunpack.c.h.b16 %v2644
        %v2721 = vunpack.c.l.b16 %v2645
        %v2722 = vunpack.c.h.b16 %v2645
        %v2723 = vunpack.c.l.b16 %v2646
        %v2724 = vunpack.c.h.b16 %v2646
        %v2725 = vunpack.c.l.b16 %v2647
        %v2726 = vunpack.c.h.b16 %v2647
        %v2727 = vunpack.c.l.b16 %v2648
        %v2728 = vunpack.c.h.b16 %v2648
        %v2729 = vunpack.c.l.b16 %v2649
        %v2730 = vunpack.c.h.b16 %v2649
        %v2731 = vunpack.c.l.b16 %v2650
        %v2732 = vunpack.c.h.b16 %v2650
        %v2733 = vunpack.c.l.b16 %v2651
        %v2734 = vunpack.c.h.b16 %v2651
        %v2735 = vunpack.c.l.b16 %v2652
        %v2736 = vunpack.c.h.b16 %v2652
        %v2737 = vunpack.c.l.b16 %v2653
        %v2738 = vunpack.c.h.b16 %v2653
        %v2739 = vunpack.c.l.b16 %v2654
        %v2740 = vunpack.c.h.b16 %v2654
        %v2741 = vunpack.c.l.b16 %v2655
        %v2742 = vunpack.c.h.b16 %v2655
        %v2743 = vunpack.c.l.b16 %v2656
        %v2744 = vunpack.c.h.b16 %v2656
        %v2745 = vunpack.c.l.b16 %v2657
        %v2746 = vunpack.c.h.b16 %v2657
        %v2747 = vunpack.c.l.b16 %v2658
        %v2748 = vunpack.c.h.b16 %v2658
        %v2749 = vunpack.c.l.b16 %v2659
        %v2750 = vunpack.c.h.b16 %v2659
        %v2751 = vunpack.c.l.b16 %v2660
        %v2752 = vunpack.c.h.b16 %v2660
        %v2753 = vunpack.c.l.b16 %v2661
        %v2754 = vunpack.c.h.b16 %v2661
        %v2755 = vunpack.c.l.b16 %v2662
        %v2756 = vunpack.c.h.b16 %v2662
        %v2757 = vunpack.c.l.b16 %v2663
        %v2758 = vunpack.c.h.b16 %v2663
        %v2759 = vunpack.c.l.b16 %v2664
        %v2760 = vunpack.c.h.b16 %v2664
        %v2761 = vpack.c.b16 %v2699, %v2697
        %v2762 = vpack.c.b16 %v2700, %v2698
        %v2763 = vpack.c.b16 %v2703, %v2701
        %v2764 = vpack.c.b16 %v2704, %v2702
        %v2765 = vpack.c.b16 %v2707, %v2705
        %v2766 = vpack.c.b16 %v2708, %v2706
        %v2767 = vpack.c.b16 %v2711, %v2709
        %v2768 = vpack.c.b16 %v2712, %v2710
        %v2769 = vpack.c.b16 %v2715, %v2713
        %v2770 = vpack.c.b16 %v2716, %v2714
        %v2771 = vpack.c.b16 %v2719, %v2717
        %v2772 = vpack.c.b16 %v2720, %v2718
        %v2773 = vpack.c.b16 %v2723, %v2721
        %v2774 = vpack.c.b16 %v2724, %v2722
        %v2775 = vpack.c.b16 %v2727, %v2725
        %v2776 = vpack.c.b16 %v2728, %v2726
        %v2777 = vpack.c.b16 %v2731, %v2729
        %v2778 = vpack.c.b16 %v2732, %v2730
        %v2779 = vpack.c.b16 %v2735, %v2733
        %v2780 = vpack.c.b16 %v2736, %v2734
        %v2781 = vpack.c.b16 %v2739, %v2737
        %v2782 = vpack.c.b16 %v2740, %v2738
        %v2783 = vpack.c.b16 %v2743, %v2741
        %v2784 = vpack.c.b16 %v2744, %v2742
        %v2785 = vpack.c.b16 %v2747, %v2745
        %v2786 = vpack.c.b16 %v2748, %v2746
        %v2787 = vpack.c.b16 %v2751, %v2749
        %v2788 = vpack.c.b16 %v2752, %v2750
        %v2789 = vpack.c.b16 %v2755, %v2753
        %v2790 = vpack.c.b16 %v2756, %v2754
        %v2791 = vpack.c.b16 %v2759, %v2757
        %v2792 = vpack.c.b16 %v2760, %v2758
        %2825 = vmatpush.bf16.msra.mxu0 %v2775
        %2826 = vmatpush.bf16.msra.mxu0 %v2773
        %2827 = vmatpush.bf16.msra.mxu0 %v2771
        %2828 = vmatpush.bf16.msra.mxu0 %v2769
        %2829 = vmatpush.bf16.msra.mxu0 %v2767
        %2830 = vmatpush.bf16.msra.mxu0 %v2765
        %2831 = vmatpush.bf16.msra.mxu0 %v2763
        %2832 = vmatpush.bf16.msra.mxu0 %v2761
        %2833 = vmatmul.bf16.gmra.mxu0 %v2630
        %v2834 = vpop.f32.mrf.mxu0
        %v2835 = vadd.f32 0.0, %v2834
        %v2836 = vpop.f32.mrf.mxu0
        %2837 = vdwg.mxu0
        %2838 = vmatpush.bf16.msra.mxu0 %v2791
        %2839 = vmatpush.bf16.msra.mxu0 %v2789
        %2840 = vmatpush.bf16.msra.mxu0 %v2787
        %2841 = vmatpush.bf16.msra.mxu0 %v2785
        %2842 = vmatpush.bf16.msra.mxu0 %v2783
        %2843 = vmatpush.bf16.msra.mxu0 %v2781
        %2844 = vmatpush.bf16.msra.mxu0 %v2779
        %2845 = vmatpush.bf16.msra.mxu0 %v2777
        %2846 = vmatmul.bf16.gmra.mxu0 %v2631
        %v2847 = vpop.f32.mrf.mxu0
        %v2848 = vadd.f32 %v2835, %v2847
        %v2849 = vpop.f32.mrf.mxu0
        %2850 = vdwg.mxu0
        %2851 = vmatpush.bf16.msra.mxu0 %v2776
        %2852 = vmatpush.bf16.msra.mxu0 %v2774
        %2853 = vmatpush.bf16.msra.mxu0 %v2772
        %2854 = vmatpush.bf16.msra.mxu0 %v2770
        %2855 = vmatpush.bf16.msra.mxu0 %v2768
        %2856 = vmatpush.bf16.msra.mxu0 %v2766
        %2857 = vmatpush.bf16.msra.mxu0 %v2764
        %2858 = vmatpush.bf16.msra.mxu0 %v2762
        %2859 = vmatmul.bf16.gmra.mxu0 %v2630
        %v2860 = vpop.f32.mrf.mxu0
        %v2861 = vadd.f32 0.0, %v2860
        %v2862 = vpop.f32.mrf.mxu0
        %2863 = vdwg.mxu0
        %2864 = vmatpush.bf16.msra.mxu0 %v2792
        %2865 = vmatpush.bf16.msra.mxu0 %v2790
        %2866 = vmatpush.bf16.msra.mxu0 %v2788
        %2867 = vmatpush.bf16.msra.mxu0 %v2786
        %2868 = vmatpush.bf16.msra.mxu0 %v2784
        %2869 = vmatpush.bf16.msra.mxu0 %v2782
        %2870 = vmatpush.bf16.msra.mxu0 %v2780
        %2871 = vmatpush.bf16.msra.mxu0 %v2778
        %2872 = vmatmul.bf16.gmra.mxu0 %v2631
        %v2873 = vpop.f32.mrf.mxu0
        %v2874 = vadd.f32 %v2861, %v2873
        %v2875 = vpop.f32.mrf.mxu0
        %2876 = vdwg.mxu0
        %v2877 = vadd.f32 %v2534, %v2848
        %v2878 = vadd.f32 %v2560, %v2874
        %2879 = vmatpush.bf16.xpose.msra.mxu0 0
        %2880 = vmatpush.bf16.xpose.msra.mxu0 0
        %2881 = vmatpush.bf16.xpose.msra.mxu0 0
        %2882 = vmatpush.bf16.xpose.msra.mxu0 0
        %2883 = vmatpush.bf16.xpose.msra.mxu0 0
        %2884 = vmatpush.bf16.xpose.msra.mxu0 0
        %2885 = vmatpush.bf16.xpose.msra.mxu0 0
        %2886 = vmatpush.bf16.xpose.msra.mxu0 %v834
        %2887 = vmatmul.bf16.gmra.mxu0 %v1926
        %v2888 = vpop.f32.mrf.mxu0
        %v2889 = vadd.f32 0.0, %v2888
        %v2890 = vpop.f32.mrf.mxu0
        %2891 = vdwg.mxu0
        %2892 = vmatpush.bf16.xpose.msra.mxu0 0
        %2893 = vmatpush.bf16.xpose.msra.mxu0 0
        %2894 = vmatpush.bf16.xpose.msra.mxu0 0
        %2895 = vmatpush.bf16.xpose.msra.mxu0 0
        %2896 = vmatpush.bf16.xpose.msra.mxu0 0
        %2897 = vmatpush.bf16.xpose.msra.mxu0 0
        %2898 = vmatpush.bf16.xpose.msra.mxu0 0
        %2899 = vmatpush.bf16.xpose.msra.mxu0 %v835
        %2900 = vmatmul.bf16.gmra.mxu0 %v1927
        %v2901 = vpop.f32.mrf.mxu0
        %v2902 = vadd.f32 %v2889, %v2901
        %v2903 = vpop.f32.mrf.mxu0
        %2904 = vdwg.mxu0
        %v2905 = vsel %vm1954, %v2902, -inf
        %2906 = vmax.xlane.f32.xlu0 %v2905
        %v2907 = vpop.xlane.xlu0 %2906
        %v2908 = vsub.f32 %v2902, %v2907
        %v2909 = vmul.f32 %v2908, 1.442695
        %v2910 = vpow.pop %v2909
        %v2911 = vsel %vm1954, %v2910, 0.0
        %2912 = vadd.xlane.f32.xlu0 %v2911
        %v2913 = vpop.xlane.xlu0 %2912
        %v2914 = vrcp.pop %v2913
        %v2915 = vmul.f32 %v2910, %v2914
        %v2916 = vpack.c.bf16 %v2915, %v2915
        %v2918 = vsel %vm1954, %v2916, 0
        %2920 = vmatpush.bf16.msra.mxu0 0
        %2921 = vmatpush.bf16.msra.mxu0 0
        %2922 = vmatpush.bf16.msra.mxu0 0
        %2923 = vmatpush.bf16.msra.mxu0 0
        %2924 = vmatpush.bf16.msra.mxu0 0
        %2925 = vmatpush.bf16.msra.mxu0 0
        %2926 = vmatpush.bf16.msra.mxu0 0
        %2927 = vmatpush.bf16.msra.mxu0 %v1972
        %2928 = vmatmul.bf16.gmra.mxu0 %v2918
        %v2929 = vpop.f32.mrf.mxu0
        %v2930 = vadd.f32 0.0, %v2929
        %v2931 = vpop.f32.mrf.mxu0
        %2932 = vdwg.mxu0
        %2933 = vmatpush.bf16.msra.mxu0 0
        %2934 = vmatpush.bf16.msra.mxu0 0
        %2935 = vmatpush.bf16.msra.mxu0 0
        %2936 = vmatpush.bf16.msra.mxu0 0
        %2937 = vmatpush.bf16.msra.mxu0 0
        %2938 = vmatpush.bf16.msra.mxu0 0
        %2939 = vmatpush.bf16.msra.mxu0 0
        %2940 = vmatpush.bf16.msra.mxu0 %v1975
        %2941 = vmatmul.bf16.gmra.mxu0 %v2918
        %v2942 = vpop.f32.mrf.mxu0
        %v2943 = vadd.f32 0.0, %v2942
        %v2944 = vpop.f32.mrf.mxu0
        %2945 = vdwg.mxu0
        %v2946 = vpack.c.bf16 %v2930, %v2930
        %v2947 = vpack.c.bf16 %v2943, %v2943
        %s2948 = scalar_lea.vmem %s8, 768
        %v2949 = vld [vmem:[%s2948] sm:$0xff]
        %v2950 = vld [vmem:[%s2948 + $0x8] sm:$0xff]
        %v2951 = vld [vmem:[%s2948 + $0x10] sm:$0xff]
        %v2952 = vld [vmem:[%s2948 + $0x18] sm:$0xff]
        %v2953 = vld [vmem:[%s2948 + $0x20] sm:$0xff]
        %v2954 = vld [vmem:[%s2948 + $0x28] sm:$0xff]
        %v2955 = vld [vmem:[%s2948 + $0x30] sm:$0xff]
        %v2956 = vld [vmem:[%s2948 + $0x38] sm:$0xff]
        %v2957 = vld [vmem:[%s2948 + $0x40] sm:$0xff]
        %v2958 = vld [vmem:[%s2948 + $0x48] sm:$0xff]
        %v2959 = vld [vmem:[%s2948 + $0x50] sm:$0xff]
        %v2960 = vld [vmem:[%s2948 + $0x58] sm:$0xff]
        %v2961 = vld [vmem:[%s2948 + $0x60] sm:$0xff]
        %v2962 = vld [vmem:[%s2948 + $0x68] sm:$0xff]
        %v2963 = vld [vmem:[%s2948 + $0x70] sm:$0xff]
        %v2964 = vld [vmem:[%s2948 + $0x78] sm:$0xff]
        %v2965 = vld [vmem:[%s2948 + $0x80] sm:$0xff]
        %v2966 = vld [vmem:[%s2948 + $0x88] sm:$0xff]
        %v2967 = vld [vmem:[%s2948 + $0x90] sm:$0xff]
        %v2968 = vld [vmem:[%s2948 + $0x98] sm:$0xff]
        %v2969 = vld [vmem:[%s2948 + $0xa0] sm:$0xff]
        %v2970 = vld [vmem:[%s2948 + $0xa8] sm:$0xff]
        %v2971 = vld [vmem:[%s2948 + $0xb0] sm:$0xff]
        %v2972 = vld [vmem:[%s2948 + $0xb8] sm:$0xff]
        %v2973 = vld [vmem:[%s2948 + $0xc0] sm:$0xff]
        %v2974 = vld [vmem:[%s2948 + $0xc8] sm:$0xff]
        %v2975 = vld [vmem:[%s2948 + $0xd0] sm:$0xff]
        %v2976 = vld [vmem:[%s2948 + $0xd8] sm:$0xff]
        %v2977 = vld [vmem:[%s2948 + $0xe0] sm:$0xff]
        %v2978 = vld [vmem:[%s2948 + $0xe8] sm:$0xff]
        %v2979 = vld [vmem:[%s2948 + $0xf0] sm:$0xff]
        %v2980 = vld [vmem:[%s2948 + $0xf8] sm:$0xff]
        %v3013 = vunpack.c.l.b16 %v2949
        %v3014 = vunpack.c.h.b16 %v2949
        %v3015 = vunpack.c.l.b16 %v2950
        %v3016 = vunpack.c.h.b16 %v2950
        %v3017 = vunpack.c.l.b16 %v2951
        %v3018 = vunpack.c.h.b16 %v2951
        %v3019 = vunpack.c.l.b16 %v2952
        %v3020 = vunpack.c.h.b16 %v2952
        %v3021 = vunpack.c.l.b16 %v2953
        %v3022 = vunpack.c.h.b16 %v2953
        %v3023 = vunpack.c.l.b16 %v2954
        %v3024 = vunpack.c.h.b16 %v2954
        %v3025 = vunpack.c.l.b16 %v2955
        %v3026 = vunpack.c.h.b16 %v2955
        %v3027 = vunpack.c.l.b16 %v2956
        %v3028 = vunpack.c.h.b16 %v2956
        %v3029 = vunpack.c.l.b16 %v2957
        %v3030 = vunpack.c.h.b16 %v2957
        %v3031 = vunpack.c.l.b16 %v2958
        %v3032 = vunpack.c.h.b16 %v2958
        %v3033 = vunpack.c.l.b16 %v2959
        %v3034 = vunpack.c.h.b16 %v2959
        %v3035 = vunpack.c.l.b16 %v2960
        %v3036 = vunpack.c.h.b16 %v2960
        %v3037 = vunpack.c.l.b16 %v2961
        %v3038 = vunpack.c.h.b16 %v2961
        %v3039 = vunpack.c.l.b16 %v2962
        %v3040 = vunpack.c.h.b16 %v2962
        %v3041 = vunpack.c.l.b16 %v2963
        %v3042 = vunpack.c.h.b16 %v2963
        %v3043 = vunpack.c.l.b16 %v2964
        %v3044 = vunpack.c.h.b16 %v2964
        %v3045 = vunpack.c.l.b16 %v2965
        %v3046 = vunpack.c.h.b16 %v2965
        %v3047 = vunpack.c.l.b16 %v2966
        %v3048 = vunpack.c.h.b16 %v2966
        %v3049 = vunpack.c.l.b16 %v2967
        %v3050 = vunpack.c.h.b16 %v2967
        %v3051 = vunpack.c.l.b16 %v2968
        %v3052 = vunpack.c.h.b16 %v2968
        %v3053 = vunpack.c.l.b16 %v2969
        %v3054 = vunpack.c.h.b16 %v2969
        %v3055 = vunpack.c.l.b16 %v2970
        %v3056 = vunpack.c.h.b16 %v2970
        %v3057 = vunpack.c.l.b16 %v2971
        %v3058 = vunpack.c.h.b16 %v2971
        %v3059 = vunpack.c.l.b16 %v2972
        %v3060 = vunpack.c.h.b16 %v2972
        %v3061 = vunpack.c.l.b16 %v2973
        %v3062 = vunpack.c.h.b16 %v2973
        %v3063 = vunpack.c.l.b16 %v2974
        %v3064 = vunpack.c.h.b16 %v2974
        %v3065 = vunpack.c.l.b16 %v2975
        %v3066 = vunpack.c.h.b16 %v2975
        %v3067 = vunpack.c.l.b16 %v2976
        %v3068 = vunpack.c.h.b16 %v2976
        %v3069 = vunpack.c.l.b16 %v2977
        %v3070 = vunpack.c.h.b16 %v2977
        %v3071 = vunpack.c.l.b16 %v2978
        %v3072 = vunpack.c.h.b16 %v2978
        %v3073 = vunpack.c.l.b16 %v2979
        %v3074 = vunpack.c.h.b16 %v2979
        %v3075 = vunpack.c.l.b16 %v2980
        %v3076 = vunpack.c.h.b16 %v2980
        %v3077 = vpack.c.b16 %v3015, %v3013
        %v3078 = vpack.c.b16 %v3016, %v3014
        %v3079 = vpack.c.b16 %v3019, %v3017
        %v3080 = vpack.c.b16 %v3020, %v3018
        %v3081 = vpack.c.b16 %v3023, %v3021
        %v3082 = vpack.c.b16 %v3024, %v3022
        %v3083 = vpack.c.b16 %v3027, %v3025
        %v3084 = vpack.c.b16 %v3028, %v3026
        %v3085 = vpack.c.b16 %v3031, %v3029
        %v3086 = vpack.c.b16 %v3032, %v3030
        %v3087 = vpack.c.b16 %v3035, %v3033
        %v3088 = vpack.c.b16 %v3036, %v3034
        %v3089 = vpack.c.b16 %v3039, %v3037
        %v3090 = vpack.c.b16 %v3040, %v3038
        %v3091 = vpack.c.b16 %v3043, %v3041
        %v3092 = vpack.c.b16 %v3044, %v3042
        %v3093 = vpack.c.b16 %v3047, %v3045
        %v3094 = vpack.c.b16 %v3048, %v3046
        %v3095 = vpack.c.b16 %v3051, %v3049
        %v3096 = vpack.c.b16 %v3052, %v3050
        %v3097 = vpack.c.b16 %v3055, %v3053
        %v3098 = vpack.c.b16 %v3056, %v3054
        %v3099 = vpack.c.b16 %v3059, %v3057
        %v3100 = vpack.c.b16 %v3060, %v3058
        %v3101 = vpack.c.b16 %v3063, %v3061
        %v3102 = vpack.c.b16 %v3064, %v3062
        %v3103 = vpack.c.b16 %v3067, %v3065
        %v3104 = vpack.c.b16 %v3068, %v3066
        %v3105 = vpack.c.b16 %v3071, %v3069
        %v3106 = vpack.c.b16 %v3072, %v3070
        %v3107 = vpack.c.b16 %v3075, %v3073
        %v3108 = vpack.c.b16 %v3076, %v3074
        %3141 = vmatpush.bf16.msra.mxu0 %v3091
        %3142 = vmatpush.bf16.msra.mxu0 %v3089
        %3143 = vmatpush.bf16.msra.mxu0 %v3087
        %3144 = vmatpush.bf16.msra.mxu0 %v3085
        %3145 = vmatpush.bf16.msra.mxu0 %v3083
        %3146 = vmatpush.bf16.msra.mxu0 %v3081
        %3147 = vmatpush.bf16.msra.mxu0 %v3079
        %3148 = vmatpush.bf16.msra.mxu0 %v3077
        %3149 = vmatmul.bf16.gmra.mxu0 %v2946
        %v3150 = vpop.f32.mrf.mxu0
        %v3151 = vadd.f32 0.0, %v3150
        %v3152 = vpop.f32.mrf.mxu0
        %3153 = vdwg.mxu0
        %3154 = vmatpush.bf16.msra.mxu0 %v3107
        %3155 = vmatpush.bf16.msra.mxu0 %v3105
        %3156 = vmatpush.bf16.msra.mxu0 %v3103
        %3157 = vmatpush.bf16.msra.mxu0 %v3101
        %3158 = vmatpush.bf16.msra.mxu0 %v3099
        %3159 = vmatpush.bf16.msra.mxu0 %v3097
        %3160 = vmatpush.bf16.msra.mxu0 %v3095
        %3161 = vmatpush.bf16.msra.mxu0 %v3093
        %3162 = vmatmul.bf16.gmra.mxu0 %v2947
        %v3163 = vpop.f32.mrf.mxu0
        %v3164 = vadd.f32 %v3151, %v3163
        %v3165 = vpop.f32.mrf.mxu0
        %3166 = vdwg.mxu0
        %3167 = vmatpush.bf16.msra.mxu0 %v3092
        %3168 = vmatpush.bf16.msra.mxu0 %v3090
        %3169 = vmatpush.bf16.msra.mxu0 %v3088
        %3170 = vmatpush.bf16.msra.mxu0 %v3086
        %3171 = vmatpush.bf16.msra.mxu0 %v3084
        %3172 = vmatpush.bf16.msra.mxu0 %v3082
        %3173 = vmatpush.bf16.msra.mxu0 %v3080
        %3174 = vmatpush.bf16.msra.mxu0 %v3078
        %3175 = vmatmul.bf16.gmra.mxu0 %v2946
        %v3176 = vpop.f32.mrf.mxu0
        %v3177 = vadd.f32 0.0, %v3176
        %v3178 = vpop.f32.mrf.mxu0
        %3179 = vdwg.mxu0
        %3180 = vmatpush.bf16.msra.mxu0 %v3108
        %3181 = vmatpush.bf16.msra.mxu0 %v3106
        %3182 = vmatpush.bf16.msra.mxu0 %v3104
        %3183 = vmatpush.bf16.msra.mxu0 %v3102
        %3184 = vmatpush.bf16.msra.mxu0 %v3100
        %3185 = vmatpush.bf16.msra.mxu0 %v3098
        %3186 = vmatpush.bf16.msra.mxu0 %v3096
        %3187 = vmatpush.bf16.msra.mxu0 %v3094
        %3188 = vmatmul.bf16.gmra.mxu0 %v2947
        %v3189 = vpop.f32.mrf.mxu0
        %v3190 = vadd.f32 %v3177, %v3189
        %v3191 = vpop.f32.mrf.mxu0
        %3192 = vdwg.mxu0
        %v3193 = vadd.f32 %v2877, %v3164
        %v3194 = vadd.f32 %v2878, %v3190
        %v3195 = vld [vmem:[%s9] sm:$0x3]
        %v3197 = vperm.slane %v3195, 0
        %v3198 = vperm.slane %v3195, 1
        %v3201 = vadd.f32 %v3193, %v3197
        %v3202 = vadd.f32 %v3194, %v3198
        %3203 = vmatpush.bf16.xpose.msra.mxu0 0
        %3204 = vmatpush.bf16.xpose.msra.mxu0 0
        %3205 = vmatpush.bf16.xpose.msra.mxu0 0
        %3206 = vmatpush.bf16.xpose.msra.mxu0 0
        %3207 = vmatpush.bf16.xpose.msra.mxu0 0
        %3208 = vmatpush.bf16.xpose.msra.mxu0 0
        %3209 = vmatpush.bf16.xpose.msra.mxu0 0
        %3210 = vmatpush.bf16.xpose.msra.mxu0 %v912
        %3211 = vmatmul.bf16.gmra.mxu0 %v1164
        %v3212 = vpop.f32.mrf.mxu0
        %v3213 = vadd.f32 0.0, %v3212
        %v3214 = vpop.f32.mrf.mxu0
        %3215 = vdwg.mxu0
        %3216 = vmatpush.bf16.xpose.msra.mxu0 0
        %3217 = vmatpush.bf16.xpose.msra.mxu0 0
        %3218 = vmatpush.bf16.xpose.msra.mxu0 0
        %3219 = vmatpush.bf16.xpose.msra.mxu0 0
        %3220 = vmatpush.bf16.xpose.msra.mxu0 0
        %3221 = vmatpush.bf16.xpose.msra.mxu0 0
        %3222 = vmatpush.bf16.xpose.msra.mxu0 0
        %3223 = vmatpush.bf16.xpose.msra.mxu0 %v913
        %3224 = vmatmul.bf16.gmra.mxu0 %v1165
        %v3225 = vpop.f32.mrf.mxu0
        %v3226 = vadd.f32 %v3213, %v3225
        %v3227 = vpop.f32.mrf.mxu0
        %3228 = vdwg.mxu0
        %v3229 = vsel %vm1954, %v3226, -inf
        %3230 = vmax.xlane.f32.xlu0 %v3229
        %v3231 = vpop.xlane.xlu0 %3230
        %v3232 = vsub.f32 %v3226, %v3231
        %v3233 = vmul.f32 %v3232, 1.442695
        %v3234 = vpow.pop %v3233
        %v3235 = vsel %vm1954, %v3234, 0.0
        %3236 = vadd.xlane.f32.xlu0 %v3235
        %v3237 = vpop.xlane.xlu0 %3236
        %v3238 = vrcp.pop %v3237
        %v3239 = vmul.f32 %v3234, %v3238
        %v3240 = vpack.c.bf16 %v3239, %v3239
        %v3242 = vsel %vm1954, %v3240, 0
        %v3245 = vsel %vm1970, %v912, 0
        %v3248 = vsel %vm1970, %v913, 0
        %3250 = vmatpush.bf16.msra.mxu0 0
        %3251 = vmatpush.bf16.msra.mxu0 0
        %3252 = vmatpush.bf16.msra.mxu0 0
        %3253 = vmatpush.bf16.msra.mxu0 0
        %3254 = vmatpush.bf16.msra.mxu0 0
        %3255 = vmatpush.bf16.msra.mxu0 0
        %3256 = vmatpush.bf16.msra.mxu0 0
        %3257 = vmatpush.bf16.msra.mxu0 %v3245
        %3258 = vmatmul.bf16.gmra.mxu0 %v3242
        %v3259 = vpop.f32.mrf.mxu0
        %v3260 = vadd.f32 0.0, %v3259
        %v3261 = vpop.f32.mrf.mxu0
        %3262 = vdwg.mxu0
        %3263 = vmatpush.bf16.msra.mxu0 0
        %3264 = vmatpush.bf16.msra.mxu0 0
        %3265 = vmatpush.bf16.msra.mxu0 0
        %3266 = vmatpush.bf16.msra.mxu0 0
        %3267 = vmatpush.bf16.msra.mxu0 0
        %3268 = vmatpush.bf16.msra.mxu0 0
        %3269 = vmatpush.bf16.msra.mxu0 0
        %3270 = vmatpush.bf16.msra.mxu0 %v3248
        %3271 = vmatmul.bf16.gmra.mxu0 %v3242
        %v3272 = vpop.f32.mrf.mxu0
        %v3273 = vadd.f32 0.0, %v3272
        %v3274 = vpop.f32.mrf.mxu0
        %3275 = vdwg.mxu0
        %v3276 = vpack.c.bf16 %v3260, %v3260
        %v3277 = vpack.c.bf16 %v3273, %v3273
        %3278 = vmatpush.bf16.xpose.msra.mxu0 0
        %3279 = vmatpush.bf16.xpose.msra.mxu0 0
        %3280 = vmatpush.bf16.xpose.msra.mxu0 0
        %3281 = vmatpush.bf16.xpose.msra.mxu0 0
        %3282 = vmatpush.bf16.xpose.msra.mxu0 0
        %3283 = vmatpush.bf16.xpose.msra.mxu0 0
        %3284 = vmatpush.bf16.xpose.msra.mxu0 0
        %3285 = vmatpush.bf16.xpose.msra.mxu0 %v912
        %3286 = vmatmul.bf16.gmra.mxu0 %v1418
        %v3287 = vpop.f32.mrf.mxu0
        %v3288 = vadd.f32 0.0, %v3287
        %v3289 = vpop.f32.mrf.mxu0
        %3290 = vdwg.mxu0
        %3291 = vmatpush.bf16.xpose.msra.mxu0 0
        %3292 = vmatpush.bf16.xpose.msra.mxu0 0
        %3293 = vmatpush.bf16.xpose.msra.mxu0 0
        %3294 = vmatpush.bf16.xpose.msra.mxu0 0
        %3295 = vmatpush.bf16.xpose.msra.mxu0 0
        %3296 = vmatpush.bf16.xpose.msra.mxu0 0
        %3297 = vmatpush.bf16.xpose.msra.mxu0 0
        %3298 = vmatpush.bf16.xpose.msra.mxu0 %v913
        %3299 = vmatmul.bf16.gmra.mxu0 %v1419
        %v3300 = vpop.f32.mrf.mxu0
        %v3301 = vadd.f32 %v3288, %v3300
        %v3302 = vpop.f32.mrf.mxu0
        %3303 = vdwg.mxu0
        %v3304 = vsel %vm1954, %v3301, -inf
        %3305 = vmax.xlane.f32.xlu0 %v3304
        %v3306 = vpop.xlane.xlu0 %3305
        %v3307 = vsub.f32 %v3301, %v3306
        %v3308 = vmul.f32 %v3307, 1.442695
        %v3309 = vpow.pop %v3308
        %v3310 = vsel %vm1954, %v3309, 0.0
        %3311 = vadd.xlane.f32.xlu0 %v3310
        %v3312 = vpop.xlane.xlu0 %3311
        %v3313 = vrcp.pop %v3312
        %v3314 = vmul.f32 %v3309, %v3313
        %v3315 = vpack.c.bf16 %v3314, %v3314
        %v3317 = vsel %vm1954, %v3315, 0
        %3319 = vmatpush.bf16.msra.mxu0 0
        %3320 = vmatpush.bf16.msra.mxu0 0
        %3321 = vmatpush.bf16.msra.mxu0 0
        %3322 = vmatpush.bf16.msra.mxu0 0
        %3323 = vmatpush.bf16.msra.mxu0 0
        %3324 = vmatpush.bf16.msra.mxu0 0
        %3325 = vmatpush.bf16.msra.mxu0 0
        %3326 = vmatpush.bf16.msra.mxu0 %v3245
        %3327 = vmatmul.bf16.gmra.mxu0 %v3317
        %v3328 = vpop.f32.mrf.mxu0
        %v3329 = vadd.f32 0.0, %v3328
        %v3330 = vpop.f32.mrf.mxu0
        %3331 = vdwg.mxu0
        %3332 = vmatpush.bf16.msra.mxu0 0
        %3333 = vmatpush.bf16.msra.mxu0 0
        %3334 = vmatpush.bf16.msra.mxu0 0
        %3335 = vmatpush.bf16.msra.mxu0 0
        %3336 = vmatpush.bf16.msra.mxu0 0
        %3337 = vmatpush.bf16.msra.mxu0 0
        %3338 = vmatpush.bf16.msra.mxu0 0
        %3339 = vmatpush.bf16.msra.mxu0 %v3248
        %3340 = vmatmul.bf16.gmra.mxu0 %v3317
        %v3341 = vpop.f32.mrf.mxu0
        %v3342 = vadd.f32 0.0, %v3341
        %v3343 = vpop.f32.mrf.mxu0
        %3344 = vdwg.mxu0
        %v3345 = vpack.c.bf16 %v3329, %v3329
        %v3346 = vpack.c.bf16 %v3342, %v3342
        %3347 = vmatpush.bf16.msra.mxu0 %v2249
        %3348 = vmatpush.bf16.msra.mxu0 %v2247
        %3349 = vmatpush.bf16.msra.mxu0 %v2245
        %3350 = vmatpush.bf16.msra.mxu0 %v2243
        %3351 = vmatpush.bf16.msra.mxu0 %v2241
        %3352 = vmatpush.bf16.msra.mxu0 %v2239
        %3353 = vmatpush.bf16.msra.mxu0 %v2237
        %3354 = vmatpush.bf16.msra.mxu0 %v2235
        %3355 = vmatmul.bf16.gmra.mxu0 %v3345
        %v3356 = vpop.f32.mrf.mxu0
        %v3357 = vadd.f32 0.0, %v3356
        %v3358 = vpop.f32.mrf.mxu0
        %3359 = vdwg.mxu0
        %3360 = vmatpush.bf16.msra.mxu0 %v2265
        %3361 = vmatpush.bf16.msra.mxu0 %v2263
        %3362 = vmatpush.bf16.msra.mxu0 %v2261
        %3363 = vmatpush.bf16.msra.mxu0 %v2259
        %3364 = vmatpush.bf16.msra.mxu0 %v2257
        %3365 = vmatpush.bf16.msra.mxu0 %v2255
        %3366 = vmatpush.bf16.msra.mxu0 %v2253
        %3367 = vmatpush.bf16.msra.mxu0 %v2251
        %3368 = vmatmul.bf16.gmra.mxu0 %v3346
        %v3369 = vpop.f32.mrf.mxu0
        %v3370 = vadd.f32 %v3357, %v3369
        %v3371 = vpop.f32.mrf.mxu0
        %3372 = vdwg.mxu0
        %3373 = vmatpush.bf16.msra.mxu0 %v2250
        %3374 = vmatpush.bf16.msra.mxu0 %v2248
        %3375 = vmatpush.bf16.msra.mxu0 %v2246
        %3376 = vmatpush.bf16.msra.mxu0 %v2244
        %3377 = vmatpush.bf16.msra.mxu0 %v2242
        %3378 = vmatpush.bf16.msra.mxu0 %v2240
        %3379 = vmatpush.bf16.msra.mxu0 %v2238
        %3380 = vmatpush.bf16.msra.mxu0 %v2236
        %3381 = vmatmul.bf16.gmra.mxu0 %v3345
        %v3382 = vpop.f32.mrf.mxu0
        %v3383 = vadd.f32 0.0, %v3382
        %v3384 = vpop.f32.mrf.mxu0
        %3385 = vdwg.mxu0
        %3386 = vmatpush.bf16.msra.mxu0 %v2266
        %3387 = vmatpush.bf16.msra.mxu0 %v2264
        %3388 = vmatpush.bf16.msra.mxu0 %v2262
        %3389 = vmatpush.bf16.msra.mxu0 %v2260
        %3390 = vmatpush.bf16.msra.mxu0 %v2258
        %3391 = vmatpush.bf16.msra.mxu0 %v2256
        %3392 = vmatpush.bf16.msra.mxu0 %v2254
        %3393 = vmatpush.bf16.msra.mxu0 %v2252
        %3394 = vmatmul.bf16.gmra.mxu0 %v3346
        %v3395 = vpop.f32.mrf.mxu0
        %v3396 = vadd.f32 %v3383, %v3395
        %v3397 = vpop.f32.mrf.mxu0
        %3398 = vdwg.mxu0
        %3399 = vmatpush.bf16.msra.mxu0 %v2461
        %3400 = vmatpush.bf16.msra.mxu0 %v2459
        %3401 = vmatpush.bf16.msra.mxu0 %v2457
        %3402 = vmatpush.bf16.msra.mxu0 %v2455
        %3403 = vmatpush.bf16.msra.mxu0 %v2453
        %3404 = vmatpush.bf16.msra.mxu0 %v2451
        %3405 = vmatpush.bf16.msra.mxu0 %v2449
        %3406 = vmatpush.bf16.msra.mxu0 %v2447
        %3407 = vmatmul.bf16.gmra.mxu0 %v3276
        %v3408 = vpop.f32.mrf.mxu0
        %v3409 = vadd.f32 %v3370, %v3408
        %v3410 = vpop.f32.mrf.mxu0
        %3411 = vdwg.mxu0
        %3412 = vmatpush.bf16.msra.mxu0 %v2477
        %3413 = vmatpush.bf16.msra.mxu0 %v2475
        %3414 = vmatpush.bf16.msra.mxu0 %v2473
        %3415 = vmatpush.bf16.msra.mxu0 %v2471
        %3416 = vmatpush.bf16.msra.mxu0 %v2469
        %3417 = vmatpush.bf16.msra.mxu0 %v2467
        %3418 = vmatpush.bf16.msra.mxu0 %v2465
        %3419 = vmatpush.bf16.msra.mxu0 %v2463
        %3420 = vmatmul.bf16.gmra.mxu0 %v3277
        %v3421 = vpop.f32.mrf.mxu0
        %v3422 = vadd.f32 %v3409, %v3421
        %v3423 = vpop.f32.mrf.mxu0
        %3424 = vdwg.mxu0
        %3425 = vmatpush.bf16.msra.mxu0 %v2462
        %3426 = vmatpush.bf16.msra.mxu0 %v2460
        %3427 = vmatpush.bf16.msra.mxu0 %v2458
        %3428 = vmatpush.bf16.msra.mxu0 %v2456
        %3429 = vmatpush.bf16.msra.mxu0 %v2454
        %3430 = vmatpush.bf16.msra.mxu0 %v2452
        %3431 = vmatpush.bf16.msra.mxu0 %v2450
        %3432 = vmatpush.bf16.msra.mxu0 %v2448
        %3433 = vmatmul.bf16.gmra.mxu0 %v3276
        %v3434 = vpop.f32.mrf.mxu0
        %v3435 = vadd.f32 %v3396, %v3434
        %v3436 = vpop.f32.mrf.mxu0
        %3437 = vdwg.mxu0
        %3438 = vmatpush.bf16.msra.mxu0 %v2478
        %3439 = vmatpush.bf16.msra.mxu0 %v2476
        %3440 = vmatpush.bf16.msra.mxu0 %v2474
        %3441 = vmatpush.bf16.msra.mxu0 %v2472
        %3442 = vmatpush.bf16.msra.mxu0 %v2470
        %3443 = vmatpush.bf16.msra.mxu0 %v2468
        %3444 = vmatpush.bf16.msra.mxu0 %v2466
        %3445 = vmatpush.bf16.msra.mxu0 %v2464
        %3446 = vmatmul.bf16.gmra.mxu0 %v3277
        %v3447 = vpop.f32.mrf.mxu0
        %v3448 = vadd.f32 %v3435, %v3447
        %v3449 = vpop.f32.mrf.mxu0
        %3450 = vdwg.mxu0
        %3451 = vmatpush.bf16.xpose.msra.mxu0 0
        %3452 = vmatpush.bf16.xpose.msra.mxu0 0
        %3453 = vmatpush.bf16.xpose.msra.mxu0 0
        %3454 = vmatpush.bf16.xpose.msra.mxu0 0
        %3455 = vmatpush.bf16.xpose.msra.mxu0 0
        %3456 = vmatpush.bf16.xpose.msra.mxu0 0
        %3457 = vmatpush.bf16.xpose.msra.mxu0 0
        %3458 = vmatpush.bf16.xpose.msra.mxu0 %v912
        %3459 = vmatmul.bf16.gmra.mxu0 %v1672
        %v3460 = vpop.f32.mrf.mxu0
        %v3461 = vadd.f32 0.0, %v3460
        %v3462 = vpop.f32.mrf.mxu0
        %3463 = vdwg.mxu0
        %3464 = vmatpush.bf16.xpose.msra.mxu0 0
        %3465 = vmatpush.bf16.xpose.msra.mxu0 0
        %3466 = vmatpush.bf16.xpose.msra.mxu0 0
        %3467 = vmatpush.bf16.xpose.msra.mxu0 0
        %3468 = vmatpush.bf16.xpose.msra.mxu0 0
        %3469 = vmatpush.bf16.xpose.msra.mxu0 0
        %3470 = vmatpush.bf16.xpose.msra.mxu0 0
        %3471 = vmatpush.bf16.xpose.msra.mxu0 %v913
        %3472 = vmatmul.bf16.gmra.mxu0 %v1673
        %v3473 = vpop.f32.mrf.mxu0
        %v3474 = vadd.f32 %v3461, %v3473
        %v3475 = vpop.f32.mrf.mxu0
        %3476 = vdwg.mxu0
        %v3477 = vsel %vm1954, %v3474, -inf
        %3478 = vmax.xlane.f32.xlu0 %v3477
        %v3479 = vpop.xlane.xlu0 %3478
        %v3480 = vsub.f32 %v3474, %v3479
        %v3481 = vmul.f32 %v3480, 1.442695
        %v3482 = vpow.pop %v3481
        %v3483 = vsel %vm1954, %v3482, 0.0
        %3484 = vadd.xlane.f32.xlu0 %v3483
        %v3485 = vpop.xlane.xlu0 %3484
        %v3486 = vrcp.pop %v3485
        %v3487 = vmul.f32 %v3482, %v3486
        %v3488 = vpack.c.bf16 %v3487, %v3487
        %v3490 = vsel %vm1954, %v3488, 0
        %3492 = vmatpush.bf16.msra.mxu0 0
        %3493 = vmatpush.bf16.msra.mxu0 0
        %3494 = vmatpush.bf16.msra.mxu0 0
        %3495 = vmatpush.bf16.msra.mxu0 0
        %3496 = vmatpush.bf16.msra.mxu0 0
        %3497 = vmatpush.bf16.msra.mxu0 0
        %3498 = vmatpush.bf16.msra.mxu0 0
        %3499 = vmatpush.bf16.msra.mxu0 %v3245
        %3500 = vmatmul.bf16.gmra.mxu0 %v3490
        %v3501 = vpop.f32.mrf.mxu0
        %v3502 = vadd.f32 0.0, %v3501
        %v3503 = vpop.f32.mrf.mxu0
        %3504 = vdwg.mxu0
        %3505 = vmatpush.bf16.msra.mxu0 0
        %3506 = vmatpush.bf16.msra.mxu0 0
        %3507 = vmatpush.bf16.msra.mxu0 0
        %3508 = vmatpush.bf16.msra.mxu0 0
        %3509 = vmatpush.bf16.msra.mxu0 0
        %3510 = vmatpush.bf16.msra.mxu0 0
        %3511 = vmatpush.bf16.msra.mxu0 0
        %3512 = vmatpush.bf16.msra.mxu0 %v3248
        %3513 = vmatmul.bf16.gmra.mxu0 %v3490
        %v3514 = vpop.f32.mrf.mxu0
        %v3515 = vadd.f32 0.0, %v3514
        %v3516 = vpop.f32.mrf.mxu0
        %3517 = vdwg.mxu0
        %v3518 = vpack.c.bf16 %v3502, %v3502
        %v3519 = vpack.c.bf16 %v3515, %v3515
        %3520 = vmatpush.bf16.msra.mxu0 %v2775
        %3521 = vmatpush.bf16.msra.mxu0 %v2773
        %3522 = vmatpush.bf16.msra.mxu0 %v2771
        %3523 = vmatpush.bf16.msra.mxu0 %v2769
        %3524 = vmatpush.bf16.msra.mxu0 %v2767
        %3525 = vmatpush.bf16.msra.mxu0 %v2765
        %3526 = vmatpush.bf16.msra.mxu0 %v2763
        %3527 = vmatpush.bf16.msra.mxu0 %v2761
        %3528 = vmatmul.bf16.gmra.mxu0 %v3518
        %v3529 = vpop.f32.mrf.mxu0
        %v3530 = vadd.f32 0.0, %v3529
        %v3531 = vpop.f32.mrf.mxu0
        %3532 = vdwg.mxu0
        %3533 = vmatpush.bf16.msra.mxu0 %v2791
        %3534 = vmatpush.bf16.msra.mxu0 %v2789
        %3535 = vmatpush.bf16.msra.mxu0 %v2787
        %3536 = vmatpush.bf16.msra.mxu0 %v2785
        %3537 = vmatpush.bf16.msra.mxu0 %v2783
        %3538 = vmatpush.bf16.msra.mxu0 %v2781
        %3539 = vmatpush.bf16.msra.mxu0 %v2779
        %3540 = vmatpush.bf16.msra.mxu0 %v2777
        %3541 = vmatmul.bf16.gmra.mxu0 %v3519
        %v3542 = vpop.f32.mrf.mxu0
        %v3543 = vadd.f32 %v3530, %v3542
        %v3544 = vpop.f32.mrf.mxu0
        %3545 = vdwg.mxu0
        %3546 = vmatpush.bf16.msra.mxu0 %v2776
        %3547 = vmatpush.bf16.msra.mxu0 %v2774
        %3548 = vmatpush.bf16.msra.mxu0 %v2772
        %3549 = vmatpush.bf16.msra.mxu0 %v2770
        %3550 = vmatpush.bf16.msra.mxu0 %v2768
        %3551 = vmatpush.bf16.msra.mxu0 %v2766
        %3552 = vmatpush.bf16.msra.mxu0 %v2764
        %3553 = vmatpush.bf16.msra.mxu0 %v2762
        %3554 = vmatmul.bf16.gmra.mxu0 %v3518
        %v3555 = vpop.f32.mrf.mxu0
        %v3556 = vadd.f32 0.0, %v3555
        %v3557 = vpop.f32.mrf.mxu0
        %3558 = vdwg.mxu0
        %3559 = vmatpush.bf16.msra.mxu0 %v2792
        %3560 = vmatpush.bf16.msra.mxu0 %v2790
        %3561 = vmatpush.bf16.msra.mxu0 %v2788
        %3562 = vmatpush.bf16.msra.mxu0 %v2786
        %3563 = vmatpush.bf16.msra.mxu0 %v2784
        %3564 = vmatpush.bf16.msra.mxu0 %v2782
        %3565 = vmatpush.bf16.msra.mxu0 %v2780
        %3566 = vmatpush.bf16.msra.mxu0 %v2778
        %3567 = vmatmul.bf16.gmra.mxu0 %v3519
        %v3568 = vpop.f32.mrf.mxu0
        %v3569 = vadd.f32 %v3556, %v3568
        %v3570 = vpop.f32.mrf.mxu0
        %3571 = vdwg.mxu0
        %v3572 = vadd.f32 %v3422, %v3543
        %v3573 = vadd.f32 %v3448, %v3569
        %3574 = vmatpush.bf16.xpose.msra.mxu0 0
        %3575 = vmatpush.bf16.xpose.msra.mxu0 0
        %3576 = vmatpush.bf16.xpose.msra.mxu0 0
        %3577 = vmatpush.bf16.xpose.msra.mxu0 0
        %3578 = vmatpush.bf16.xpose.msra.mxu0 0
        %3579 = vmatpush.bf16.xpose.msra.mxu0 0
        %3580 = vmatpush.bf16.xpose.msra.mxu0 0
        %3581 = vmatpush.bf16.xpose.msra.mxu0 %v912
        %3582 = vmatmul.bf16.gmra.mxu0 %v1926
        %v3583 = vpop.f32.mrf.mxu0
        %v3584 = vadd.f32 0.0, %v3583
        %v3585 = vpop.f32.mrf.mxu0
        %3586 = vdwg.mxu0
        %3587 = vmatpush.bf16.xpose.msra.mxu0 0
        %3588 = vmatpush.bf16.xpose.msra.mxu0 0
        %3589 = vmatpush.bf16.xpose.msra.mxu0 0
        %3590 = vmatpush.bf16.xpose.msra.mxu0 0
        %3591 = vmatpush.bf16.xpose.msra.mxu0 0
        %3592 = vmatpush.bf16.xpose.msra.mxu0 0
        %3593 = vmatpush.bf16.xpose.msra.mxu0 0
        %3594 = vmatpush.bf16.xpose.msra.mxu0 %v913
        %3595 = vmatmul.bf16.gmra.mxu0 %v1927
        %v3596 = vpop.f32.mrf.mxu0
        %v3597 = vadd.f32 %v3584, %v3596
        %v3598 = vpop.f32.mrf.mxu0
        %3599 = vdwg.mxu0
        %v3600 = vsel %vm1954, %v3597, -inf
        %3601 = vmax.xlane.f32.xlu0 %v3600
        %v3602 = vpop.xlane.xlu0 %3601
        %v3603 = vsub.f32 %v3597, %v3602
        %v3604 = vmul.f32 %v3603, 1.442695
        %v3605 = vpow.pop %v3604
        %v3606 = vsel %vm1954, %v3605, 0.0
        %3607 = vadd.xlane.f32.xlu0 %v3606
        %v3608 = vpop.xlane.xlu0 %3607
        %v3609 = vrcp.pop %v3608
        %v3610 = vmul.f32 %v3605, %v3609
        %v3611 = vpack.c.bf16 %v3610, %v3610
        %v3613 = vsel %vm1954, %v3611, 0
        %3615 = vmatpush.bf16.msra.mxu0 0
        %3616 = vmatpush.bf16.msra.mxu0 0
        %3617 = vmatpush.bf16.msra.mxu0 0
        %3618 = vmatpush.bf16.msra.mxu0 0
        %3619 = vmatpush.bf16.msra.mxu0 0
        %3620 = vmatpush.bf16.msra.mxu0 0
        %3621 = vmatpush.bf16.msra.mxu0 0
        %3622 = vmatpush.bf16.msra.mxu0 %v3245
        %3623 = vmatmul.bf16.gmra.mxu0 %v3613
        %v3624 = vpop.f32.mrf.mxu0
        %v3625 = vadd.f32 0.0, %v3624
        %v3626 = vpop.f32.mrf.mxu0
        %3627 = vdwg.mxu0
        %3628 = vmatpush.bf16.msra.mxu0 0
        %3629 = vmatpush.bf16.msra.mxu0 0
        %3630 = vmatpush.bf16.msra.mxu0 0
        %3631 = vmatpush.bf16.msra.mxu0 0
        %3632 = vmatpush.bf16.msra.mxu0 0
        %3633 = vmatpush.bf16.msra.mxu0 0
        %3634 = vmatpush.bf16.msra.mxu0 0
        %3635 = vmatpush.bf16.msra.mxu0 %v3248
        %3636 = vmatmul.bf16.gmra.mxu0 %v3613
        %v3637 = vpop.f32.mrf.mxu0
        %v3638 = vadd.f32 0.0, %v3637
        %v3639 = vpop.f32.mrf.mxu0
        %3640 = vdwg.mxu0
        %v3641 = vpack.c.bf16 %v3625, %v3625
        %v3642 = vpack.c.bf16 %v3638, %v3638
        %3643 = vmatpush.bf16.msra.mxu0 %v3091
        %3644 = vmatpush.bf16.msra.mxu0 %v3089
        %3645 = vmatpush.bf16.msra.mxu0 %v3087
        %3646 = vmatpush.bf16.msra.mxu0 %v3085
        %3647 = vmatpush.bf16.msra.mxu0 %v3083
        %3648 = vmatpush.bf16.msra.mxu0 %v3081
        %3649 = vmatpush.bf16.msra.mxu0 %v3079
        %3650 = vmatpush.bf16.msra.mxu0 %v3077
        %3651 = vmatmul.bf16.gmra.mxu0 %v3641
        %v3652 = vpop.f32.mrf.mxu0
        %v3653 = vadd.f32 0.0, %v3652
        %v3654 = vpop.f32.mrf.mxu0
        %3655 = vdwg.mxu0
        %3656 = vmatpush.bf16.msra.mxu0 %v3107
        %3657 = vmatpush.bf16.msra.mxu0 %v3105
        %3658 = vmatpush.bf16.msra.mxu0 %v3103
        %3659 = vmatpush.bf16.msra.mxu0 %v3101
        %3660 = vmatpush.bf16.msra.mxu0 %v3099
        %3661 = vmatpush.bf16.msra.mxu0 %v3097
        %3662 = vmatpush.bf16.msra.mxu0 %v3095
        %3663 = vmatpush.bf16.msra.mxu0 %v3093
        %3664 = vmatmul.bf16.gmra.mxu0 %v3642
        %v3665 = vpop.f32.mrf.mxu0
        %v3666 = vadd.f32 %v3653, %v3665
        %v3667 = vpop.f32.mrf.mxu0
        %3668 = vdwg.mxu0
        %3669 = vmatpush.bf16.msra.mxu0 %v3092
        %3670 = vmatpush.bf16.msra.mxu0 %v3090
        %3671 = vmatpush.bf16.msra.mxu0 %v3088
        %3672 = vmatpush.bf16.msra.mxu0 %v3086
        %3673 = vmatpush.bf16.msra.mxu0 %v3084
        %3674 = vmatpush.bf16.msra.mxu0 %v3082
        %3675 = vmatpush.bf16.msra.mxu0 %v3080
        %3676 = vmatpush.bf16.msra.mxu0 %v3078
        %3677 = vmatmul.bf16.gmra.mxu0 %v3641
        %v3678 = vpop.f32.mrf.mxu0
        %v3679 = vadd.f32 0.0, %v3678
        %v3680 = vpop.f32.mrf.mxu0
        %3681 = vdwg.mxu0
        %3682 = vmatpush.bf16.msra.mxu0 %v3108
        %3683 = vmatpush.bf16.msra.mxu0 %v3106
        %3684 = vmatpush.bf16.msra.mxu0 %v3104
        %3685 = vmatpush.bf16.msra.mxu0 %v3102
        %3686 = vmatpush.bf16.msra.mxu0 %v3100
        %3687 = vmatpush.bf16.msra.mxu0 %v3098
        %3688 = vmatpush.bf16.msra.mxu0 %v3096
        %3689 = vmatpush.bf16.msra.mxu0 %v3094
        %3690 = vmatmul.bf16.gmra.mxu0 %v3642
        %v3691 = vpop.f32.mrf.mxu0
        %v3692 = vadd.f32 %v3679, %v3691
        %v3693 = vpop.f32.mrf.mxu0
        %3694 = vdwg.mxu0
        %v3695 = vadd.f32 %v3572, %v3666
        %v3696 = vadd.f32 %v3573, %v3692
        %v3697 = vadd.f32 %v3695, %v3197
        %v3698 = vadd.f32 %v3696, %v3198
        %v3699 = vpack.c.bf16 %v3201, %v3201
        %v3700 = vpack.c.bf16 %v3202, %v3202
        %v3701 = vpack.c.bf16 %v3697, %v3697
        %v3702 = vpack.c.bf16 %v3698, %v3698
        %v3703 = vld [vmem:[%s10] sm:$0xff]
        %v3704 = vld [vmem:[%s10 + $0x8] sm:$0xff]
        %v3705 = vld [vmem:[%s10 + $0x10] sm:$0xff]
        %v3706 = vld [vmem:[%s10 + $0x18] sm:$0xff]
        %v3707 = vld [vmem:[%s10 + $0x20] sm:$0xff]
        %v3708 = vld [vmem:[%s10 + $0x28] sm:$0xff]
        %v3709 = vld [vmem:[%s10 + $0x30] sm:$0xff]
        %v3710 = vld [vmem:[%s10 + $0x38] sm:$0xff]
        %v3711 = vld [vmem:[%s10 + $0x40] sm:$0xff]
        %v3712 = vld [vmem:[%s10 + $0x48] sm:$0xff]
        %v3713 = vld [vmem:[%s10 + $0x50] sm:$0xff]
        %v3714 = vld [vmem:[%s10 + $0x58] sm:$0xff]
        %v3715 = vld [vmem:[%s10 + $0x60] sm:$0xff]
        %v3716 = vld [vmem:[%s10 + $0x68] sm:$0xff]
        %v3717 = vld [vmem:[%s10 + $0x70] sm:$0xff]
        %v3718 = vld [vmem:[%s10 + $0x78] sm:$0xff]
        %v3719 = vld [vmem:[%s10 + $0x80] sm:$0xff]
        %v3720 = vld [vmem:[%s10 + $0x88] sm:$0xff]
        %v3721 = vld [vmem:[%s10 + $0x90] sm:$0xff]
        %v3722 = vld [vmem:[%s10 + $0x98] sm:$0xff]
        %v3723 = vld [vmem:[%s10 + $0xa0] sm:$0xff]
        %v3724 = vld [vmem:[%s10 + $0xa8] sm:$0xff]
        %v3725 = vld [vmem:[%s10 + $0xb0] sm:$0xff]
        %v3726 = vld [vmem:[%s10 + $0xb8] sm:$0xff]
        %v3727 = vld [vmem:[%s10 + $0xc0] sm:$0xff]
        %v3728 = vld [vmem:[%s10 + $0xc8] sm:$0xff]
        %v3729 = vld [vmem:[%s10 + $0xd0] sm:$0xff]
        %v3730 = vld [vmem:[%s10 + $0xd8] sm:$0xff]
        %v3731 = vld [vmem:[%s10 + $0xe0] sm:$0xff]
        %v3732 = vld [vmem:[%s10 + $0xe8] sm:$0xff]
        %v3733 = vld [vmem:[%s10 + $0xf0] sm:$0xff]
        %v3734 = vld [vmem:[%s10 + $0xf8] sm:$0xff]
        %v3735 = vld [vmem:[%s10 + $0x100] sm:$0xff]
        %v3736 = vld [vmem:[%s10 + $0x108] sm:$0xff]
        %v3737 = vld [vmem:[%s10 + $0x110] sm:$0xff]
        %v3738 = vld [vmem:[%s10 + $0x118] sm:$0xff]
        %v3739 = vld [vmem:[%s10 + $0x120] sm:$0xff]
        %v3740 = vld [vmem:[%s10 + $0x128] sm:$0xff]
        %v3741 = vld [vmem:[%s10 + $0x130] sm:$0xff]
        %v3742 = vld [vmem:[%s10 + $0x138] sm:$0xff]
        %v3743 = vld [vmem:[%s10 + $0x140] sm:$0xff]
        %v3744 = vld [vmem:[%s10 + $0x148] sm:$0xff]
        %v3745 = vld [vmem:[%s10 + $0x150] sm:$0xff]
        %v3746 = vld [vmem:[%s10 + $0x158] sm:$0xff]
        %v3747 = vld [vmem:[%s10 + $0x160] sm:$0xff]
        %v3748 = vld [vmem:[%s10 + $0x168] sm:$0xff]
        %v3749 = vld [vmem:[%s10 + $0x170] sm:$0xff]
        %v3750 = vld [vmem:[%s10 + $0x178] sm:$0xff]
        %v3751 = vld [vmem:[%s10 + $0x180] sm:$0xff]
        %v3752 = vld [vmem:[%s10 + $0x188] sm:$0xff]
        %v3753 = vld [vmem:[%s10 + $0x190] sm:$0xff]
        %v3754 = vld [vmem:[%s10 + $0x198] sm:$0xff]
        %v3755 = vld [vmem:[%s10 + $0x1a0] sm:$0xff]
        %v3756 = vld [vmem:[%s10 + $0x1a8] sm:$0xff]
        %v3757 = vld [vmem:[%s10 + $0x1b0] sm:$0xff]
        %v3758 = vld [vmem:[%s10 + $0x1b8] sm:$0xff]
        %v3759 = vld [vmem:[%s10 + $0x1c0] sm:$0xff]
        %v3760 = vld [vmem:[%s10 + $0x1c8] sm:$0xff]
        %v3761 = vld [vmem:[%s10 + $0x1d0] sm:$0xff]
        %v3762 = vld [vmem:[%s10 + $0x1d8] sm:$0xff]
        %v3763 = vld [vmem:[%s10 + $0x1e0] sm:$0xff]
        %v3764 = vld [vmem:[%s10 + $0x1e8] sm:$0xff]
        %v3765 = vld [vmem:[%s10 + $0x1f0] sm:$0xff]
        %v3766 = vld [vmem:[%s10 + $0x1f8] sm:$0xff]
        %v3799 = vunpack.c.l.b16 %v3735
        %v3800 = vunpack.c.h.b16 %v3735
        %v3801 = vunpack.c.l.b16 %v3736
        %v3802 = vunpack.c.h.b16 %v3736
        %v3803 = vunpack.c.l.b16 %v3737
        %v3804 = vunpack.c.h.b16 %v3737
        %v3805 = vunpack.c.l.b16 %v3738
        %v3806 = vunpack.c.h.b16 %v3738
        %v3807 = vunpack.c.l.b16 %v3739
        %v3808 = vunpack.c.h.b16 %v3739
        %v3809 = vunpack.c.l.b16 %v3740
        %v3810 = vunpack.c.h.b16 %v3740
        %v3811 = vunpack.c.l.b16 %v3741
        %v3812 = vunpack.c.h.b16 %v3741
        %v3813 = vunpack.c.l.b16 %v3742
        %v3814 = vunpack.c.h.b16 %v3742
        %v3815 = vunpack.c.l.b16 %v3743
        %v3816 = vunpack.c.h.b16 %v3743
        %v3817 = vunpack.c.l.b16 %v3744
        %v3818 = vunpack.c.h.b16 %v3744
        %v3819 = vunpack.c.l.b16 %v3745
        %v3820 = vunpack.c.h.b16 %v3745
        %v3821 = vunpack.c.l.b16 %v3746
        %v3822 = vunpack.c.h.b16 %v3746
        %v3823 = vunpack.c.l.b16 %v3747
        %v3824 = vunpack.c.h.b16 %v3747
        %v3825 = vunpack.c.l.b16 %v3748
        %v3826 = vunpack.c.h.b16 %v3748
        %v3827 = vunpack.c.l.b16 %v3749
        %v3828 = vunpack.c.h.b16 %v3749
        %v3829 = vunpack.c.l.b16 %v3750
        %v3830 = vunpack.c.h.b16 %v3750
        %v3831 = vunpack.c.l.b16 %v3751
        %v3832 = vunpack.c.h.b16 %v3751
        %v3833 = vunpack.c.l.b16 %v3752
        %v3834 = vunpack.c.h.b16 %v3752
        %v3835 = vunpack.c.l.b16 %v3753
        %v3836 = vunpack.c.h.b16 %v3753
        %v3837 = vunpack.c.l.b16 %v3754
        %v3838 = vunpack.c.h.b16 %v3754
        %v3839 = vunpack.c.l.b16 %v3755
        %v3840 = vunpack.c.h.b16 %v3755
        %v3841 = vunpack.c.l.b16 %v3756
        %v3842 = vunpack.c.h.b16 %v3756
        %v3843 = vunpack.c.l.b16 %v3757
        %v3844 = vunpack.c.h.b16 %v3757
        %v3845 = vunpack.c.l.b16 %v3758
        %v3846 = vunpack.c.h.b16 %v3758
        %v3847 = vunpack.c.l.b16 %v3759
        %v3848 = vunpack.c.h.b16 %v3759
        %v3849 = vunpack.c.l.b16 %v3760
        %v3850 = vunpack.c.h.b16 %v3760
        %v3851 = vunpack.c.l.b16 %v3761
        %v3852 = vunpack.c.h.b16 %v3761
        %v3853 = vunpack.c.l.b16 %v3762
        %v3854 = vunpack.c.h.b16 %v3762
        %v3855 = vunpack.c.l.b16 %v3763
        %v3856 = vunpack.c.h.b16 %v3763
        %v3857 = vunpack.c.l.b16 %v3764
        %v3858 = vunpack.c.h.b16 %v3764
        %v3859 = vunpack.c.l.b16 %v3765
        %v3860 = vunpack.c.h.b16 %v3765
        %v3861 = vunpack.c.l.b16 %v3766
        %v3862 = vunpack.c.h.b16 %v3766
        %v3863 = vpack.c.b16 %v3801, %v3799
        %v3864 = vpack.c.b16 %v3802, %v3800
        %v3865 = vpack.c.b16 %v3805, %v3803
        %v3866 = vpack.c.b16 %v3806, %v3804
        %v3867 = vpack.c.b16 %v3809, %v3807
        %v3868 = vpack.c.b16 %v3810, %v3808
        %v3869 = vpack.c.b16 %v3813, %v3811
        %v3870 = vpack.c.b16 %v3814, %v3812
        %v3871 = vpack.c.b16 %v3817, %v3815
        %v3872 = vpack.c.b16 %v3818, %v3816
        %v3873 = vpack.c.b16 %v3821, %v3819
        %v3874 = vpack.c.b16 %v3822, %v3820
        %v3875 = vpack.c.b16 %v3825, %v3823
        %v3876 = vpack.c.b16 %v3826, %v3824
        %v3877 = vpack.c.b16 %v3829, %v3827
        %v3878 = vpack.c.b16 %v3830, %v3828
        %v3879 = vpack.c.b16 %v3833, %v3831
        %v3880 = vpack.c.b16 %v3834, %v3832
        %v3881 = vpack.c.b16 %v3837, %v3835
        %v3882 = vpack.c.b16 %v3838, %v3836
        %v3883 = vpack.c.b16 %v3841, %v3839
        %v3884 = vpack.c.b16 %v3842, %v3840
        %v3885 = vpack.c.b16 %v3845, %v3843
        %v3886 = vpack.c.b16 %v3846, %v3844
        %v3887 = vpack.c.b16 %v3849, %v3847
        %v3888 = vpack.c.b16 %v3850, %v3848
        %v3889 = vpack.c.b16 %v3853, %v3851
        %v3890 = vpack.c.b16 %v3854, %v3852
        %v3891 = vpack.c.b16 %v3857, %v3855
        %v3892 = vpack.c.b16 %v3858, %v3856
        %v3893 = vpack.c.b16 %v3861, %v3859
        %v3894 = vpack.c.b16 %v3862, %v3860
        %3927 = vmatpush.bf16.msra.mxu0 %v3877
        %3928 = vmatpush.bf16.msra.mxu0 %v3875
        %3929 = vmatpush.bf16.msra.mxu0 %v3873
        %3930 = vmatpush.bf16.msra.mxu0 %v3871
        %3931 = vmatpush.bf16.msra.mxu0 %v3869
        %3932 = vmatpush.bf16.msra.mxu0 %v3867
        %3933 = vmatpush.bf16.msra.mxu0 %v3865
        %3934 = vmatpush.bf16.msra.mxu0 %v3863
        %3935 = vmatmul.bf16.gmra.mxu0 %v3699
        %v3936 = vpop.f32.mrf.mxu0
        %v3937 = vadd.f32 0.0, %v3936
        %v3938 = vpop.f32.mrf.mxu0
        %3939 = vdwg.mxu0
        %3940 = vmatpush.bf16.msra.mxu0 %v3893
        %3941 = vmatpush.bf16.msra.mxu0 %v3891
        %3942 = vmatpush.bf16.msra.mxu0 %v3889
        %3943 = vmatpush.bf16.msra.mxu0 %v3887
        %3944 = vmatpush.bf16.msra.mxu0 %v3885
        %3945 = vmatpush.bf16.msra.mxu0 %v3883
        %3946 = vmatpush.bf16.msra.mxu0 %v3881
        %3947 = vmatpush.bf16.msra.mxu0 %v3879
        %3948 = vmatmul.bf16.gmra.mxu0 %v3700
        %v3949 = vpop.f32.mrf.mxu0
        %v3950 = vadd.f32 %v3937, %v3949
        %v3951 = vpop.f32.mrf.mxu0
        %3952 = vdwg.mxu0
        %3953 = vmatpush.bf16.msra.mxu0 %v3878
        %3954 = vmatpush.bf16.msra.mxu0 %v3876
        %3955 = vmatpush.bf16.msra.mxu0 %v3874
        %3956 = vmatpush.bf16.msra.mxu0 %v3872
        %3957 = vmatpush.bf16.msra.mxu0 %v3870
        %3958 = vmatpush.bf16.msra.mxu0 %v3868
        %3959 = vmatpush.bf16.msra.mxu0 %v3866
        %3960 = vmatpush.bf16.msra.mxu0 %v3864
        %3961 = vmatmul.bf16.gmra.mxu0 %v3699
        %v3962 = vpop.f32.mrf.mxu0
        %v3963 = vadd.f32 0.0, %v3962
        %v3964 = vpop.f32.mrf.mxu0
        %3965 = vdwg.mxu0
        %3966 = vmatpush.bf16.msra.mxu0 %v3894
        %3967 = vmatpush.bf16.msra.mxu0 %v3892
        %3968 = vmatpush.bf16.msra.mxu0 %v3890
        %3969 = vmatpush.bf16.msra.mxu0 %v3888
        %3970 = vmatpush.bf16.msra.mxu0 %v3886
        %3971 = vmatpush.bf16.msra.mxu0 %v3884
        %3972 = vmatpush.bf16.msra.mxu0 %v3882
        %3973 = vmatpush.bf16.msra.mxu0 %v3880
        %3974 = vmatmul.bf16.gmra.mxu0 %v3700
        %v3975 = vpop.f32.mrf.mxu0
        %v3976 = vadd.f32 %v3963, %v3975
        %v3977 = vpop.f32.mrf.mxu0
        %3978 = vdwg.mxu0
        %v4011 = vunpack.c.l.b16 %v3703
        %v4012 = vunpack.c.h.b16 %v3703
        %v4013 = vunpack.c.l.b16 %v3704
        %v4014 = vunpack.c.h.b16 %v3704
        %v4015 = vunpack.c.l.b16 %v3705
        %v4016 = vunpack.c.h.b16 %v3705
        %v4017 = vunpack.c.l.b16 %v3706
        %v4018 = vunpack.c.h.b16 %v3706
        %v4019 = vunpack.c.l.b16 %v3707
        %v4020 = vunpack.c.h.b16 %v3707
        %v4021 = vunpack.c.l.b16 %v3708
        %v4022 = vunpack.c.h.b16 %v3708
        %v4023 = vunpack.c.l.b16 %v3709
        %v4024 = vunpack.c.h.b16 %v3709
        %v4025 = vunpack.c.l.b16 %v3710
        %v4026 = vunpack.c.h.b16 %v3710
        %v4027 = vunpack.c.l.b16 %v3711
        %v4028 = vunpack.c.h.b16 %v3711
        %v4029 = vunpack.c.l.b16 %v3712
        %v4030 = vunpack.c.h.b16 %v3712
        %v4031 = vunpack.c.l.b16 %v3713
        %v4032 = vunpack.c.h.b16 %v3713
        %v4033 = vunpack.c.l.b16 %v3714
        %v4034 = vunpack.c.h.b16 %v3714
        %v4035 = vunpack.c.l.b16 %v3715
        %v4036 = vunpack.c.h.b16 %v3715
        %v4037 = vunpack.c.l.b16 %v3716
        %v4038 = vunpack.c.h.b16 %v3716
        %v4039 = vunpack.c.l.b16 %v3717
        %v4040 = vunpack.c.h.b16 %v3717
        %v4041 = vunpack.c.l.b16 %v3718
        %v4042 = vunpack.c.h.b16 %v3718
        %v4043 = vunpack.c.l.b16 %v3719
        %v4044 = vunpack.c.h.b16 %v3719
        %v4045 = vunpack.c.l.b16 %v3720
        %v4046 = vunpack.c.h.b16 %v3720
        %v4047 = vunpack.c.l.b16 %v3721
        %v4048 = vunpack.c.h.b16 %v3721
        %v4049 = vunpack.c.l.b16 %v3722
        %v4050 = vunpack.c.h.b16 %v3722
        %v4051 = vunpack.c.l.b16 %v3723
        %v4052 = vunpack.c.h.b16 %v3723
        %v4053 = vunpack.c.l.b16 %v3724
        %v4054 = vunpack.c.h.b16 %v3724
        %v4055 = vunpack.c.l.b16 %v3725
        %v4056 = vunpack.c.h.b16 %v3725
        %v4057 = vunpack.c.l.b16 %v3726
        %v4058 = vunpack.c.h.b16 %v3726
        %v4059 = vunpack.c.l.b16 %v3727
        %v4060 = vunpack.c.h.b16 %v3727
        %v4061 = vunpack.c.l.b16 %v3728
        %v4062 = vunpack.c.h.b16 %v3728
        %v4063 = vunpack.c.l.b16 %v3729
        %v4064 = vunpack.c.h.b16 %v3729
        %v4065 = vunpack.c.l.b16 %v3730
        %v4066 = vunpack.c.h.b16 %v3730
        %v4067 = vunpack.c.l.b16 %v3731
        %v4068 = vunpack.c.h.b16 %v3731
        %v4069 = vunpack.c.l.b16 %v3732
        %v4070 = vunpack.c.h.b16 %v3732
        %v4071 = vunpack.c.l.b16 %v3733
        %v4072 = vunpack.c.h.b16 %v3733
        %v4073 = vunpack.c.l.b16 %v3734
        %v4074 = vunpack.c.h.b16 %v3734
        %v4075 = vpack.c.b16 %v4013, %v4011
        %v4076 = vpack.c.b16 %v4014, %v4012
        %v4077 = vpack.c.b16 %v4017, %v4015
        %v4078 = vpack.c.b16 %v4018, %v4016
        %v4079 = vpack.c.b16 %v4021, %v4019
        %v4080 = vpack.c.b16 %v4022, %v4020
        %v4081 = vpack.c.b16 %v4025, %v4023
        %v4082 = vpack.c.b16 %v4026, %v4024
        %v4083 = vpack.c.b16 %v4029, %v4027
        %v4084 = vpack.c.b16 %v4030, %v4028
        %v4085 = vpack.c.b16 %v4033, %v4031
        %v4086 = vpack.c.b16 %v4034, %v4032
        %v4087 = vpack.c.b16 %v4037, %v4035
        %v4088 = vpack.c.b16 %v4038, %v4036
        %v4089 = vpack.c.b16 %v4041, %v4039
        %v4090 = vpack.c.b16 %v4042, %v4040
        %v4091 = vpack.c.b16 %v4045, %v4043
        %v4092 = vpack.c.b16 %v4046, %v4044
        %v4093 = vpack.c.b16 %v4049, %v4047
        %v4094 = vpack.c.b16 %v4050, %v4048
        %v4095 = vpack.c.b16 %v4053, %v4051
        %v4096 = vpack.c.b16 %v4054, %v4052
        %v4097 = vpack.c.b16 %v4057, %v4055
        %v4098 = vpack.c.b16 %v4058, %v4056
        %v4099 = vpack.c.b16 %v4061, %v4059
        %v4100 = vpack.c.b16 %v4062, %v4060
        %v4101 = vpack.c.b16 %v4065, %v4063
        %v4102 = vpack.c.b16 %v4066, %v4064
        %v4103 = vpack.c.b16 %v4069, %v4067
        %v4104 = vpack.c.b16 %v4070, %v4068
        %v4105 = vpack.c.b16 %v4073, %v4071
        %v4106 = vpack.c.b16 %v4074, %v4072
        %4139 = vmatpush.bf16.msra.mxu0 %v4089
        %4140 = vmatpush.bf16.msra.mxu0 %v4087
        %4141 = vmatpush.bf16.msra.mxu0 %v4085
        %4142 = vmatpush.bf16.msra.mxu0 %v4083
        %4143 = vmatpush.bf16.msra.mxu0 %v4081
        %4144 = vmatpush.bf16.msra.mxu0 %v4079
        %4145 = vmatpush.bf16.msra.mxu0 %v4077
        %4146 = vmatpush.bf16.msra.mxu0 %v4075
        %4147 = vmatmul.bf16.gmra.mxu0 %v636
        %v4148 = vpop.f32.mrf.mxu0
        %v4149 = vadd.f32 %v3950, %v4148
        %v4150 = vpop.f32.mrf.mxu0
        %4151 = vdwg.mxu0
        %4152 = vmatpush.bf16.msra.mxu0 %v4105
        %4153 = vmatpush.bf16.msra.mxu0 %v4103
        %4154 = vmatpush.bf16.msra.mxu0 %v4101
        %4155 = vmatpush.bf16.msra.mxu0 %v4099
        %4156 = vmatpush.bf16.msra.mxu0 %v4097
        %4157 = vmatpush.bf16.msra.mxu0 %v4095
        %4158 = vmatpush.bf16.msra.mxu0 %v4093
        %4159 = vmatpush.bf16.msra.mxu0 %v4091
        %4160 = vmatmul.bf16.gmra.mxu0 %v637
        %v4161 = vpop.f32.mrf.mxu0
        %v4162 = vadd.f32 %v4149, %v4161
        %v4163 = vpop.f32.mrf.mxu0
        %4164 = vdwg.mxu0
        %4165 = vmatpush.bf16.msra.mxu0 %v4090
        %4166 = vmatpush.bf16.msra.mxu0 %v4088
        %4167 = vmatpush.bf16.msra.mxu0 %v4086
        %4168 = vmatpush.bf16.msra.mxu0 %v4084
        %4169 = vmatpush.bf16.msra.mxu0 %v4082
        %4170 = vmatpush.bf16.msra.mxu0 %v4080
        %4171 = vmatpush.bf16.msra.mxu0 %v4078
        %4172 = vmatpush.bf16.msra.mxu0 %v4076
        %4173 = vmatmul.bf16.gmra.mxu0 %v636
        %v4174 = vpop.f32.mrf.mxu0
        %v4175 = vadd.f32 %v3976, %v4174
        %v4176 = vpop.f32.mrf.mxu0
        %4177 = vdwg.mxu0
        %4178 = vmatpush.bf16.msra.mxu0 %v4106
        %4179 = vmatpush.bf16.msra.mxu0 %v4104
        %4180 = vmatpush.bf16.msra.mxu0 %v4102
        %4181 = vmatpush.bf16.msra.mxu0 %v4100
        %4182 = vmatpush.bf16.msra.mxu0 %v4098
        %4183 = vmatpush.bf16.msra.mxu0 %v4096
        %4184 = vmatpush.bf16.msra.mxu0 %v4094
        %4185 = vmatpush.bf16.msra.mxu0 %v4092
        %4186 = vmatmul.bf16.gmra.mxu0 %v637
        %v4187 = vpop.f32.mrf.mxu0
        %v4188 = vadd.f32 %v4175, %v4187
        %v4189 = vpop.f32.mrf.mxu0
        %4190 = vdwg.mxu0
        %v4191 = vld [vmem:[%s10 + $0x200] sm:$0xff]
        %v4192 = vld [vmem:[%s10 + $0x208] sm:$0xff]
        %v4193 = vld [vmem:[%s10 + $0x210] sm:$0xff]
        %v4194 = vld [vmem:[%s10 + $0x218] sm:$0xff]
        %v4195 = vld [vmem:[%s10 + $0x220] sm:$0xff]
        %v4196 = vld [vmem:[%s10 + $0x228] sm:$0xff]
        %v4197 = vld [vmem:[%s10 + $0x230] sm:$0xff]
        %v4198 = vld [vmem:[%s10 + $0x238] sm:$0xff]
        %v4199 = vld [vmem:[%s10 + $0x240] sm:$0xff]
        %v4200 = vld [vmem:[%s10 + $0x248] sm:$0xff]
        %v4201 = vld [vmem:[%s10 + $0x250] sm:$0xff]
        %v4202 = vld [vmem:[%s10 + $0x258] sm:$0xff]
        %v4203 = vld [vmem:[%s10 + $0x260] sm:$0xff]
        %v4204 = vld [vmem:[%s10 + $0x268] sm:$0xff]
        %v4205 = vld [vmem:[%s10 + $0x270] sm:$0xff]
        %v4206 = vld [vmem:[%s10 + $0x278] sm:$0xff]
        %v4207 = vld [vmem:[%s10 + $0x280] sm:$0xff]
        %v4208 = vld [vmem:[%s10 + $0x288] sm:$0xff]
        %v4209 = vld [vmem:[%s10 + $0x290] sm:$0xff]
        %v4210 = vld [vmem:[%s10 + $0x298] sm:$0xff]
        %v4211 = vld [vmem:[%s10 + $0x2a0] sm:$0xff]
        %v4212 = vld [vmem:[%s10 + $0x2a8] sm:$0xff]
        %v4213 = vld [vmem:[%s10 + $0x2b0] sm:$0xff]
        %v4214 = vld [vmem:[%s10 + $0x2b8] sm:$0xff]
        %v4215 = vld [vmem:[%s10 + $0x2c0] sm:$0xff]
        %v4216 = vld [vmem:[%s10 + $0x2c8] sm:$0xff]
        %v4217 = vld [vmem:[%s10 + $0x2d0] sm:$0xff]
        %v4218 = vld [vmem:[%s10 + $0x2d8] sm:$0xff]
        %v4219 = vld [vmem:[%s10 + $0x2e0] sm:$0xff]
        %v4220 = vld [vmem:[%s10 + $0x2e8] sm:$0xff]
        %v4221 = vld [vmem:[%s10 + $0x2f0] sm:$0xff]
        %v4222 = vld [vmem:[%s10 + $0x2f8] sm:$0xff]
        %v4255 = vunpack.c.l.b16 %v4191
        %v4256 = vunpack.c.h.b16 %v4191
        %v4257 = vunpack.c.l.b16 %v4192
        %v4258 = vunpack.c.h.b16 %v4192
        %v4259 = vunpack.c.l.b16 %v4193
        %v4260 = vunpack.c.h.b16 %v4193
        %v4261 = vunpack.c.l.b16 %v4194
        %v4262 = vunpack.c.h.b16 %v4194
        %v4263 = vunpack.c.l.b16 %v4195
        %v4264 = vunpack.c.h.b16 %v4195
        %v4265 = vunpack.c.l.b16 %v4196
        %v4266 = vunpack.c.h.b16 %v4196
        %v4267 = vunpack.c.l.b16 %v4197
        %v4268 = vunpack.c.h.b16 %v4197
        %v4269 = vunpack.c.l.b16 %v4198
        %v4270 = vunpack.c.h.b16 %v4198
        %v4271 = vunpack.c.l.b16 %v4199
        %v4272 = vunpack.c.h.b16 %v4199
        %v4273 = vunpack.c.l.b16 %v4200
        %v4274 = vunpack.c.h.b16 %v4200
        %v4275 = vunpack.c.l.b16 %v4201
        %v4276 = vunpack.c.h.b16 %v4201
        %v4277 = vunpack.c.l.b16 %v4202
        %v4278 = vunpack.c.h.b16 %v4202
        %v4279 = vunpack.c.l.b16 %v4203
        %v4280 = vunpack.c.h.b16 %v4203
        %v4281 = vunpack.c.l.b16 %v4204
        %v4282 = vunpack.c.h.b16 %v4204
        %v4283 = vunpack.c.l.b16 %v4205
        %v4284 = vunpack.c.h.b16 %v4205
        %v4285 = vunpack.c.l.b16 %v4206
        %v4286 = vunpack.c.h.b16 %v4206
        %v4287 = vunpack.c.l.b16 %v4207
        %v4288 = vunpack.c.h.b16 %v4207
        %v4289 = vunpack.c.l.b16 %v4208
        %v4290 = vunpack.c.h.b16 %v4208
        %v4291 = vunpack.c.l.b16 %v4209
        %v4292 = vunpack.c.h.b16 %v4209
        %v4293 = vunpack.c.l.b16 %v4210
        %v4294 = vunpack.c.h.b16 %v4210
        %v4295 = vunpack.c.l.b16 %v4211
        %v4296 = vunpack.c.h.b16 %v4211
        %v4297 = vunpack.c.l.b16 %v4212
        %v4298 = vunpack.c.h.b16 %v4212
        %v4299 = vunpack.c.l.b16 %v4213
        %v4300 = vunpack.c.h.b16 %v4213
        %v4301 = vunpack.c.l.b16 %v4214
        %v4302 = vunpack.c.h.b16 %v4214
        %v4303 = vunpack.c.l.b16 %v4215
        %v4304 = vunpack.c.h.b16 %v4215
        %v4305 = vunpack.c.l.b16 %v4216
        %v4306 = vunpack.c.h.b16 %v4216
        %v4307 = vunpack.c.l.b16 %v4217
        %v4308 = vunpack.c.h.b16 %v4217
        %v4309 = vunpack.c.l.b16 %v4218
        %v4310 = vunpack.c.h.b16 %v4218
        %v4311 = vunpack.c.l.b16 %v4219
        %v4312 = vunpack.c.h.b16 %v4219
        %v4313 = vunpack.c.l.b16 %v4220
        %v4314 = vunpack.c.h.b16 %v4220
        %v4315 = vunpack.c.l.b16 %v4221
        %v4316 = vunpack.c.h.b16 %v4221
        %v4317 = vunpack.c.l.b16 %v4222
        %v4318 = vunpack.c.h.b16 %v4222
        %v4319 = vpack.c.b16 %v4257, %v4255
        %v4320 = vpack.c.b16 %v4258, %v4256
        %v4321 = vpack.c.b16 %v4261, %v4259
        %v4322 = vpack.c.b16 %v4262, %v4260
        %v4323 = vpack.c.b16 %v4265, %v4263
        %v4324 = vpack.c.b16 %v4266, %v4264
        %v4325 = vpack.c.b16 %v4269, %v4267
        %v4326 = vpack.c.b16 %v4270, %v4268
        %v4327 = vpack.c.b16 %v4273, %v4271
        %v4328 = vpack.c.b16 %v4274, %v4272
        %v4329 = vpack.c.b16 %v4277, %v4275
        %v4330 = vpack.c.b16 %v4278, %v4276
        %v4331 = vpack.c.b16 %v4281, %v4279
        %v4332 = vpack.c.b16 %v4282, %v4280
        %v4333 = vpack.c.b16 %v4285, %v4283
        %v4334 = vpack.c.b16 %v4286, %v4284
        %v4335 = vpack.c.b16 %v4289, %v4287
        %v4336 = vpack.c.b16 %v4290, %v4288
        %v4337 = vpack.c.b16 %v4293, %v4291
        %v4338 = vpack.c.b16 %v4294, %v4292
        %v4339 = vpack.c.b16 %v4297, %v4295
        %v4340 = vpack.c.b16 %v4298, %v4296
        %v4341 = vpack.c.b16 %v4301, %v4299
        %v4342 = vpack.c.b16 %v4302, %v4300
        %v4343 = vpack.c.b16 %v4305, %v4303
        %v4344 = vpack.c.b16 %v4306, %v4304
        %v4345 = vpack.c.b16 %v4309, %v4307
        %v4346 = vpack.c.b16 %v4310, %v4308
        %v4347 = vpack.c.b16 %v4313, %v4311
        %v4348 = vpack.c.b16 %v4314, %v4312
        %v4349 = vpack.c.b16 %v4317, %v4315
        %v4350 = vpack.c.b16 %v4318, %v4316
        %4383 = vmatpush.bf16.msra.mxu0 %v4333
        %4384 = vmatpush.bf16.msra.mxu0 %v4331
        %4385 = vmatpush.bf16.msra.mxu0 %v4329
        %4386 = vmatpush.bf16.msra.mxu0 %v4327
        %4387 = vmatpush.bf16.msra.mxu0 %v4325
        %4388 = vmatpush.bf16.msra.mxu0 %v4323
        %4389 = vmatpush.bf16.msra.mxu0 %v4321
        %4390 = vmatpush.bf16.msra.mxu0 %v4319
        %4391 = vmatmul.bf16.gmra.mxu0 %v3701
        %v4392 = vpop.f32.mrf.mxu0
        %v4393 = vadd.f32 0.0, %v4392
        %v4394 = vpop.f32.mrf.mxu0
        %4395 = vdwg.mxu0
        %4396 = vmatpush.bf16.msra.mxu0 %v4349
        %4397 = vmatpush.bf16.msra.mxu0 %v4347
        %4398 = vmatpush.bf16.msra.mxu0 %v4345
        %4399 = vmatpush.bf16.msra.mxu0 %v4343
        %4400 = vmatpush.bf16.msra.mxu0 %v4341
        %4401 = vmatpush.bf16.msra.mxu0 %v4339
        %4402 = vmatpush.bf16.msra.mxu0 %v4337
        %4403 = vmatpush.bf16.msra.mxu0 %v4335
        %4404 = vmatmul.bf16.gmra.mxu0 %v3702
        %v4405 = vpop.f32.mrf.mxu0
        %v4406 = vadd.f32 %v4393, %v4405
        %v4407 = vpop.f32.mrf.mxu0
        %4408 = vdwg.mxu0
        %4409 = vmatpush.bf16.msra.mxu0 %v4334
        %4410 = vmatpush.bf16.msra.mxu0 %v4332
        %4411 = vmatpush.bf16.msra.mxu0 %v4330
        %4412 = vmatpush.bf16.msra.mxu0 %v4328
        %4413 = vmatpush.bf16.msra.mxu0 %v4326
        %4414 = vmatpush.bf16.msra.mxu0 %v4324
        %4415 = vmatpush.bf16.msra.mxu0 %v4322
        %4416 = vmatpush.bf16.msra.mxu0 %v4320
        %4417 = vmatmul.bf16.gmra.mxu0 %v3701
        %v4418 = vpop.f32.mrf.mxu0
        %v4419 = vadd.f32 0.0, %v4418
        %v4420 = vpop.f32.mrf.mxu0
        %4421 = vdwg.mxu0
        %4422 = vmatpush.bf16.msra.mxu0 %v4350
        %4423 = vmatpush.bf16.msra.mxu0 %v4348
        %4424 = vmatpush.bf16.msra.mxu0 %v4346
        %4425 = vmatpush.bf16.msra.mxu0 %v4344
        %4426 = vmatpush.bf16.msra.mxu0 %v4342
        %4427 = vmatpush.bf16.msra.mxu0 %v4340
        %4428 = vmatpush.bf16.msra.mxu0 %v4338
        %4429 = vmatpush.bf16.msra.mxu0 %v4336
        %4430 = vmatmul.bf16.gmra.mxu0 %v3702
        %v4431 = vpop.f32.mrf.mxu0
        %v4432 = vadd.f32 %v4419, %v4431
        %v4433 = vpop.f32.mrf.mxu0
        %4434 = vdwg.mxu0
        %v4435 = vadd.f32 %v4162, %v4406
        %v4436 = vadd.f32 %v4188, %v4432
        %v4437 = vld [vmem:[%s11] sm:$0x3]
        %v4439 = vperm.slane %v4437, 0
        %v4440 = vperm.slane %v4437, 1
        %v4443 = vadd.f32 %v4435, %v4439
        %v4444 = vadd.f32 %v4436, %v4440
        %v4445 = vsub.f32 0.0, %v4443
        %v4446 = vsub.f32 0.0, %v4444
        %v4447 = vmul.f32 %v4445, 1.442695
        %v4448 = vpow.pop %v4447
        %v4449 = vmul.f32 %v4446, 1.442695
        %v4450 = vpow.pop %v4449
        %v4451 = vadd.f32 %v4448, 1.0
        %v4452 = vadd.f32 %v4450, 1.0
        %v4453 = vrcp.pop %v4451
        %v4454 = vrcp.pop %v4452
        %v4455 = vmul.f32 %v4453, %v634
        %v4456 = vmul.f32 %v4454, %v635
        %v4457 = vpack.c.bf16 %v4455, %v4455
        %v4458 = vpack.c.bf16 %v4456, %v4456
        %v4459 = vsub.f32 1.0, %v4453
        %v4460 = vsub.f32 1.0, %v4454
        %v4461 = vmul.f32 %v4459, %v3697
        %v4462 = vmul.f32 %v4460, %v3698
        %v4463 = vpack.c.bf16 %v4461, %v4461
        %v4464 = vpack.c.bf16 %v4462, %v4462
        %v4465 = vld [vmem:[%s12] sm:$0xf]
        %v4466 = vld [vmem:[%s12 + $0x4] sm:$0xf]
        %v4467 = vld [vmem:[%s12 + $0x8] sm:$0xf]
        %v4468 = vld [vmem:[%s12 + $0xc] sm:$0xf]
        %v4469 = vld [vmem:[%s12 + $0x10] sm:$0xf]
        %v4470 = vld [vmem:[%s12 + $0x14] sm:$0xf]
        %v4471 = vld [vmem:[%s12 + $0x18] sm:$0xf]
        %v4472 = vld [vmem:[%s12 + $0x1c] sm:$0xf]
        %v4473 = vld [vmem:[%s12 + $0x20] sm:$0xf]
        %v4474 = vld [vmem:[%s12 + $0x24] sm:$0xf]
        %v4475 = vld [vmem:[%s12 + $0x28] sm:$0xf]
        %v4476 = vld [vmem:[%s12 + $0x2c] sm:$0xf]
        %v4477 = vld [vmem:[%s12 + $0x30] sm:$0xf]
        %v4478 = vld [vmem:[%s12 + $0x34] sm:$0xf]
        %v4479 = vld [vmem:[%s12 + $0x38] sm:$0xf]
        %v4480 = vld [vmem:[%s12 + $0x3c] sm:$0xf]
        %v4481 = vld [vmem:[%s12 + $0x40] sm:$0xf]
        %v4482 = vld [vmem:[%s12 + $0x44] sm:$0xf]
        %v4483 = vld [vmem:[%s12 + $0x48] sm:$0xf]
        %v4484 = vld [vmem:[%s12 + $0x4c] sm:$0xf]
        %v4485 = vld [vmem:[%s12 + $0x50] sm:$0xf]
        %v4486 = vld [vmem:[%s12 + $0x54] sm:$0xf]
        %v4487 = vld [vmem:[%s12 + $0x58] sm:$0xf]
        %v4488 = vld [vmem:[%s12 + $0x5c] sm:$0xf]
        %v4489 = vld [vmem:[%s12 + $0x60] sm:$0xf]
        %v4490 = vld [vmem:[%s12 + $0x64] sm:$0xf]
        %v4491 = vld [vmem:[%s12 + $0x68] sm:$0xf]
        %v4492 = vld [vmem:[%s12 + $0x6c] sm:$0xf]
        %v4493 = vld [vmem:[%s12 + $0x70] sm:$0xf]
        %v4494 = vld [vmem:[%s12 + $0x74] sm:$0xf]
        %v4495 = vld [vmem:[%s12 + $0x78] sm:$0xf]
        %v4496 = vld [vmem:[%s12 + $0x7c] sm:$0xf]
        %v4497 = vld [vmem:[%s12 + $0x80] sm:$0xf]
        %v4498 = vld [vmem:[%s12 + $0x84] sm:$0xf]
        %v4499 = vld [vmem:[%s12 + $0x88] sm:$0xf]
        %v4500 = vld [vmem:[%s12 + $0x8c] sm:$0xf]
        %v4501 = vld [vmem:[%s12 + $0x90] sm:$0xf]
        %v4502 = vld [vmem:[%s12 + $0x94] sm:$0xf]
        %v4503 = vld [vmem:[%s12 + $0x98] sm:$0xf]
        %v4504 = vld [vmem:[%s12 + $0x9c] sm:$0xf]
        %v4505 = vld [vmem:[%s12 + $0xa0] sm:$0xf]
        %v4506 = vld [vmem:[%s12 + $0xa4] sm:$0xf]
        %v4507 = vld [vmem:[%s12 + $0xa8] sm:$0xf]
        %v4508 = vld [vmem:[%s12 + $0xac] sm:$0xf]
        %v4509 = vld [vmem:[%s12 + $0xb0] sm:$0xf]
        %v4510 = vld [vmem:[%s12 + $0xb4] sm:$0xf]
        %v4511 = vld [vmem:[%s12 + $0xb8] sm:$0xf]
        %v4512 = vld [vmem:[%s12 + $0xbc] sm:$0xf]
        %v4513 = vld [vmem:[%s12 + $0xc0] sm:$0xf]
        %v4514 = vld [vmem:[%s12 + $0xc4] sm:$0xf]
        %v4515 = vld [vmem:[%s12 + $0xc8] sm:$0xf]
        %v4516 = vld [vmem:[%s12 + $0xcc] sm:$0xf]
        %v4517 = vld [vmem:[%s12 + $0xd0] sm:$0xf]
        %v4518 = vld [vmem:[%s12 + $0xd4] sm:$0xf]
        %v4519 = vld [vmem:[%s12 + $0xd8] sm:$0xf]
        %v4520 = vld [vmem:[%s12 + $0xdc] sm:$0xf]
        %v4521 = vld [vmem:[%s12 + $0xe0] sm:$0xf]
        %v4522 = vld [vmem:[%s12 + $0xe4] sm:$0xf]
        %v4523 = vld [vmem:[%s12 + $0xe8] sm:$0xf]
        %v4524 = vld [vmem:[%s12 + $0xec] sm:$0xf]
        %v4525 = vld [vmem:[%s12 + $0xf0] sm:$0xf]
        %v4526 = vld [vmem:[%s12 + $0xf4] sm:$0xf]
        %v4527 = vld [vmem:[%s12 + $0xf8] sm:$0xf]
        %v4528 = vld [vmem:[%s12 + $0xfc] sm:$0xf]
        %v4561 = vunpack.c.l.b16 %v4497
        %v4562 = vunpack.c.l.b16 %v4498
        %v4563 = vunpack.c.l.b16 %v4499
        %v4564 = vunpack.c.l.b16 %v4500
        %v4565 = vunpack.c.l.b16 %v4501
        %v4566 = vunpack.c.l.b16 %v4502
        %v4567 = vunpack.c.l.b16 %v4503
        %v4568 = vunpack.c.l.b16 %v4504
        %v4569 = vunpack.c.l.b16 %v4505
        %v4570 = vunpack.c.l.b16 %v4506
        %v4571 = vunpack.c.l.b16 %v4507
        %v4572 = vunpack.c.l.b16 %v4508
        %v4573 = vunpack.c.l.b16 %v4509
        %v4574 = vunpack.c.l.b16 %v4510
        %v4575 = vunpack.c.l.b16 %v4511
        %v4576 = vunpack.c.l.b16 %v4512
        %v4577 = vunpack.c.l.b16 %v4513
        %v4578 = vunpack.c.l.b16 %v4514
        %v4579 = vunpack.c.l.b16 %v4515
        %v4580 = vunpack.c.l.b16 %v4516
        %v4581 = vunpack.c.l.b16 %v4517
        %v4582 = vunpack.c.l.b16 %v4518
        %v4583 = vunpack.c.l.b16 %v4519
        %v4584 = vunpack.c.l.b16 %v4520
        %v4585 = vunpack.c.l.b16 %v4521
        %v4586 = vunpack.c.l.b16 %v4522
        %v4587 = vunpack.c.l.b16 %v4523
        %v4588 = vunpack.c.l.b16 %v4524
        %v4589 = vunpack.c.l.b16 %v4525
        %v4590 = vunpack.c.l.b16 %v4526
        %v4591 = vunpack.c.l.b16 %v4527
        %v4592 = vunpack.c.l.b16 %v4528
        %v4593 = vpack.c.b16 %v4562, %v4561
        %v4594 = vpack.c.b16 %v4564, %v4563
        %v4595 = vpack.c.b16 %v4566, %v4565
        %v4596 = vpack.c.b16 %v4568, %v4567
        %v4597 = vpack.c.b16 %v4570, %v4569
        %v4598 = vpack.c.b16 %v4572, %v4571
        %v4599 = vpack.c.b16 %v4574, %v4573
        %v4600 = vpack.c.b16 %v4576, %v4575
        %v4601 = vpack.c.b16 %v4578, %v4577
        %v4602 = vpack.c.b16 %v4580, %v4579
        %v4603 = vpack.c.b16 %v4582, %v4581
        %v4604 = vpack.c.b16 %v4584, %v4583
        %v4605 = vpack.c.b16 %v4586, %v4585
        %v4606 = vpack.c.b16 %v4588, %v4587
        %v4607 = vpack.c.b16 %v4590, %v4589
        %v4608 = vpack.c.b16 %v4592, %v4591
        %4625 = vmatpush.bf16.msra.mxu0 %v4600
        %4626 = vmatpush.bf16.msra.mxu0 %v4599
        %4627 = vmatpush.bf16.msra.mxu0 %v4598
        %4628 = vmatpush.bf16.msra.mxu0 %v4597
        %4629 = vmatpush.bf16.msra.mxu0 %v4596
        %4630 = vmatpush.bf16.msra.mxu0 %v4595
        %4631 = vmatpush.bf16.msra.mxu0 %v4594
        %4632 = vmatpush.bf16.msra.mxu0 %v4593
        %4633 = vmatmul.bf16.gmra.mxu0 %v4463
        %v4634 = vpop.f32.mrf.mxu0
        %v4635 = vadd.f32 0.0, %v4634
        %v4636 = vpop.f32.mrf.mxu0
        %4637 = vdwg.mxu0
        %4638 = vmatpush.bf16.msra.mxu0 %v4608
        %4639 = vmatpush.bf16.msra.mxu0 %v4607
        %4640 = vmatpush.bf16.msra.mxu0 %v4606
        %4641 = vmatpush.bf16.msra.mxu0 %v4605
        %4642 = vmatpush.bf16.msra.mxu0 %v4604
        %4643 = vmatpush.bf16.msra.mxu0 %v4603
        %4644 = vmatpush.bf16.msra.mxu0 %v4602
        %4645 = vmatpush.bf16.msra.mxu0 %v4601
        %4646 = vmatmul.bf16.gmra.mxu0 %v4464
        %v4647 = vpop.f32.mrf.mxu0
        %v4648 = vadd.f32 %v4635, %v4647
        %v4649 = vpop.f32.mrf.mxu0
        %4650 = vdwg.mxu0
        %v4683 = vunpack.c.l.b16 %v4465
        %v4684 = vunpack.c.l.b16 %v4466
        %v4685 = vunpack.c.l.b16 %v4467
        %v4686 = vunpack.c.l.b16 %v4468
        %v4687 = vunpack.c.l.b16 %v4469
        %v4688 = vunpack.c.l.b16 %v4470
        %v4689 = vunpack.c.l.b16 %v4471
        %v4690 = vunpack.c.l.b16 %v4472
        %v4691 = vunpack.c.l.b16 %v4473
        %v4692 = vunpack.c.l.b16 %v4474
        %v4693 = vunpack.c.l.b16 %v4475
        %v4694 = vunpack.c.l.b16 %v4476
        %v4695 = vunpack.c.l.b16 %v4477
        %v4696 = vunpack.c.l.b16 %v4478
        %v4697 = vunpack.c.l.b16 %v4479
        %v4698 = vunpack.c.l.b16 %v4480
        %v4699 = vunpack.c.l.b16 %v4481
        %v4700 = vunpack.c.l.b16 %v4482
        %v4701 = vunpack.c.l.b16 %v4483
        %v4702 = vunpack.c.l.b16 %v4484
        %v4703 = vunpack.c.l.b16 %v4485
        %v4704 = vunpack.c.l.b16 %v4486
        %v4705 = vunpack.c.l.b16 %v4487
        %v4706 = vunpack.c.l.b16 %v4488
        %v4707 = vunpack.c.l.b16 %v4489
        %v4708 = vunpack.c.l.b16 %v4490
        %v4709 = vunpack.c.l.b16 %v4491
        %v4710 = vunpack.c.l.b16 %v4492
        %v4711 = vunpack.c.l.b16 %v4493
        %v4712 = vunpack.c.l.b16 %v4494
        %v4713 = vunpack.c.l.b16 %v4495
        %v4714 = vunpack.c.l.b16 %v4496
        %v4715 = vpack.c.b16 %v4684, %v4683
        %v4716 = vpack.c.b16 %v4686, %v4685
        %v4717 = vpack.c.b16 %v4688, %v4687
        %v4718 = vpack.c.b16 %v4690, %v4689
        %v4719 = vpack.c.b16 %v4692, %v4691
        %v4720 = vpack.c.b16 %v4694, %v4693
        %v4721 = vpack.c.b16 %v4696, %v4695
        %v4722 = vpack.c.b16 %v4698, %v4697
        %v4723 = vpack.c.b16 %v4700, %v4699
        %v4724 = vpack.c.b16 %v4702, %v4701
        %v4725 = vpack.c.b16 %v4704, %v4703
        %v4726 = vpack.c.b16 %v4706, %v4705
        %v4727 = vpack.c.b16 %v4708, %v4707
        %v4728 = vpack.c.b16 %v4710, %v4709
        %v4729 = vpack.c.b16 %v4712, %v4711
        %v4730 = vpack.c.b16 %v4714, %v4713
        %4747 = vmatpush.bf16.msra.mxu0 %v4722
        %4748 = vmatpush.bf16.msra.mxu0 %v4721
        %4749 = vmatpush.bf16.msra.mxu0 %v4720
        %4750 = vmatpush.bf16.msra.mxu0 %v4719
        %4751 = vmatpush.bf16.msra.mxu0 %v4718
        %4752 = vmatpush.bf16.msra.mxu0 %v4717
        %4753 = vmatpush.bf16.msra.mxu0 %v4716
        %4754 = vmatpush.bf16.msra.mxu0 %v4715
        %4755 = vmatmul.bf16.gmra.mxu0 %v4457
        %v4756 = vpop.f32.mrf.mxu0
        %v4757 = vadd.f32 %v4648, %v4756
        %v4758 = vpop.f32.mrf.mxu0
        %4759 = vdwg.mxu0
        %4760 = vmatpush.bf16.msra.mxu0 %v4730
        %4761 = vmatpush.bf16.msra.mxu0 %v4729
        %4762 = vmatpush.bf16.msra.mxu0 %v4728
        %4763 = vmatpush.bf16.msra.mxu0 %v4727
        %4764 = vmatpush.bf16.msra.mxu0 %v4726
        %4765 = vmatpush.bf16.msra.mxu0 %v4725
        %4766 = vmatpush.bf16.msra.mxu0 %v4724
        %4767 = vmatpush.bf16.msra.mxu0 %v4723
        %4768 = vmatmul.bf16.gmra.mxu0 %v4458
        %v4769 = vpop.f32.mrf.mxu0
        %v4770 = vadd.f32 %v4757, %v4769
        %v4771 = vpop.f32.mrf.mxu0
        %4772 = vdwg.mxu0
        %v4773 = vld [vmem:[%s13] sm:$0x1]
        %v4775 = vperm.slane %v4773, 0
        %v4777 = vadd.f32 %v4770, %v4775
        %v4778 = vld [vmem:[%s14] sm:$0x1]
        %v4779 = vld [vmem:[%s15] sm:$0x1]
        %vm4780 = vcmask 523264
        %v4781 = vsel %vm4780, %v4777, 0.0
        %4782 = vadd.xlane.f32.xlu0 %v4781
        %v4783 = vpop.xlane.xlu0 %4782
        %v4784 = vrcp.pop 64.0
        %v4785 = vmul.f32 64.0, %v4784
        %v4786 = vsub.f32 1.0, %v4785
        %v4787 = vmul.f32 %v4784, %v4786
        %v4788 = vadd.f32 %v4784, %v4787
        %vm4789 = vweird.f32 %v4784
        %v4790 = vsel %vm4789, %v4784, %v4788
        %v4791 = vmul.f32 %v4783, %v4790
        %v4792 = vsub.f32 %v4777, %v4791
        %v4793 = vmul.f32 %v4792, %v4792
        %v4794 = vsel %vm4780, %v4793, 0.0
        %4795 = vadd.xlane.f32.xlu0 %v4794
        %v4796 = vpop.xlane.xlu0 %4795
        %v4797 = vmul.f32 %v4796, %v4790
        %v4798 = vadd.f32 %v4797, 1e-05
        %v4799 = vrsqrt.pop %v4798
        %v4800 = vmul.f32 %v4799, %v4798
        %v4801 = vmul.f32 %v4800, %v4799
        %v4802 = vmul.f32 0.5, %v4801
        %v4803 = vsub.f32 1.5, %v4802
        %v4804 = vmul.f32 %v4799, %v4803
        %vm4805 = vweird.f32 %v4798
        %vm4806 = vweird.f32 %v4799
        %vm4807 = vmor %vm4805, %vm4806
        %v4808 = vsel %vm4807, %v4799, %v4804
        %v4809 = vmul.f32 %v4792, %v4808
        %v4811 = vperm.slane %v4778, 0
        %v4813 = vmul.f32 %v4809, %v4811
        %v4815 = vperm.slane %v4779, 0
        %v4817 = vadd.f32 %v4813, %v4815
        %v4818 = vmul.f32 %v4817, 0.5
        %v4819 = vmul.f32 %v4817, 0.044715
        %v4820 = vmul.f32 %v4819, %v4817
        %v4821 = vmul.f32 %v4820, %v4817
        %v4822 = vadd.f32 %v4817, %v4821
        %v4823 = vmul.f32 %v4822, 0.7978846
        %v4824 = vtanh.pop %v4823
        %v4825 = vadd.f32 %v4824, 1.0
        %v4826 = vmul.f32 %v4818, %v4825
        %v4827 = vpack.c.bf16 %v4826, %v4826
        %v4828 = vld [vmem:[%s16] sm:$0xf]
        %v4829 = vld [vmem:[%s16 + $0x4] sm:$0xf]
        %v4830 = vld [vmem:[%s16 + $0x8] sm:$0xf]
        %v4831 = vld [vmem:[%s16 + $0xc] sm:$0xf]
        %v4832 = vld [vmem:[%s16 + $0x10] sm:$0xf]
        %v4833 = vld [vmem:[%s16 + $0x14] sm:$0xf]
        %v4834 = vld [vmem:[%s16 + $0x18] sm:$0xf]
        %v4835 = vld [vmem:[%s16 + $0x1c] sm:$0xf]
        %v4836 = vld [vmem:[%s17] sm:$0x1]
        %v4838 = vperm.slane %v4836, 0
        %v4848 = vunpack.c.l.b16 %v4828
        %v4849 = vunpack.c.l.b16 %v4829
        %v4850 = vunpack.c.l.b16 %v4830
        %v4851 = vunpack.c.l.b16 %v4831
        %v4852 = vunpack.c.l.b16 %v4832
        %v4853 = vunpack.c.l.b16 %v4833
        %v4854 = vunpack.c.l.b16 %v4834
        %v4855 = vunpack.c.l.b16 %v4835
        %v4856 = vpack.c.b16 %v4849, %v4848
        %v4857 = vpack.c.b16 %v4851, %v4850
        %v4858 = vpack.c.b16 %v4853, %v4852
        %v4859 = vpack.c.b16 %v4855, %v4854
        %v4865 = vsel %vm4780, %v4827, 0
        %4867 = vmatpush.bf16.msra.mxu0 0
        %4868 = vmatpush.bf16.msra.mxu0 0
        %4869 = vmatpush.bf16.msra.mxu0 0
        %4870 = vmatpush.bf16.msra.mxu0 0
        %4871 = vmatpush.bf16.msra.mxu0 %v4859
        %4872 = vmatpush.bf16.msra.mxu0 %v4858
        %4873 = vmatpush.bf16.msra.mxu0 %v4857
        %4874 = vmatpush.bf16.msra.mxu0 %v4856
        %4875 = vmatmul.bf16.gmra.mxu0 %v4865
        %v4876 = vpop.f32.mrf.mxu0
        %v4877 = vadd.f32 %v4838, %v4876
        %v4878 = vpop.f32.mrf.mxu0
        %4879 = vdwg.mxu0
        %v4880 = vtanh.pop %v4877
        %4881 = vst [vmem:[%s632] sm:$0xff] %v4880
        %p4882 = scmp.lt.s32.totalorder %s29, 1
        %s4883 = scalar_select %p4882, %s29, 1
        %s4884 = smul.addr %s4883, 8
        %s4885 = scalar_lea.vmem %s18, %s4884
        // Predicated region
        $region131: #{my_model_forward.1} parent=125 // pred_check
          %p4886 = pneg %p435
        $region132: #{my_model_forward.1} parent=125 // pred_check_branch
          %4888 = sbr.rel (%p4886) target = $region134
        $region133: #{my_model_forward.1} parent=125 // pred_region
          _
        $region134: #{my_model_forward.1} parent=125 // pred_fallthru
          _
      $region126: #{my_model_forward.1} parent=5 // pred_fallthru
        _
      %p4889 = scmp.le.s32.totalorder 2, %s24
      // Predicated region
      $region135: #{my_model_forward.1} parent=5 // pred_check
        %p4890 = pneg %p4889
      $region136: #{my_model_forward.1} parent=5 // pred_check_branch
        %4892 = sbr.rel (%p4890) target = $region138
      $region137: #{my_model_forward.1} parent=5 // pred_region
        %s4893 = ssub.s32 %s24, 2
        // Predicated region
        $region139: #{my_model_forward.1} parent=137 // pred_check
          %p4894 = pneg %p441
        $region140: #{my_model_forward.1} parent=137 // pred_check_branch
          %4896 = sbr.rel (%p4894) target = $region142
        $region141: #{my_model_forward.1} parent=137 // pred_region
          %p4897 = scmp.lt.s32.totalorder %s30, 1
          %s4898 = scalar_select %p4897, %s30, 1
          %s4899 = smul.addr %s4898, 8
          %s4900 = scalar_lea.vmem %s18, %s4899
        $region142: #{my_model_forward.1} parent=137 // pred_fallthru
          _
      $region138: #{my_model_forward.1} parent=5 // pred_fallthru
        _
    $region6: #{my_model_forward.1} parent=1 // loop_footer
      %s28 = sadd.s32 1, %s24
    $region7: #{my_model_forward.1} parent=1 // loop_footer_branch
      %23 = sbr.rel target = $region3
    $region8: #{my_model_forward.1} parent=1 // loop_exit
      _

</llo_original>
